<compile_context>
chip_gen: v7x
topology: tpu7x:2x2x1
jax: 0.10.0
libtpu: 0.0.40
codegen_flags: <defaults>
</compile_context>

<pallas_src>
import functools

import jax
import jax.numpy as jnp
from jax.experimental import pallas as pl
from jax.experimental.pallas import tpu as pltpu


# ------------------------------ in-kernel helpers --------------------------- #

def _mxu(a, b):
    # bf16 MXU inputs, f32 accumulation (no-op cast if already bf16).
    return jnp.dot(a.astype(jnp.bfloat16), b.astype(jnp.bfloat16),
                   preferred_element_type=jnp.float32)


def _dot_f32(a, b):
    # Full-precision matmul (used for the score / degree / count path).
    return jnp.dot(a, b, preferred_element_type=jnp.float32)


# --------------------------------- fused kernel ----------------------------- #

def _sagnet_kernel(a_ref, x_ref, m_ref, gidc_ref, gidr_ref,
                   c1w, c1b, s1w, s1b,
                   c2w, c2b, s2w, s2b,
                   c3w, c3b, s3w, s3b,
                   l1wa, l1wb, l1b, l2w, l2b, l3w, l3b,
                   o_ref, *, ratio, npg):
    nb = a_ref.shape[0]        # nodes per bucket
    bb = m_ref.shape[0]        # graphs per bucket
    hdim = c1w.shape[1]

    # ---- hoisted once per bucket (structure is static across the 3 blocks) ----
    eye0 = (jax.lax.broadcasted_iota(jnp.int32, (nb, nb), 0) ==
            jax.lax.broadcasted_iota(jnp.int32, (nb, nb), 1)).astype(jnp.float32)
    a_self = a_ref[...].astype(jnp.float32) + eye0          # f32   A_hat = A + I
    a_self_bf = a_self.astype(jnp.bfloat16)                 # bf16  MXU operand
    # Same-graph mask: broadcast compare of graph ids (replaces the old per-graph
    # unrolled loop; equivalent to m_T @ m_full but a single VPU compare).
    same = (gidc_ref[...] == gidr_ref[...]).astype(jnp.float32)   # [nb, nb]
    m_full = m_ref[...]                                      # [bb, nb] one-hot f32

    h = x_ref[...].astype(jnp.float32)                       # [nb, F]
    keep = jnp.ones((nb, 1), jnp.float32)                    # column keep mask
    gmp_sum = jnp.zeros((bb, hdim), jnp.float32)
    gap_sum = jnp.zeros((bb, hdim), jnp.float32)

    blocks = ((c1w, c1b, s1w, s1b), (c2w, c2b, s2w, s2b), (c3w, c3b, s3w, s3b))
    for cw, cb, sw, sb in blocks:
        # --- GCN normalization restricted to kept nodes (column-only masking) ---
        # a_norm @ v == dk * (A_self @ (dk * v))  with  dk = keep * D^-1/2
        deg = _dot_f32(a_self, keep)                          # [nb,1] exact counts
        dinv = jnp.where(deg > 0.0,
                         jax.lax.rsqrt(jnp.maximum(deg, 1e-12)), 0.0)
        dk = keep * dinv

        # --- conv GCN: relu(D^-1/2 A_hat D^-1/2 (h W) + b) ----------------------
        xw = _mxu(h, cw[...])                                 # [nb,H]
        h = jnp.maximum(dk * _mxu(a_self_bf, dk * xw) + cb[...], 0.0)

        # --- score GCN (width 1), kept fully in f32 -----------------------------
        hw = jnp.sum(h * sw[...], axis=1, keepdims=True)      # [nb,1]
        score = dk * _dot_f32(a_self, dk * hw) + sb[0, 0]     # [nb,1]

        # --- per-graph top-k keep mask (dense pairwise rank; fine at small nb) --
        # TODO(synk): for large node slabs switch to a per-slab [B,NPG] ranking and
        #             tiled adjacency instead of this O(nb^2) dense path.
        idx_i = jax.lax.broadcasted_iota(jnp.int32, (nb, nb), 0)
        idx_j = jax.lax.broadcasted_iota(jnp.int32, (nb, nb), 1)
        eye = (idx_i == idx_j).astype(jnp.float32)
        s_col = jnp.where(keep > 0.0, score, -1e30)
        s_row = jnp.sum(eye * s_col, axis=0, keepdims=True)   # single reorientation
        better = jnp.logical_or(
            s_row > s_col,
            jnp.logical_and(s_row == s_col, idx_j < idx_i))   # lower index wins ties
        rank = jnp.sum(same * better.astype(jnp.float32), axis=1, keepdims=True)
        present = _dot_f32(same, keep)                        # live same-graph count
        keep = jnp.logical_and(keep > 0.0,
                               rank < jnp.ceil(ratio * present)).astype(jnp.float32)

        # --- gate kept nodes: x <- x * tanh(score); dropped nodes zeroed ---------
        h = h * jnp.tanh(score) * keep

        # --- readout [global_max | global_mean], accumulated over blocks ---------
        cnt = _dot_f32(m_full, keep)                          # [bb,1]
        gap = _mxu(m_full, h) / jnp.maximum(cnt, 1.0)         # [bb,H]
        # Slab max-pool: nodes are contiguous NPG-slabs per graph (NPG % 8 == 0),
        # so this reshape is layout-preserving and the max is one sublane reduce.
        slab = (h + (keep - 1.0) * 1e30).reshape(bb, npg, hdim)
        gmp = jnp.where(cnt > 0.0, jnp.max(slab, axis=1), 0.0)
        gmp_sum = gmp_sum + gmp
        gap_sum = gap_sum + gap

    # --- MLP head (lin1 weight pre-split: no lane concatenate needed) ------------
    h1 = jnp.maximum(
        _mxu(gmp_sum, l1wa[...]) + _mxu(gap_sum, l1wb[...]) + l1b[...], 0.0)
    # F.dropout(training=False) -> identity (eval mode)
    h2 = jnp.maximum(_mxu(h1, l2w[...]) + l2b[...], 0.0)
    logits = _mxu(h2, l3w[...]) + l3b[...]
    z = logits - jnp.max(logits, axis=1, keepdims=True)       # log_softmax in f32
    lse = jnp.log(jnp.sum(jnp.exp(z), axis=1, keepdims=True))
    o_ref[...] = (z - lse).astype(o_ref.dtype)


# --------------------------------- wrapper ---------------------------------- #

@functools.partial(jax.jit, static_argnames=("ratio", "npg"))
def sagnet_forward(params, a_raw, x, m_full, gid, *, ratio, npg):
    """a_raw: [G,Nb,Nb]  x: [G,Nb,F]  m_full: [G,Bb,Nb] one-hot  gid: [G,Nb] int."""
    g, nb, _ = a_raw.shape
    bb = m_full.shape[1]
    hid = params["conv1_w"].shape[1]
    ncls = params["lin3_w"].shape[1]
    assert bb * npg == nb, "graphs must be padded to contiguous NPG-node slabs"

    bf16 = lambda w: w.astype(jnp.bfloat16)
    rowf = lambda v: v.reshape(1, -1).astype(jnp.float32)
    scal = lambda v: v.reshape(1, 1).astype(jnp.float32)
    l1w = params["lin1_w"]

    gid_col = gid.astype(jnp.int32).reshape(g, nb, 1)
    gid_row = gid.astype(jnp.int32).reshape(g, 1, nb)

    # Per-bucket tensors: adjacency & features shipped in bf16 (halves DMA/VMEM).
    bucket_inputs = (a_raw.astype(jnp.bfloat16), x.astype(jnp.bfloat16),
                     m_full.astype(jnp.float32), gid_col, gid_row)
    weights = (
        bf16(params["conv1_w"]), rowf(params["conv1_b"]),
        rowf(params["score1_w"]), scal(params["score1_b"]),
        bf16(params["conv2_w"]), rowf(params["conv2_b"]),
        rowf(params["score2_w"]), scal(params["score2_b"]),
        bf16(params["conv3_w"]), rowf(params["conv3_b"]),
        rowf(params["score3_w"]), scal(params["score3_b"]),
        bf16(l1w[:hid, :]), bf16(l1w[hid:, :]), rowf(params["lin1_b"]),
        bf16(params["lin2_w"]), rowf(params["lin2_b"]),
        bf16(params["lin3_w"]), rowf(params["lin3_b"]),
    )

    def bucket_spec(arr):
        return pl.BlockSpec((None,) + arr.shape[1:], lambda gi: (gi, 0, 0))

    smem_positions = {3, 7, 11}          # the three (1,1) score biases -> SMEM
    weight_specs = []
    for i, w in enumerate(weights):
        if i in smem_positions:
            weight_specs.append(pl.BlockSpec(memory_space=pltpu.MemorySpace.SMEM))
        else:
            weight_specs.append(pl.BlockSpec(w.shape, lambda gi: (0, 0)))

    grid_spec = pltpu.PrefetchScalarGridSpec(
        num_scalar_prefetch=0,
        grid=(g,),
        in_specs=[bucket_spec(a) for a in bucket_inputs] + weight_specs,
        out_specs=pl.BlockSpec((None, bb, ncls), lambda gi: (gi, 0, 0)),
    )

    out = pl.pallas_call(
        functools.partial(_sagnet_kernel, ratio=float(ratio), npg=int(npg)),
        out_shape=jax.ShapeDtypeStruct((g, bb, ncls), jnp.float32),
        grid_spec=grid_spec,
        compiler_params=pltpu.CompilerParams(
            dimension_semantics=("parallel",),
            vmem_limit_bytes=48 * 1024 * 1024),
    )(*bucket_inputs, *weights)
    return out.reshape(g * bb, ncls)


# ----------------------------------- Main ------------------------------------ #

if __name__ == "__main__":
    G, B_PER, NPG = 2, 2, 16            # 2 buckets x 2 graphs x 16 nodes
    NB = B_PER * NPG
    F_IN, HIDDEN, C = 8, 32, 4
    RATIO = 0.5

    key = jax.random.PRNGKey(0)
    keys = jax.random.split(key, 12)

    def glorot(k, shape):
        fin, fout = shape
        lim = (6.0 / (fin + fout)) ** 0.5
        return jax.random.uniform(k, shape, jnp.float32, -lim, lim)

    params = dict(
        conv1_w=glorot(keys[1], (F_IN, HIDDEN)),   conv1_b=jnp.zeros((HIDDEN,), jnp.float32),
        conv2_w=glorot(keys[2], (HIDDEN, HIDDEN)), conv2_b=jnp.zeros((HIDDEN,), jnp.float32),
        conv3_w=glorot(keys[3], (HIDDEN, HIDDEN)), conv3_b=jnp.zeros((HIDDEN,), jnp.float32),
        score1_w=glorot(keys[4], (HIDDEN, 1)),     score1_b=jnp.zeros((1,), jnp.float32),
        score2_w=glorot(keys[5], (HIDDEN, 1)),     score2_b=jnp.zeros((1,), jnp.float32),
        score3_w=glorot(keys[6], (HIDDEN, 1)),     score3_b=jnp.zeros((1,), jnp.float32),
        lin1_w=glorot(keys[7], (2 * HIDDEN, HIDDEN)),   lin1_b=jnp.zeros((HIDDEN,), jnp.float32),
        lin2_w=glorot(keys[8], (HIDDEN, HIDDEN // 2)),  lin2_b=jnp.zeros((HIDDEN // 2,), jnp.float32),
        lin3_w=glorot(keys[9], (HIDDEN // 2, C)),       lin3_b=jnp.zeros((C,), jnp.float32),
    )

    # Node features.
    x = jax.random.normal(keys[0], (G, NB, F_IN), jnp.float32)

    # Block-diagonal ring graphs per bucket (symmetric, no self loops; A+I in-kernel).
    eye_n = jnp.eye(NPG, dtype=jnp.float32)
    ring = jnp.roll(eye_n, 1, axis=1) + jnp.roll(eye_n, -1, axis=1)
    a_one = jnp.kron(jnp.eye(B_PER, dtype=jnp.float32), ring)          # [NB, NB]
    a_raw = jnp.stack([a_one] * G, axis=0)                             # [G, NB, NB]

    # Slab-ordered graph membership (one-hot + per-node graph id).
    batch = jnp.repeat(jnp.arange(B_PER, dtype=jnp.int32), NPG)        # [NB]
    m_one = (batch[None, :] == jnp.arange(B_PER)[:, None]).astype(jnp.float32)
    m_full = jnp.stack([m_one] * G, axis=0)                            # [G, B_PER, NB]
    gid = jnp.stack([batch] * G, axis=0)                               # [G, NB]

    out = sagnet_forward(params, a_raw, x, m_full, gid, ratio=RATIO, npg=NPG)
    out = jax.block_until_ready(out)
    assert out.shape == (G * B_PER, C)
    assert bool(jnp.all(jnp.isfinite(out)))
    # rows of log_softmax must exponentiate-sum to ~1
    assert bool(jnp.allclose(jnp.sum(jnp.exp(out), axis=1), 1.0, atol=1e-4))
    print("KERNEL_OK")
</pallas_src>

<mosaic_0001>
module attributes {stable_mosaic.version = 11 : i64} {
  func.func @_sagnet_kernel(%arg0: i32, %arg1: memref<1x32x32xbf16, #tpu.memory_space<vmem>>, %arg2: memref<1x32x8xbf16, #tpu.memory_space<vmem>>, %arg3: memref<1x2x32xf32, #tpu.memory_space<vmem>>, %arg4: memref<1x32x1xi32, #tpu.memory_space<vmem>>, %arg5: memref<1x1x32xi32, #tpu.memory_space<vmem>>, %arg6: memref<8x32xbf16, #tpu.memory_space<vmem>>, %arg7: memref<1x32xf32, #tpu.memory_space<vmem>>, %arg8: memref<1x32xf32, #tpu.memory_space<vmem>>, %arg9: memref<1x1xf32, #tpu.memory_space<smem>>, %arg10: memref<32x32xbf16, #tpu.memory_space<vmem>>, %arg11: memref<1x32xf32, #tpu.memory_space<vmem>>, %arg12: memref<1x32xf32, #tpu.memory_space<vmem>>, %arg13: memref<1x1xf32, #tpu.memory_space<smem>>, %arg14: memref<32x32xbf16, #tpu.memory_space<vmem>>, %arg15: memref<1x32xf32, #tpu.memory_space<vmem>>, %arg16: memref<1x32xf32, #tpu.memory_space<vmem>>, %arg17: memref<1x1xf32, #tpu.memory_space<smem>>, %arg18: memref<32x32xbf16, #tpu.memory_space<vmem>>, %arg19: memref<32x32xbf16, #tpu.memory_space<vmem>>, %arg20: memref<1x32xf32, #tpu.memory_space<vmem>>, %arg21: memref<32x16xbf16, #tpu.memory_space<vmem>>, %arg22: memref<1x16xf32, #tpu.memory_space<vmem>>, %arg23: memref<16x4xbf16, #tpu.memory_space<vmem>>, %arg24: memref<1x4xf32, #tpu.memory_space<vmem>>, %arg25: memref<1x2x4xf32, #tpu.memory_space<vmem>>) attributes {dimension_semantics = [#tpu.dimension_semantics<parallel>], iteration_bounds = array<i64: 2>, scalar_prefetch = 0 : i64, scratch_operands = 0 : i64, tpu.core_type = #tpu.core_type<tc>, window_params = [{transform_indices = @transform_0, window_bounds = array<i64: 1, 32, 32>}, {transform_indices = @transform_1, window_bounds = array<i64: 1, 32, 8>}, {transform_indices = @transform_2, window_bounds = array<i64: 1, 2, 32>}, {transform_indices = @transform_3, window_bounds = array<i64: 1, 32, 1>}, {transform_indices = @transform_4, window_bounds = array<i64: 1, 1, 32>}, {pipeline_mode = #tpu.pipeline_mode<synchronous>, transform_indices = @transform_5, window_bounds = array<i64: 8, 32>}, {pipeline_mode = #tpu.pipeline_mode<synchronous>, transform_indices = @transform_6, window_bounds = array<i64: 1, 32>}, {pipeline_mode = #tpu.pipeline_mode<synchronous>, transform_indices = @transform_7, window_bounds = array<i64: 1, 32>}, {transform_indices = @transform_8, window_bounds = array<i64: 1, 1>}, {pipeline_mode = #tpu.pipeline_mode<synchronous>, transform_indices = @transform_9, window_bounds = array<i64: 32, 32>}, {pipeline_mode = #tpu.pipeline_mode<synchronous>, transform_indices = @transform_10, window_bounds = array<i64: 1, 32>}, {pipeline_mode = #tpu.pipeline_mode<synchronous>, transform_indices = @transform_11, window_bounds = array<i64: 1, 32>}, {transform_indices = @transform_12, window_bounds = array<i64: 1, 1>}, {pipeline_mode = #tpu.pipeline_mode<synchronous>, transform_indices = @transform_13, window_bounds = array<i64: 32, 32>}, {pipeline_mode = #tpu.pipeline_mode<synchronous>, transform_indices = @transform_14, window_bounds = array<i64: 1, 32>}, {pipeline_mode = #tpu.pipeline_mode<synchronous>, transform_indices = @transform_15, window_bounds = array<i64: 1, 32>}, {transform_indices = @transform_16, window_bounds = array<i64: 1, 1>}, {pipeline_mode = #tpu.pipeline_mode<synchronous>, transform_indices = @transform_17, window_bounds = array<i64: 32, 32>}, {pipeline_mode = #tpu.pipeline_mode<synchronous>, transform_indices = @transform_18, window_bounds = array<i64: 32, 32>}, {pipeline_mode = #tpu.pipeline_mode<synchronous>, transform_indices = @transform_19, window_bounds = array<i64: 1, 32>}, {pipeline_mode = #tpu.pipeline_mode<synchronous>, transform_indices = @transform_20, window_bounds = array<i64: 32, 16>}, {pipeline_mode = #tpu.pipeline_mode<synchronous>, transform_indices = @transform_21, window_bounds = array<i64: 1, 16>}, {pipeline_mode = #tpu.pipeline_mode<synchronous>, transform_indices = @transform_22, window_bounds = array<i64: 16, 4>}, {pipeline_mode = #tpu.pipeline_mode<synchronous>, transform_indices = @transform_23, window_bounds = array<i64: 1, 4>}, {transform_indices = @transform_24, window_bounds = array<i64: 1, 2, 4>}]} {
    %0 = tpu.iota {dimensions = array<i32: 0>} : vector<32x32xi32>
    %1 = tpu.iota {dimensions = array<i32: 1>} : vector<32x32xi32>
    %2 = arith.cmpi eq, %0, %1 : vector<32x32xi32>
    %3 = arith.extui %2 : vector<32x32xi1> to vector<32x32xi32>
    %4 = arith.sitofp %3 : vector<32x32xi32> to vector<32x32xf32>
    %c0 = arith.constant 0 : index
    %c0_0 = arith.constant 0 : index
    %c0_1 = arith.constant 0 : index
    %5 = vector.load %arg1[%c0, %c0_0, %c0_1] : memref<1x32x32xbf16, #tpu.memory_space<vmem>>, vector<1x32x32xbf16>
    %6 = vector.shape_cast %5 : vector<1x32x32xbf16> to vector<32x32xbf16>
    %7 = arith.extf %6 : vector<32x32xbf16> to vector<32x32xf32>
    %8 = arith.addf %7, %4 : vector<32x32xf32>
    %9 = arith.truncf %8 : vector<32x32xf32> to vector<32x32xbf16>
    %c0_2 = arith.constant 0 : index
    %c0_3 = arith.constant 0 : index
    %c0_4 = arith.constant 0 : index
    %10 = vector.load %arg4[%c0_2, %c0_3, %c0_4] : memref<1x32x1xi32, #tpu.memory_space<vmem>>, vector<1x32x1xi32>
    %11 = vector.shape_cast %10 : vector<1x32x1xi32> to vector<32x1xi32>
    %c0_5 = arith.constant 0 : index
    %c0_6 = arith.constant 0 : index
    %c0_7 = arith.constant 0 : index
    %12 = vector.load %arg5[%c0_5, %c0_6, %c0_7] : memref<1x1x32xi32, #tpu.memory_space<vmem>>, vector<1x1x32xi32>
    %13 = vector.shape_cast %12 : vector<1x1x32xi32> to vector<1x32xi32>
    %14 = vector.broadcast %11 : vector<32x1xi32> to vector<32x32xi32>
    %15 = vector.broadcast %13 : vector<1x32xi32> to vector<32x32xi32>
    %16 = arith.cmpi eq, %14, %15 : vector<32x32xi32>
    %17 = arith.extui %16 : vector<32x32xi1> to vector<32x32xi32>
    %18 = arith.sitofp %17 : vector<32x32xi32> to vector<32x32xf32>
    %c0_8 = arith.constant 0 : index
    %c0_9 = arith.constant 0 : index
    %c0_10 = arith.constant 0 : index
    %19 = vector.load %arg3[%c0_8, %c0_9, %c0_10] : memref<1x2x32xf32, #tpu.memory_space<vmem>>, vector<1x2x32xf32>
    %20 = vector.shape_cast %19 : vector<1x2x32xf32> to vector<2x32xf32>
    %c0_11 = arith.constant 0 : index
    %c0_12 = arith.constant 0 : index
    %c0_13 = arith.constant 0 : index
    %21 = vector.load %arg2[%c0_11, %c0_12, %c0_13] : memref<1x32x8xbf16, #tpu.memory_space<vmem>>, vector<1x32x8xbf16>
    %22 = vector.shape_cast %21 : vector<1x32x8xbf16> to vector<32x8xbf16>
    %23 = arith.extf %22 : vector<32x8xbf16> to vector<32x8xf32>
    %cst = arith.constant 1.000000e+00 : f32
    %24 = vector.broadcast %cst : f32 to vector<32x1xf32>
    %cst_14 = arith.constant 0.000000e+00 : f32
    %25 = vector.broadcast %cst_14 : f32 to vector<2x32xf32>
    %cst_15 = arith.constant 0.000000e+00 : f32
    %26 = vector.broadcast %cst_15 : f32 to vector<2x32xf32>
    %cst_16 = arith.constant dense<0.000000e+00> : vector<32x1xf32>
    %27 = tpu.matmul %8, %24, %cst_16 {dimension_numbers = #tpu.dot_dimension_numbers<[1], [0], [0], [1], [0, 0, 1, 1], [], []>} : vector<32x32xf32>, vector<32x1xf32>, vector<32x1xf32> -> vector<32x1xf32>
    %cst_17 = arith.constant 0.000000e+00 : f32
    %28 = vector.broadcast %cst_17 : f32 to vector<32x1xf32>
    %29 = arith.cmpf ogt, %27, %28 : vector<32x1xf32>
    %cst_18 = arith.constant 9.99999996E-13 : f32
    %30 = vector.broadcast %cst_18 : f32 to vector<32x1xf32>
    %31 = arith.maximumf %27, %30 : vector<32x1xf32>
    %32 = math.rsqrt %31 : vector<32x1xf32>
    %cst_19 = arith.constant 0.000000e+00 : f32
    %33 = vector.broadcast %cst_19 : f32 to vector<32x1xf32>
    %34 = arith.select %29, %32, %33 : vector<32x1xi1>, vector<32x1xf32>
    %35 = arith.mulf %24, %34 : vector<32x1xf32>
    %c0_20 = arith.constant 0 : index
    %c0_21 = arith.constant 0 : index
    %36 = vector.load %arg6[%c0_20, %c0_21] : memref<8x32xbf16, #tpu.memory_space<vmem>>, vector<8x32xbf16>
    %37 = arith.truncf %23 : vector<32x8xf32> to vector<32x8xbf16>
    %cst_22 = arith.constant dense<0.000000e+00> : vector<32x32xf32>
    %38 = tpu.matmul %37, %36, %cst_22 {dimension_numbers = #tpu.dot_dimension_numbers<[1], [0], [0], [1], [0, 0, 1, 1], [], []>} : vector<32x8xbf16>, vector<8x32xbf16>, vector<32x32xf32> -> vector<32x32xf32>
    %39 = vector.broadcast %35 : vector<32x1xf32> to vector<32x32xf32>
    %40 = arith.mulf %39, %38 : vector<32x32xf32>
    %41 = arith.truncf %40 : vector<32x32xf32> to vector<32x32xbf16>
    %cst_23 = arith.constant dense<0.000000e+00> : vector<32x32xf32>
    %42 = tpu.matmul %9, %41, %cst_23 {dimension_numbers = #tpu.dot_dimension_numbers<[1], [0], [0], [1], [0, 0, 1, 1], [], []>} : vector<32x32xbf16>, vector<32x32xbf16>, vector<32x32xf32> -> vector<32x32xf32>
    %43 = vector.broadcast %35 : vector<32x1xf32> to vector<32x32xf32>
    %44 = arith.mulf %43, %42 : vector<32x32xf32>
    %c0_24 = arith.constant 0 : index
    %c0_25 = arith.constant 0 : index
    %45 = vector.load %arg7[%c0_24, %c0_25] : memref<1x32xf32, #tpu.memory_space<vmem>>, vector<1x32xf32>
    %46 = vector.broadcast %45 : vector<1x32xf32> to vector<32x32xf32>
    %47 = arith.addf %44, %46 : vector<32x32xf32>
    %cst_26 = arith.constant 0.000000e+00 : f32
    %48 = vector.broadcast %cst_26 : f32 to vector<32x32xf32>
    %49 = arith.maximumf %47, %48 : vector<32x32xf32>
    %c0_27 = arith.constant 0 : index
    %c0_28 = arith.constant 0 : index
    %50 = vector.load %arg8[%c0_27, %c0_28] : memref<1x32xf32, #tpu.memory_space<vmem>>, vector<1x32xf32>
    %51 = vector.broadcast %50 : vector<1x32xf32> to vector<32x32xf32>
    %52 = arith.mulf %49, %51 : vector<32x32xf32>
    %cst_29 = arith.constant dense<0.000000e+00> : vector<32xf32>
    %53 = vector.multi_reduction <add>, %52, %cst_29 [1] : vector<32x32xf32> to vector<32xf32>
    %54 = vector.shape_cast %53 : vector<32xf32> to vector<32x1xf32>
    %55 = arith.mulf %35, %54 : vector<32x1xf32>
    %cst_30 = arith.constant dense<0.000000e+00> : vector<32x1xf32>
    %56 = tpu.matmul %8, %55, %cst_30 {dimension_numbers = #tpu.dot_dimension_numbers<[1], [0], [0], [1], [0, 0, 1, 1], [], []>} : vector<32x32xf32>, vector<32x1xf32>, vector<32x1xf32> -> vector<32x1xf32>
    %57 = arith.mulf %35, %56 : vector<32x1xf32>
    %c0_31 = arith.constant 0 : index
    %c0_32 = arith.constant 0 : index
    %58 = memref.load %arg9[%c0_31, %c0_32] : memref<1x1xf32, #tpu.memory_space<smem>>
    %59 = vector.broadcast %58 : f32 to vector<32x1xf32>
    %60 = arith.addf %57, %59 : vector<32x1xf32>
    %61 = tpu.iota {dimensions = array<i32: 0>} : vector<32x32xi32>
    %62 = tpu.iota {dimensions = array<i32: 1>} : vector<32x32xi32>
    %63 = arith.cmpi eq, %61, %62 : vector<32x32xi32>
    %64 = arith.extui %63 : vector<32x32xi1> to vector<32x32xi32>
    %65 = arith.sitofp %64 : vector<32x32xi32> to vector<32x32xf32>
    %cst_33 = arith.constant 0.000000e+00 : f32
    %66 = vector.broadcast %cst_33 : f32 to vector<32x1xf32>
    %67 = arith.cmpf ogt, %24, %66 : vector<32x1xf32>
    %cst_34 = arith.constant -1.000000e+30 : f32
    %68 = vector.broadcast %cst_34 : f32 to vector<32x1xf32>
    %69 = arith.select %67, %60, %68 : vector<32x1xi1>, vector<32x1xf32>
    %70 = vector.broadcast %69 : vector<32x1xf32> to vector<32x32xf32>
    %71 = arith.mulf %65, %70 : vector<32x32xf32>
    %cst_35 = arith.constant dense<0.000000e+00> : vector<32xf32>
    %72 = vector.multi_reduction <add>, %71, %cst_35 [0] : vector<32x32xf32> to vector<32xf32>
    %73 = vector.shape_cast %72 : vector<32xf32> to vector<1x32xf32>
    %74 = vector.broadcast %73 : vector<1x32xf32> to vector<32x32xf32>
    %75 = vector.broadcast %69 : vector<32x1xf32> to vector<32x32xf32>
    %76 = arith.cmpf ogt, %74, %75 : vector<32x32xf32>
    %77 = vector.broadcast %73 : vector<1x32xf32> to vector<32x32xf32>
    %78 = vector.broadcast %69 : vector<32x1xf32> to vector<32x32xf32>
    %79 = arith.cmpf oeq, %77, %78 : vector<32x32xf32>
    %80 = arith.cmpi slt, %62, %61 : vector<32x32xi32>
    %81 = arith.andi %79, %80 : vector<32x32xi1>
    %82 = arith.ori %76, %81 : vector<32x32xi1>
    %83 = arith.extui %82 : vector<32x32xi1> to vector<32x32xi32>
    %84 = arith.sitofp %83 : vector<32x32xi32> to vector<32x32xf32>
    %85 = arith.mulf %18, %84 : vector<32x32xf32>
    %cst_36 = arith.constant dense<0.000000e+00> : vector<32xf32>
    %86 = vector.multi_reduction <add>, %85, %cst_36 [1] : vector<32x32xf32> to vector<32xf32>
    %87 = vector.shape_cast %86 : vector<32xf32> to vector<32x1xf32>
    %cst_37 = arith.constant dense<0.000000e+00> : vector<32x1xf32>
    %88 = tpu.matmul %18, %24, %cst_37 {dimension_numbers = #tpu.dot_dimension_numbers<[1], [0], [0], [1], [0, 0, 1, 1], [], []>} : vector<32x32xf32>, vector<32x1xf32>, vector<32x1xf32> -> vector<32x1xf32>
    %cst_38 = arith.constant 0.000000e+00 : f32
    %89 = vector.broadcast %cst_38 : f32 to vector<32x1xf32>
    %90 = arith.cmpf ogt, %24, %89 : vector<32x1xf32>
    %cst_39 = arith.constant 5.000000e-01 : f32
    %91 = vector.broadcast %cst_39 : f32 to vector<32x1xf32>
    %92 = arith.mulf %91, %88 : vector<32x1xf32>
    %93 = math.ceil %92 : vector<32x1xf32>
    %94 = arith.cmpf olt, %87, %93 : vector<32x1xf32>
    %95 = arith.andi %90, %94 : vector<32x1xi1>
    %96 = arith.extui %95 : vector<32x1xi1> to vector<32x1xi32>
    %97 = arith.sitofp %96 : vector<32x1xi32> to vector<32x1xf32>
    %98 = math.tanh %60 : vector<32x1xf32>
    %99 = vector.broadcast %98 : vector<32x1xf32> to vector<32x32xf32>
    %100 = arith.mulf %49, %99 : vector<32x32xf32>
    %101 = vector.broadcast %97 : vector<32x1xf32> to vector<32x32xf32>
    %102 = arith.mulf %100, %101 : vector<32x32xf32>
    %cst_40 = arith.constant dense<0.000000e+00> : vector<2x1xf32>
    %103 = tpu.matmul %20, %97, %cst_40 {dimension_numbers = #tpu.dot_dimension_numbers<[1], [0], [0], [1], [0, 0, 1, 1], [], []>} : vector<2x32xf32>, vector<32x1xf32>, vector<2x1xf32> -> vector<2x1xf32>
    %104 = arith.truncf %20 : vector<2x32xf32> to vector<2x32xbf16>
    %105 = arith.truncf %102 : vector<32x32xf32> to vector<32x32xbf16>
    %cst_41 = arith.constant dense<0.000000e+00> : vector<2x32xf32>
    %106 = tpu.matmul %104, %105, %cst_41 {dimension_numbers = #tpu.dot_dimension_numbers<[1], [0], [0], [1], [0, 0, 1, 1], [], []>} : vector<2x32xbf16>, vector<32x32xbf16>, vector<2x32xf32> -> vector<2x32xf32>
    %cst_42 = arith.constant 1.000000e+00 : f32
    %107 = vector.broadcast %cst_42 : f32 to vector<2x1xf32>
    %108 = arith.maximumf %103, %107 : vector<2x1xf32>
    %109 = vector.broadcast %108 : vector<2x1xf32> to vector<2x32xf32>
    %110 = arith.divf %106, %109 : vector<2x32xf32>
    %cst_43 = arith.constant 1.000000e+00 : f32
    %111 = vector.broadcast %cst_43 : f32 to vector<32x1xf32>
    %112 = arith.subf %97, %111 : vector<32x1xf32>
    %cst_44 = arith.constant 1.000000e+30 : f32
    %113 = vector.broadcast %cst_44 : f32 to vector<32x1xf32>
    %114 = arith.mulf %112, %113 : vector<32x1xf32>
    %115 = vector.broadcast %114 : vector<32x1xf32> to vector<32x32xf32>
    %116 = arith.addf %102, %115 : vector<32x32xf32>
    %117 = vector.shape_cast %116 : vector<32x32xf32> to vector<2x16x32xf32>
    %cst_45 = arith.constant 0.000000e+00 : f32
    %118 = vector.broadcast %cst_45 : f32 to vector<2x1xf32>
    %119 = arith.cmpf ogt, %103, %118 : vector<2x1xf32>
    %cst_46 = arith.constant dense<0xFF800000> : vector<2x32xf32>
    %120 = vector.multi_reduction <maximumf>, %117, %cst_46 [1] : vector<2x16x32xf32> to vector<2x32xf32>
    %cst_47 = arith.constant 0.000000e+00 : f32
    %121 = vector.shape_cast %119 : vector<2x1xi1> to vector<2x1xi1>
    %122 = vector.broadcast %121 : vector<2x1xi1> to vector<2x32xi1>
    %123 = vector.broadcast %cst_47 : f32 to vector<2x32xf32>
    %124 = arith.select %122, %120, %123 : vector<2x32xi1>, vector<2x32xf32>
    %125 = arith.addf %25, %124 : vector<2x32xf32>
    %126 = arith.addf %26, %110 : vector<2x32xf32>
    %cst_48 = arith.constant dense<0.000000e+00> : vector<32x1xf32>
    %127 = tpu.matmul %8, %97, %cst_48 {dimension_numbers = #tpu.dot_dimension_numbers<[1], [0], [0], [1], [0, 0, 1, 1], [], []>} : vector<32x32xf32>, vector<32x1xf32>, vector<32x1xf32> -> vector<32x1xf32>
    %cst_49 = arith.constant 0.000000e+00 : f32
    %128 = vector.broadcast %cst_49 : f32 to vector<32x1xf32>
    %129 = arith.cmpf ogt, %127, %128 : vector<32x1xf32>
    %cst_50 = arith.constant 9.99999996E-13 : f32
    %130 = vector.broadcast %cst_50 : f32 to vector<32x1xf32>
    %131 = arith.maximumf %127, %130 : vector<32x1xf32>
    %132 = math.rsqrt %131 : vector<32x1xf32>
    %cst_51 = arith.constant 0.000000e+00 : f32
    %133 = vector.broadcast %cst_51 : f32 to vector<32x1xf32>
    %134 = arith.select %129, %132, %133 : vector<32x1xi1>, vector<32x1xf32>
    %135 = arith.mulf %97, %134 : vector<32x1xf32>
    %c0_52 = arith.constant 0 : index
    %c0_53 = arith.constant 0 : index
    %136 = vector.load %arg10[%c0_52, %c0_53] : memref<32x32xbf16, #tpu.memory_space<vmem>>, vector<32x32xbf16>
    %137 = arith.truncf %102 : vector<32x32xf32> to vector<32x32xbf16>
    %cst_54 = arith.constant dense<0.000000e+00> : vector<32x32xf32>
    %138 = tpu.matmul %137, %136, %cst_54 {dimension_numbers = #tpu.dot_dimension_numbers<[1], [0], [0], [1], [0, 0, 1, 1], [], []>} : vector<32x32xbf16>, vector<32x32xbf16>, vector<32x32xf32> -> vector<32x32xf32>
    %139 = vector.broadcast %135 : vector<32x1xf32> to vector<32x32xf32>
    %140 = arith.mulf %139, %138 : vector<32x32xf32>
    %141 = arith.truncf %140 : vector<32x32xf32> to vector<32x32xbf16>
    %cst_55 = arith.constant dense<0.000000e+00> : vector<32x32xf32>
    %142 = tpu.matmul %9, %141, %cst_55 {dimension_numbers = #tpu.dot_dimension_numbers<[1], [0], [0], [1], [0, 0, 1, 1], [], []>} : vector<32x32xbf16>, vector<32x32xbf16>, vector<32x32xf32> -> vector<32x32xf32>
    %143 = vector.broadcast %135 : vector<32x1xf32> to vector<32x32xf32>
    %144 = arith.mulf %143, %142 : vector<32x32xf32>
    %c0_56 = arith.constant 0 : index
    %c0_57 = arith.constant 0 : index
    %145 = vector.load %arg11[%c0_56, %c0_57] : memref<1x32xf32, #tpu.memory_space<vmem>>, vector<1x32xf32>
    %146 = vector.broadcast %145 : vector<1x32xf32> to vector<32x32xf32>
    %147 = arith.addf %144, %146 : vector<32x32xf32>
    %cst_58 = arith.constant 0.000000e+00 : f32
    %148 = vector.broadcast %cst_58 : f32 to vector<32x32xf32>
    %149 = arith.maximumf %147, %148 : vector<32x32xf32>
    %c0_59 = arith.constant 0 : index
    %c0_60 = arith.constant 0 : index
    %150 = vector.load %arg12[%c0_59, %c0_60] : memref<1x32xf32, #tpu.memory_space<vmem>>, vector<1x32xf32>
    %151 = vector.broadcast %150 : vector<1x32xf32> to vector<32x32xf32>
    %152 = arith.mulf %149, %151 : vector<32x32xf32>
    %cst_61 = arith.constant dense<0.000000e+00> : vector<32xf32>
    %153 = vector.multi_reduction <add>, %152, %cst_61 [1] : vector<32x32xf32> to vector<32xf32>
    %154 = vector.shape_cast %153 : vector<32xf32> to vector<32x1xf32>
    %155 = arith.mulf %135, %154 : vector<32x1xf32>
    %cst_62 = arith.constant dense<0.000000e+00> : vector<32x1xf32>
    %156 = tpu.matmul %8, %155, %cst_62 {dimension_numbers = #tpu.dot_dimension_numbers<[1], [0], [0], [1], [0, 0, 1, 1], [], []>} : vector<32x32xf32>, vector<32x1xf32>, vector<32x1xf32> -> vector<32x1xf32>
    %157 = arith.mulf %135, %156 : vector<32x1xf32>
    %c0_63 = arith.constant 0 : index
    %c0_64 = arith.constant 0 : index
    %158 = memref.load %arg13[%c0_63, %c0_64] : memref<1x1xf32, #tpu.memory_space<smem>>
    %159 = vector.broadcast %158 : f32 to vector<32x1xf32>
    %160 = arith.addf %157, %159 : vector<32x1xf32>
    %161 = tpu.iota {dimensions = array<i32: 0>} : vector<32x32xi32>
    %162 = tpu.iota {dimensions = array<i32: 1>} : vector<32x32xi32>
    %163 = arith.cmpi eq, %161, %162 : vector<32x32xi32>
    %164 = arith.extui %163 : vector<32x32xi1> to vector<32x32xi32>
    %165 = arith.sitofp %164 : vector<32x32xi32> to vector<32x32xf32>
    %cst_65 = arith.constant 0.000000e+00 : f32
    %166 = vector.broadcast %cst_65 : f32 to vector<32x1xf32>
    %167 = arith.cmpf ogt, %97, %166 : vector<32x1xf32>
    %cst_66 = arith.constant -1.000000e+30 : f32
    %168 = vector.broadcast %cst_66 : f32 to vector<32x1xf32>
    %169 = arith.select %167, %160, %168 : vector<32x1xi1>, vector<32x1xf32>
    %170 = vector.broadcast %169 : vector<32x1xf32> to vector<32x32xf32>
    %171 = arith.mulf %165, %170 : vector<32x32xf32>
    %cst_67 = arith.constant dense<0.000000e+00> : vector<32xf32>
    %172 = vector.multi_reduction <add>, %171, %cst_67 [0] : vector<32x32xf32> to vector<32xf32>
    %173 = vector.shape_cast %172 : vector<32xf32> to vector<1x32xf32>
    %174 = vector.broadcast %173 : vector<1x32xf32> to vector<32x32xf32>
    %175 = vector.broadcast %169 : vector<32x1xf32> to vector<32x32xf32>
    %176 = arith.cmpf ogt, %174, %175 : vector<32x32xf32>
    %177 = vector.broadcast %173 : vector<1x32xf32> to vector<32x32xf32>
    %178 = vector.broadcast %169 : vector<32x1xf32> to vector<32x32xf32>
    %179 = arith.cmpf oeq, %177, %178 : vector<32x32xf32>
    %180 = arith.cmpi slt, %162, %161 : vector<32x32xi32>
    %181 = arith.andi %179, %180 : vector<32x32xi1>
    %182 = arith.ori %176, %181 : vector<32x32xi1>
    %183 = arith.extui %182 : vector<32x32xi1> to vector<32x32xi32>
    %184 = arith.sitofp %183 : vector<32x32xi32> to vector<32x32xf32>
    %185 = arith.mulf %18, %184 : vector<32x32xf32>
    %cst_68 = arith.constant dense<0.000000e+00> : vector<32xf32>
    %186 = vector.multi_reduction <add>, %185, %cst_68 [1] : vector<32x32xf32> to vector<32xf32>
    %187 = vector.shape_cast %186 : vector<32xf32> to vector<32x1xf32>
    %cst_69 = arith.constant dense<0.000000e+00> : vector<32x1xf32>
    %188 = tpu.matmul %18, %97, %cst_69 {dimension_numbers = #tpu.dot_dimension_numbers<[1], [0], [0], [1], [0, 0, 1, 1], [], []>} : vector<32x32xf32>, vector<32x1xf32>, vector<32x1xf32> -> vector<32x1xf32>
    %cst_70 = arith.constant 0.000000e+00 : f32
    %189 = vector.broadcast %cst_70 : f32 to vector<32x1xf32>
    %190 = arith.cmpf ogt, %97, %189 : vector<32x1xf32>
    %cst_71 = arith.constant 5.000000e-01 : f32
    %191 = vector.broadcast %cst_71 : f32 to vector<32x1xf32>
    %192 = arith.mulf %191, %188 : vector<32x1xf32>
    %193 = math.ceil %192 : vector<32x1xf32>
    %194 = arith.cmpf olt, %187, %193 : vector<32x1xf32>
    %195 = arith.andi %190, %194 : vector<32x1xi1>
    %196 = arith.extui %195 : vector<32x1xi1> to vector<32x1xi32>
    %197 = arith.sitofp %196 : vector<32x1xi32> to vector<32x1xf32>
    %198 = math.tanh %160 : vector<32x1xf32>
    %199 = vector.broadcast %198 : vector<32x1xf32> to vector<32x32xf32>
    %200 = arith.mulf %149, %199 : vector<32x32xf32>
    %201 = vector.broadcast %197 : vector<32x1xf32> to vector<32x32xf32>
    %202 = arith.mulf %200, %201 : vector<32x32xf32>
    %cst_72 = arith.constant dense<0.000000e+00> : vector<2x1xf32>
    %203 = tpu.matmul %20, %197, %cst_72 {dimension_numbers = #tpu.dot_dimension_numbers<[1], [0], [0], [1], [0, 0, 1, 1], [], []>} : vector<2x32xf32>, vector<32x1xf32>, vector<2x1xf32> -> vector<2x1xf32>
    %204 = arith.truncf %20 : vector<2x32xf32> to vector<2x32xbf16>
    %205 = arith.truncf %202 : vector<32x32xf32> to vector<32x32xbf16>
    %cst_73 = arith.constant dense<0.000000e+00> : vector<2x32xf32>
    %206 = tpu.matmul %204, %205, %cst_73 {dimension_numbers = #tpu.dot_dimension_numbers<[1], [0], [0], [1], [0, 0, 1, 1], [], []>} : vector<2x32xbf16>, vector<32x32xbf16>, vector<2x32xf32> -> vector<2x32xf32>
    %cst_74 = arith.constant 1.000000e+00 : f32
    %207 = vector.broadcast %cst_74 : f32 to vector<2x1xf32>
    %208 = arith.maximumf %203, %207 : vector<2x1xf32>
    %209 = vector.broadcast %208 : vector<2x1xf32> to vector<2x32xf32>
    %210 = arith.divf %206, %209 : vector<2x32xf32>
    %cst_75 = arith.constant 1.000000e+00 : f32
    %211 = vector.broadcast %cst_75 : f32 to vector<32x1xf32>
    %212 = arith.subf %197, %211 : vector<32x1xf32>
    %cst_76 = arith.constant 1.000000e+30 : f32
    %213 = vector.broadcast %cst_76 : f32 to vector<32x1xf32>
    %214 = arith.mulf %212, %213 : vector<32x1xf32>
    %215 = vector.broadcast %214 : vector<32x1xf32> to vector<32x32xf32>
    %216 = arith.addf %202, %215 : vector<32x32xf32>
    %217 = vector.shape_cast %216 : vector<32x32xf32> to vector<2x16x32xf32>
    %cst_77 = arith.constant 0.000000e+00 : f32
    %218 = vector.broadcast %cst_77 : f32 to vector<2x1xf32>
    %219 = arith.cmpf ogt, %203, %218 : vector<2x1xf32>
    %cst_78 = arith.constant dense<0xFF800000> : vector<2x32xf32>
    %220 = vector.multi_reduction <maximumf>, %217, %cst_78 [1] : vector<2x16x32xf32> to vector<2x32xf32>
    %cst_79 = arith.constant 0.000000e+00 : f32
    %221 = vector.shape_cast %219 : vector<2x1xi1> to vector<2x1xi1>
    %222 = vector.broadcast %221 : vector<2x1xi1> to vector<2x32xi1>
    %223 = vector.broadcast %cst_79 : f32 to vector<2x32xf32>
    %224 = arith.select %222, %220, %223 : vector<2x32xi1>, vector<2x32xf32>
    %225 = arith.addf %125, %224 : vector<2x32xf32>
    %226 = arith.addf %126, %210 : vector<2x32xf32>
    %cst_80 = arith.constant dense<0.000000e+00> : vector<32x1xf32>
    %227 = tpu.matmul %8, %197, %cst_80 {dimension_numbers = #tpu.dot_dimension_numbers<[1], [0], [0], [1], [0, 0, 1, 1], [], []>} : vector<32x32xf32>, vector<32x1xf32>, vector<32x1xf32> -> vector<32x1xf32>
    %cst_81 = arith.constant 0.000000e+00 : f32
    %228 = vector.broadcast %cst_81 : f32 to vector<32x1xf32>
    %229 = arith.cmpf ogt, %227, %228 : vector<32x1xf32>
    %cst_82 = arith.constant 9.99999996E-13 : f32
    %230 = vector.broadcast %cst_82 : f32 to vector<32x1xf32>
    %231 = arith.maximumf %227, %230 : vector<32x1xf32>
    %232 = math.rsqrt %231 : vector<32x1xf32>
    %cst_83 = arith.constant 0.000000e+00 : f32
    %233 = vector.broadcast %cst_83 : f32 to vector<32x1xf32>
    %234 = arith.select %229, %232, %233 : vector<32x1xi1>, vector<32x1xf32>
    %235 = arith.mulf %197, %234 : vector<32x1xf32>
    %c0_84 = arith.constant 0 : index
    %c0_85 = arith.constant 0 : index
    %236 = vector.load %arg14[%c0_84, %c0_85] : memref<32x32xbf16, #tpu.memory_space<vmem>>, vector<32x32xbf16>
    %237 = arith.truncf %202 : vector<32x32xf32> to vector<32x32xbf16>
    %cst_86 = arith.constant dense<0.000000e+00> : vector<32x32xf32>
    %238 = tpu.matmul %237, %236, %cst_86 {dimension_numbers = #tpu.dot_dimension_numbers<[1], [0], [0], [1], [0, 0, 1, 1], [], []>} : vector<32x32xbf16>, vector<32x32xbf16>, vector<32x32xf32> -> vector<32x32xf32>
    %239 = vector.broadcast %235 : vector<32x1xf32> to vector<32x32xf32>
    %240 = arith.mulf %239, %238 : vector<32x32xf32>
    %241 = arith.truncf %240 : vector<32x32xf32> to vector<32x32xbf16>
    %cst_87 = arith.constant dense<0.000000e+00> : vector<32x32xf32>
    %242 = tpu.matmul %9, %241, %cst_87 {dimension_numbers = #tpu.dot_dimension_numbers<[1], [0], [0], [1], [0, 0, 1, 1], [], []>} : vector<32x32xbf16>, vector<32x32xbf16>, vector<32x32xf32> -> vector<32x32xf32>
    %243 = vector.broadcast %235 : vector<32x1xf32> to vector<32x32xf32>
    %244 = arith.mulf %243, %242 : vector<32x32xf32>
    %c0_88 = arith.constant 0 : index
    %c0_89 = arith.constant 0 : index
    %245 = vector.load %arg15[%c0_88, %c0_89] : memref<1x32xf32, #tpu.memory_space<vmem>>, vector<1x32xf32>
    %246 = vector.broadcast %245 : vector<1x32xf32> to vector<32x32xf32>
    %247 = arith.addf %244, %246 : vector<32x32xf32>
    %cst_90 = arith.constant 0.000000e+00 : f32
    %248 = vector.broadcast %cst_90 : f32 to vector<32x32xf32>
    %249 = arith.maximumf %247, %248 : vector<32x32xf32>
    %c0_91 = arith.constant 0 : index
    %c0_92 = arith.constant 0 : index
    %250 = vector.load %arg16[%c0_91, %c0_92] : memref<1x32xf32, #tpu.memory_space<vmem>>, vector<1x32xf32>
    %251 = vector.broadcast %250 : vector<1x32xf32> to vector<32x32xf32>
    %252 = arith.mulf %249, %251 : vector<32x32xf32>
    %cst_93 = arith.constant dense<0.000000e+00> : vector<32xf32>
    %253 = vector.multi_reduction <add>, %252, %cst_93 [1] : vector<32x32xf32> to vector<32xf32>
    %254 = vector.shape_cast %253 : vector<32xf32> to vector<32x1xf32>
    %255 = arith.mulf %235, %254 : vector<32x1xf32>
    %cst_94 = arith.constant dense<0.000000e+00> : vector<32x1xf32>
    %256 = tpu.matmul %8, %255, %cst_94 {dimension_numbers = #tpu.dot_dimension_numbers<[1], [0], [0], [1], [0, 0, 1, 1], [], []>} : vector<32x32xf32>, vector<32x1xf32>, vector<32x1xf32> -> vector<32x1xf32>
    %257 = arith.mulf %235, %256 : vector<32x1xf32>
    %c0_95 = arith.constant 0 : index
    %c0_96 = arith.constant 0 : index
    %258 = memref.load %arg17[%c0_95, %c0_96] : memref<1x1xf32, #tpu.memory_space<smem>>
    %259 = vector.broadcast %258 : f32 to vector<32x1xf32>
    %260 = arith.addf %257, %259 : vector<32x1xf32>
    %261 = tpu.iota {dimensions = array<i32: 0>} : vector<32x32xi32>
    %262 = tpu.iota {dimensions = array<i32: 1>} : vector<32x32xi32>
    %263 = arith.cmpi eq, %261, %262 : vector<32x32xi32>
    %264 = arith.extui %263 : vector<32x32xi1> to vector<32x32xi32>
    %265 = arith.sitofp %264 : vector<32x32xi32> to vector<32x32xf32>
    %cst_97 = arith.constant 0.000000e+00 : f32
    %266 = vector.broadcast %cst_97 : f32 to vector<32x1xf32>
    %267 = arith.cmpf ogt, %197, %266 : vector<32x1xf32>
    %cst_98 = arith.constant -1.000000e+30 : f32
    %268 = vector.broadcast %cst_98 : f32 to vector<32x1xf32>
    %269 = arith.select %267, %260, %268 : vector<32x1xi1>, vector<32x1xf32>
    %270 = vector.broadcast %269 : vector<32x1xf32> to vector<32x32xf32>
    %271 = arith.mulf %265, %270 : vector<32x32xf32>
    %cst_99 = arith.constant dense<0.000000e+00> : vector<32xf32>
    %272 = vector.multi_reduction <add>, %271, %cst_99 [0] : vector<32x32xf32> to vector<32xf32>
    %273 = vector.shape_cast %272 : vector<32xf32> to vector<1x32xf32>
    %274 = vector.broadcast %273 : vector<1x32xf32> to vector<32x32xf32>
    %275 = vector.broadcast %269 : vector<32x1xf32> to vector<32x32xf32>
    %276 = arith.cmpf ogt, %274, %275 : vector<32x32xf32>
    %277 = vector.broadcast %273 : vector<1x32xf32> to vector<32x32xf32>
    %278 = vector.broadcast %269 : vector<32x1xf32> to vector<32x32xf32>
    %279 = arith.cmpf oeq, %277, %278 : vector<32x32xf32>
    %280 = arith.cmpi slt, %262, %261 : vector<32x32xi32>
    %281 = arith.andi %279, %280 : vector<32x32xi1>
    %282 = arith.ori %276, %281 : vector<32x32xi1>
    %283 = arith.extui %282 : vector<32x32xi1> to vector<32x32xi32>
    %284 = arith.sitofp %283 : vector<32x32xi32> to vector<32x32xf32>
    %285 = arith.mulf %18, %284 : vector<32x32xf32>
    %cst_100 = arith.constant dense<0.000000e+00> : vector<32xf32>
    %286 = vector.multi_reduction <add>, %285, %cst_100 [1] : vector<32x32xf32> to vector<32xf32>
    %287 = vector.shape_cast %286 : vector<32xf32> to vector<32x1xf32>
    %cst_101 = arith.constant dense<0.000000e+00> : vector<32x1xf32>
    %288 = tpu.matmul %18, %197, %cst_101 {dimension_numbers = #tpu.dot_dimension_numbers<[1], [0], [0], [1], [0, 0, 1, 1], [], []>} : vector<32x32xf32>, vector<32x1xf32>, vector<32x1xf32> -> vector<32x1xf32>
    %cst_102 = arith.constant 0.000000e+00 : f32
    %289 = vector.broadcast %cst_102 : f32 to vector<32x1xf32>
    %290 = arith.cmpf ogt, %197, %289 : vector<32x1xf32>
    %cst_103 = arith.constant 5.000000e-01 : f32
    %291 = vector.broadcast %cst_103 : f32 to vector<32x1xf32>
    %292 = arith.mulf %291, %288 : vector<32x1xf32>
    %293 = math.ceil %292 : vector<32x1xf32>
    %294 = arith.cmpf olt, %287, %293 : vector<32x1xf32>
    %295 = arith.andi %290, %294 : vector<32x1xi1>
    %296 = arith.extui %295 : vector<32x1xi1> to vector<32x1xi32>
    %297 = arith.sitofp %296 : vector<32x1xi32> to vector<32x1xf32>
    %298 = math.tanh %260 : vector<32x1xf32>
    %299 = vector.broadcast %298 : vector<32x1xf32> to vector<32x32xf32>
    %300 = arith.mulf %249, %299 : vector<32x32xf32>
    %301 = vector.broadcast %297 : vector<32x1xf32> to vector<32x32xf32>
    %302 = arith.mulf %300, %301 : vector<32x32xf32>
    %cst_104 = arith.constant dense<0.000000e+00> : vector<2x1xf32>
    %303 = tpu.matmul %20, %297, %cst_104 {dimension_numbers = #tpu.dot_dimension_numbers<[1], [0], [0], [1], [0, 0, 1, 1], [], []>} : vector<2x32xf32>, vector<32x1xf32>, vector<2x1xf32> -> vector<2x1xf32>
    %304 = arith.truncf %20 : vector<2x32xf32> to vector<2x32xbf16>
    %305 = arith.truncf %302 : vector<32x32xf32> to vector<32x32xbf16>
    %cst_105 = arith.constant dense<0.000000e+00> : vector<2x32xf32>
    %306 = tpu.matmul %304, %305, %cst_105 {dimension_numbers = #tpu.dot_dimension_numbers<[1], [0], [0], [1], [0, 0, 1, 1], [], []>} : vector<2x32xbf16>, vector<32x32xbf16>, vector<2x32xf32> -> vector<2x32xf32>
    %cst_106 = arith.constant 1.000000e+00 : f32
    %307 = vector.broadcast %cst_106 : f32 to vector<2x1xf32>
    %308 = arith.maximumf %303, %307 : vector<2x1xf32>
    %309 = vector.broadcast %308 : vector<2x1xf32> to vector<2x32xf32>
    %310 = arith.divf %306, %309 : vector<2x32xf32>
    %cst_107 = arith.constant 1.000000e+00 : f32
    %311 = vector.broadcast %cst_107 : f32 to vector<32x1xf32>
    %312 = arith.subf %297, %311 : vector<32x1xf32>
    %cst_108 = arith.constant 1.000000e+30 : f32
    %313 = vector.broadcast %cst_108 : f32 to vector<32x1xf32>
    %314 = arith.mulf %312, %313 : vector<32x1xf32>
    %315 = vector.broadcast %314 : vector<32x1xf32> to vector<32x32xf32>
    %316 = arith.addf %302, %315 : vector<32x32xf32>
    %317 = vector.shape_cast %316 : vector<32x32xf32> to vector<2x16x32xf32>
    %cst_109 = arith.constant 0.000000e+00 : f32
    %318 = vector.broadcast %cst_109 : f32 to vector<2x1xf32>
    %319 = arith.cmpf ogt, %303, %318 : vector<2x1xf32>
    %cst_110 = arith.constant dense<0xFF800000> : vector<2x32xf32>
    %320 = vector.multi_reduction <maximumf>, %317, %cst_110 [1] : vector<2x16x32xf32> to vector<2x32xf32>
    %cst_111 = arith.constant 0.000000e+00 : f32
    %321 = vector.shape_cast %319 : vector<2x1xi1> to vector<2x1xi1>
    %322 = vector.broadcast %321 : vector<2x1xi1> to vector<2x32xi1>
    %323 = vector.broadcast %cst_111 : f32 to vector<2x32xf32>
    %324 = arith.select %322, %320, %323 : vector<2x32xi1>, vector<2x32xf32>
    %325 = arith.addf %225, %324 : vector<2x32xf32>
    %326 = arith.addf %226, %310 : vector<2x32xf32>
    %c0_112 = arith.constant 0 : index
    %c0_113 = arith.constant 0 : index
    %327 = vector.load %arg18[%c0_112, %c0_113] : memref<32x32xbf16, #tpu.memory_space<vmem>>, vector<32x32xbf16>
    %328 = arith.truncf %325 : vector<2x32xf32> to vector<2x32xbf16>
    %cst_114 = arith.constant dense<0.000000e+00> : vector<2x32xf32>
    %329 = tpu.matmul %328, %327, %cst_114 {dimension_numbers = #tpu.dot_dimension_numbers<[1], [0], [0], [1], [0, 0, 1, 1], [], []>} : vector<2x32xbf16>, vector<32x32xbf16>, vector<2x32xf32> -> vector<2x32xf32>
    %c0_115 = arith.constant 0 : index
    %c0_116 = arith.constant 0 : index
    %330 = vector.load %arg19[%c0_115, %c0_116] : memref<32x32xbf16, #tpu.memory_space<vmem>>, vector<32x32xbf16>
    %331 = arith.truncf %326 : vector<2x32xf32> to vector<2x32xbf16>
    %cst_117 = arith.constant dense<0.000000e+00> : vector<2x32xf32>
    %332 = tpu.matmul %331, %330, %cst_117 {dimension_numbers = #tpu.dot_dimension_numbers<[1], [0], [0], [1], [0, 0, 1, 1], [], []>} : vector<2x32xbf16>, vector<32x32xbf16>, vector<2x32xf32> -> vector<2x32xf32>
    %333 = arith.addf %329, %332 : vector<2x32xf32>
    %c0_118 = arith.constant 0 : index
    %c0_119 = arith.constant 0 : index
    %334 = vector.load %arg20[%c0_118, %c0_119] : memref<1x32xf32, #tpu.memory_space<vmem>>, vector<1x32xf32>
    %335 = vector.broadcast %334 : vector<1x32xf32> to vector<2x32xf32>
    %336 = arith.addf %333, %335 : vector<2x32xf32>
    %cst_120 = arith.constant 0.000000e+00 : f32
    %337 = vector.broadcast %cst_120 : f32 to vector<2x32xf32>
    %338 = arith.maximumf %336, %337 : vector<2x32xf32>
    %c0_121 = arith.constant 0 : index
    %c0_122 = arith.constant 0 : index
    %339 = vector.load %arg21[%c0_121, %c0_122] : memref<32x16xbf16, #tpu.memory_space<vmem>>, vector<32x16xbf16>
    %340 = arith.truncf %338 : vector<2x32xf32> to vector<2x32xbf16>
    %cst_123 = arith.constant dense<0.000000e+00> : vector<2x16xf32>
    %341 = tpu.matmul %340, %339, %cst_123 {dimension_numbers = #tpu.dot_dimension_numbers<[1], [0], [0], [1], [0, 0, 1, 1], [], []>} : vector<2x32xbf16>, vector<32x16xbf16>, vector<2x16xf32> -> vector<2x16xf32>
    %c0_124 = arith.constant 0 : index
    %c0_125 = arith.constant 0 : index
    %342 = vector.load %arg22[%c0_124, %c0_125] : memref<1x16xf32, #tpu.memory_space<vmem>>, vector<1x16xf32>
    %343 = vector.broadcast %342 : vector<1x16xf32> to vector<2x16xf32>
    %344 = arith.addf %341, %343 : vector<2x16xf32>
    %cst_126 = arith.constant 0.000000e+00 : f32
    %345 = vector.broadcast %cst_126 : f32 to vector<2x16xf32>
    %346 = arith.maximumf %344, %345 : vector<2x16xf32>
    %c0_127 = arith.constant 0 : index
    %c0_128 = arith.constant 0 : index
    %347 = vector.load %arg23[%c0_127, %c0_128] : memref<16x4xbf16, #tpu.memory_space<vmem>>, vector<16x4xbf16>
    %348 = arith.truncf %346 : vector<2x16xf32> to vector<2x16xbf16>
    %cst_129 = arith.constant dense<0.000000e+00> : vector<2x4xf32>
    %349 = tpu.matmul %348, %347, %cst_129 {dimension_numbers = #tpu.dot_dimension_numbers<[1], [0], [0], [1], [0, 0, 1, 1], [], []>} : vector<2x16xbf16>, vector<16x4xbf16>, vector<2x4xf32> -> vector<2x4xf32>
    %c0_130 = arith.constant 0 : index
    %c0_131 = arith.constant 0 : index
    %350 = vector.load %arg24[%c0_130, %c0_131] : memref<1x4xf32, #tpu.memory_space<vmem>>, vector<1x4xf32>
    %351 = vector.broadcast %350 : vector<1x4xf32> to vector<2x4xf32>
    %352 = arith.addf %349, %351 : vector<2x4xf32>
    %cst_132 = arith.constant dense<0xFF800000> : vector<2xf32>
    %353 = vector.multi_reduction <maximumf>, %352, %cst_132 [1] : vector<2x4xf32> to vector<2xf32>
    %354 = vector.shape_cast %353 : vector<2xf32> to vector<2x1xf32>
    %355 = vector.broadcast %354 : vector<2x1xf32> to vector<2x4xf32>
    %356 = arith.subf %352, %355 : vector<2x4xf32>
    %357 = math.exp %356 : vector<2x4xf32>
    %cst_133 = arith.constant dense<0.000000e+00> : vector<2xf32>
    %358 = vector.multi_reduction <add>, %357, %cst_133 [1] : vector<2x4xf32> to vector<2xf32>
    %359 = vector.shape_cast %358 : vector<2xf32> to vector<2x1xf32>
    %360 = math.log %359 : vector<2x1xf32>
    %361 = vector.broadcast %360 : vector<2x1xf32> to vector<2x4xf32>
    %362 = arith.subf %356, %361 : vector<2x4xf32>
    %c0_134 = arith.constant 0 : index
    %c0_135 = arith.constant 0 : index
    %c0_136 = arith.constant 0 : index
    %363 = vector.load %arg25[%c0_134, %c0_135, %c0_136] : memref<1x2x4xf32, #tpu.memory_space<vmem>>, vector<1x2x4xf32>
    %364 = vector.shape_cast %363 : vector<1x2x4xf32> to vector<2x4xf32>
    %365 = vector.shape_cast %362 : vector<2x4xf32> to vector<1x2x4xf32>
    tpu.vector_store %arg25[%c0_134, %c0_135, %c0_136], %365 {strides = array<i32>} : memref<1x2x4xf32, #tpu.memory_space<vmem>>, vector<1x2x4xf32>,
    return
  }
  func.func @transform_0(%arg0: i32) -> (i32, i32, i32) {
    %c0_i32 = arith.constant 0 : i32
    %c0_i32_0 = arith.constant 0 : i32
    %c0_i32_1 = arith.constant 0 : i32
    return %arg0, %c0_i32, %c0_i32_0 : i32, i32, i32
  }
  func.func @transform_1(%arg0: i32) -> (i32, i32, i32) {
    %c0_i32 = arith.constant 0 : i32
    %c0_i32_0 = arith.constant 0 : i32
    %c0_i32_1 = arith.constant 0 : i32
    return %arg0, %c0_i32, %c0_i32_0 : i32, i32, i32
  }
  func.func @transform_2(%arg0: i32) -> (i32, i32, i32) {
    %c0_i32 = arith.constant 0 : i32
    %c0_i32_0 = arith.constant 0 : i32
    %c0_i32_1 = arith.constant 0 : i32
    return %arg0, %c0_i32, %c0_i32_0 : i32, i32, i32
  }
  func.func @transform_3(%arg0: i32) -> (i32, i32, i32) {
    %c0_i32 = arith.constant 0 : i32
    %c0_i32_0 = arith.constant 0 : i32
    %c0_i32_1 = arith.constant 0 : i32
    return %arg0, %c0_i32, %c0_i32_0 : i32, i32, i32
  }
  func.func @transform_4(%arg0: i32) -> (i32, i32, i32) {
    %c0_i32 = arith.constant 0 : i32
    %c0_i32_0 = arith.constant 0 : i32
    %c0_i32_1 = arith.constant 0 : i32
    return %arg0, %c0_i32, %c0_i32_0 : i32, i32, i32
  }
  func.func @transform_5(%arg0: i32) -> (i32, i32) {
    %c0_i32 = arith.constant 0 : i32
    %c0_i32_0 = arith.constant 0 : i32
    %c0_i32_1 = arith.constant 0 : i32
    return %c0_i32, %c0_i32_0 : i32, i32
  }
  func.func @transform_6(%arg0: i32) -> (i32, i32) {
    %c0_i32 = arith.constant 0 : i32
    %c0_i32_0 = arith.constant 0 : i32
    %c0_i32_1 = arith.constant 0 : i32
    return %c0_i32, %c0_i32_0 : i32, i32
  }
  func.func @transform_7(%arg0: i32) -> (i32, i32) {
    %c0_i32 = arith.constant 0 : i32
    %c0_i32_0 = arith.constant 0 : i32
    %c0_i32_1 = arith.constant 0 : i32
    return %c0_i32, %c0_i32_0 : i32, i32
  }
  func.func @transform_8(%arg0: i32) -> (i32, i32) {
    %c0_i32 = arith.constant 0 : i32
    %c0_i32_0 = arith.constant 0 : i32
    %c0_i32_1 = arith.constant 0 : i32
    return %c0_i32, %c0_i32_0 : i32, i32
  }
  func.func @transform_9(%arg0: i32) -> (i32, i32) {
    %c0_i32 = arith.constant 0 : i32
    %c0_i32_0 = arith.constant 0 : i32
    %c0_i32_1 = arith.constant 0 : i32
    return %c0_i32, %c0_i32_0 : i32, i32
  }
  func.func @transform_10(%arg0: i32) -> (i32, i32) {
    %c0_i32 = arith.constant 0 : i32
    %c0_i32_0 = arith.constant 0 : i32
    %c0_i32_1 = arith.constant 0 : i32
    return %c0_i32, %c0_i32_0 : i32, i32
  }
  func.func @transform_11(%arg0: i32) -> (i32, i32) {
    %c0_i32 = arith.constant 0 : i32
    %c0_i32_0 = arith.constant 0 : i32
    %c0_i32_1 = arith.constant 0 : i32
    return %c0_i32, %c0_i32_0 : i32, i32
  }
  func.func @transform_12(%arg0: i32) -> (i32, i32) {
    %c0_i32 = arith.constant 0 : i32
    %c0_i32_0 = arith.constant 0 : i32
    %c0_i32_1 = arith.constant 0 : i32
    return %c0_i32, %c0_i32_0 : i32, i32
  }
  func.func @transform_13(%arg0: i32) -> (i32, i32) {
    %c0_i32 = arith.constant 0 : i32
    %c0_i32_0 = arith.constant 0 : i32
    %c0_i32_1 = arith.constant 0 : i32
    return %c0_i32, %c0_i32_0 : i32, i32
  }
  func.func @transform_14(%arg0: i32) -> (i32, i32) {
    %c0_i32 = arith.constant 0 : i32
    %c0_i32_0 = arith.constant 0 : i32
    %c0_i32_1 = arith.constant 0 : i32
    return %c0_i32, %c0_i32_0 : i32, i32
  }
  func.func @transform_15(%arg0: i32) -> (i32, i32) {
    %c0_i32 = arith.constant 0 : i32
    %c0_i32_0 = arith.constant 0 : i32
    %c0_i32_1 = arith.constant 0 : i32
    return %c0_i32, %c0_i32_0 : i32, i32
  }
  func.func @transform_16(%arg0: i32) -> (i32, i32) {
    %c0_i32 = arith.constant 0 : i32
    %c0_i32_0 = arith.constant 0 : i32
    %c0_i32_1 = arith.constant 0 : i32
    return %c0_i32, %c0_i32_0 : i32, i32
  }
  func.func @transform_17(%arg0: i32) -> (i32, i32) {
    %c0_i32 = arith.constant 0 : i32
    %c0_i32_0 = arith.constant 0 : i32
    %c0_i32_1 = arith.constant 0 : i32
    return %c0_i32, %c0_i32_0 : i32, i32
  }
  func.func @transform_18(%arg0: i32) -> (i32, i32) {
    %c0_i32 = arith.constant 0 : i32
    %c0_i32_0 = arith.constant 0 : i32
    %c0_i32_1 = arith.constant 0 : i32
    return %c0_i32, %c0_i32_0 : i32, i32
  }
  func.func @transform_19(%arg0: i32) -> (i32, i32) {
    %c0_i32 = arith.constant 0 : i32
    %c0_i32_0 = arith.constant 0 : i32
    %c0_i32_1 = arith.constant 0 : i32
    return %c0_i32, %c0_i32_0 : i32, i32
  }
  func.func @transform_20(%arg0: i32) -> (i32, i32) {
    %c0_i32 = arith.constant 0 : i32
    %c0_i32_0 = arith.constant 0 : i32
    %c0_i32_1 = arith.constant 0 : i32
    return %c0_i32, %c0_i32_0 : i32, i32
  }
  func.func @transform_21(%arg0: i32) -> (i32, i32) {
    %c0_i32 = arith.constant 0 : i32
    %c0_i32_0 = arith.constant 0 : i32
    %c0_i32_1 = arith.constant 0 : i32
    return %c0_i32, %c0_i32_0 : i32, i32
  }
  func.func @transform_22(%arg0: i32) -> (i32, i32) {
    %c0_i32 = arith.constant 0 : i32
    %c0_i32_0 = arith.constant 0 : i32
    %c0_i32_1 = arith.constant 0 : i32
    return %c0_i32, %c0_i32_0 : i32, i32
  }
  func.func @transform_23(%arg0: i32) -> (i32, i32) {
    %c0_i32 = arith.constant 0 : i32
    %c0_i32_0 = arith.constant 0 : i32
    %c0_i32_1 = arith.constant 0 : i32
    return %c0_i32, %c0_i32_0 : i32, i32
  }
  func.func @transform_24(%arg0: i32) -> (i32, i32, i32) {
    %c0_i32 = arith.constant 0 : i32
    %c0_i32_0 = arith.constant 0 : i32
    %c0_i32_1 = arith.constant 0 : i32
    return %arg0, %c0_i32, %c0_i32_0 : i32, i32, i32
  }
}

</mosaic_0001>

<llo_original>
// kernel: sagnet_forward.1
$region0: #{sagnet_forward.1}
  #allocation0 [shape = 'u32[]', space=smem, size = 0x4, offset = 0x4, fixed_abs, tag = 'smem constant byte address 0x4 - core index']
  #allocation1 [shape = 'u32[144,128]{1,0:T(1,128)}', space=vmem, size = 0x12000, scoped, tag = 'internal scratch']
  #allocation2 [shape = 'f32[1,1]{1,0:T(1,128)S(6)}', space=smem, size = 0x200, scoped, tag = 'scoped memory for sagnet_forward.1']
  #allocation3 [shape = 'f32[1,1]{1,0:T(1,128)S(6)}', space=smem, size = 0x200, scoped, tag = 'scoped memory for sagnet_forward.1']
  #allocation4 [shape = 'f32[1,1]{1,0:T(1,128)S(6)}', space=smem, size = 0x200, scoped, tag = 'scoped memory for sagnet_forward.1']
  %s0 = inlined_call_operand.vmem [shape: bf16[2,32,32], index: 0, kind: input, shape index: {}]
  %s1 = inlined_call_operand.vmem [shape: bf16[2,32,8], index: 1, kind: input, shape index: {}]
  %s2 = inlined_call_operand.vmem [shape: f32[2,2,32], index: 2, kind: input, shape index: {}]
  %s3 = inlined_call_operand.vmem [shape: s32[2,32,1], index: 3, kind: input, shape index: {}]
  %s4 = inlined_call_operand.vmem [shape: s32[2,1,32], index: 4, kind: input, shape index: {}]
  %s5 = inlined_call_operand.vmem [shape: bf16[8,32], index: 5, kind: input, shape index: {}]
  %s6 = inlined_call_operand.vmem [shape: f32[1,32], index: 6, kind: input, shape index: {}]
  %s7 = inlined_call_operand.vmem [shape: f32[1,32], index: 7, kind: input, shape index: {}]
  %s8 = inlined_call_operand.<no memory space> [shape: f32[1,1], index: 8, kind: input, shape index: {}]
  %s9 = inlined_call_operand.vmem [shape: bf16[32,32], index: 9, kind: input, shape index: {}]
  %s10 = inlined_call_operand.vmem [shape: f32[1,32], index: 10, kind: input, shape index: {}]
  %s11 = inlined_call_operand.vmem [shape: f32[1,32], index: 11, kind: input, shape index: {}]
  %s12 = inlined_call_operand.<no memory space> [shape: f32[1,1], index: 12, kind: input, shape index: {}]
  %s13 = inlined_call_operand.vmem [shape: bf16[32,32], index: 13, kind: input, shape index: {}]
  %s14 = inlined_call_operand.vmem [shape: f32[1,32], index: 14, kind: input, shape index: {}]
  %s15 = inlined_call_operand.vmem [shape: f32[1,32], index: 15, kind: input, shape index: {}]
  %s16 = inlined_call_operand.<no memory space> [shape: f32[1,1], index: 16, kind: input, shape index: {}]
  %s17 = inlined_call_operand.vmem [shape: bf16[32,32], index: 17, kind: input, shape index: {}]
  %s18 = inlined_call_operand.vmem [shape: bf16[32,32], index: 18, kind: input, shape index: {}]
  %s19 = inlined_call_operand.vmem [shape: f32[1,32], index: 19, kind: input, shape index: {}]
  %s20 = inlined_call_operand.vmem [shape: bf16[32,16], index: 20, kind: input, shape index: {}]
  %s21 = inlined_call_operand.vmem [shape: f32[1,16], index: 21, kind: input, shape index: {}]
  %s22 = inlined_call_operand.vmem [shape: bf16[16,4], index: 22, kind: input, shape index: {}]
  %s23 = inlined_call_operand.vmem [shape: f32[1,4], index: 23, kind: input, shape index: {}]
  %s24 = inlined_call_operand.hbm [shape: f32[2,2,4], index: 24, kind: output, shape index: {}]
  %s25 = sld [smem:[#allocation0]]
  $region129: #{sagnet_forward.1} parent=0
    _
  %s27 = ssub.s32 1, %s25
  %s28 = scalar_select 0, %s27, %s25
  %29 = sst [smem:[#allocation2]] %s8
  %30 = sst [smem:[#allocation3]] %s12
  %31 = sst [smem:[#allocation4]] %s16
  $region1: #{sagnet_forward.1} parent=0
    #allocation5 [shape = 'u8[2048]{0}', space=vmem, size = 0x800, scoped, tag = 'output window, operand 0']
    #allocation6 [shape = 's32[2]{0}', space=sflag, size = 0x8, scoped, tag = 'scoped memory for sagnet_forward.1']
    %32 = vsyncpa [#allocation6], 0
    %s33 = scalar_lea.sflag [#allocation6], 1
    %34 = vsyncpa %s33, 0
    loop: start=0, step=1, limit=4
    $region2: #{sagnet_forward.1} parent=1 // loop_pre_header
      _
    $region3: #{sagnet_forward.1} parent=1 // loop_header
      %s36 = sphi 0, %s40
      %p37 = scmp.ge.s32.totalorder %s36, 4
      %s46 = sphi 0, %s48
      %s49 = sphi 0, %s46
      %s50 = sphi 0, %s49
      %s66 = sphi 0, %s50
      %s72 = sphi 0, %s74
      %s75 = sphi 0, %s72
      %s76 = sphi 0, %s75
      %s92 = sphi 0, %s76
      %s98 = sphi 0, %s100
      %s101 = sphi 0, %s98
      %s102 = sphi 0, %s101
      %s118 = sphi 0, %s102
      %s124 = sphi 0, %s126
      %s127 = sphi 0, %s124
      %s128 = sphi 0, %s127
      %s144 = sphi 0, %s128
      %s150 = sphi 0, %s152
      %s153 = sphi 0, %s150
      %s154 = sphi 0, %s153
      %s170 = sphi 0, %s154
      %s174 = sphi 0, %s174
      %s176 = sphi 0, %s174
      %s177 = sphi 0, %s176
      %s191 = sphi 0, %s177
      %s195 = sphi 0, %s195
      %s197 = sphi 0, %s195
      %s198 = sphi 0, %s197
      %s212 = sphi 0, %s198
      %s216 = sphi 0, %s216
      %s218 = sphi 0, %s216
      %s219 = sphi 0, %s218
      %s233 = sphi 0, %s219
      %s237 = sphi 0, %s237
      %s239 = sphi 0, %s237
      %s240 = sphi 0, %s239
      %s254 = sphi 0, %s240
      %s258 = sphi 0, %s258
      %s260 = sphi 0, %s258
      %s261 = sphi 0, %s260
      %s275 = sphi 0, %s261
      %s279 = sphi 0, %s279
      %s281 = sphi 0, %s279
      %s282 = sphi 0, %s281
      %s296 = sphi 0, %s282
      %s300 = sphi 0, %s300
      %s302 = sphi 0, %s300
      %s303 = sphi 0, %s302
      %s317 = sphi 0, %s303
      %s321 = sphi 0, %s321
      %s323 = sphi 0, %s321
      %s324 = sphi 0, %s323
      %s338 = sphi 0, %s324
      %s342 = sphi 0, %s342
      %s344 = sphi 0, %s342
      %s345 = sphi 0, %s344
      %s359 = sphi 0, %s345
      %s363 = sphi 0, %s363
      %s365 = sphi 0, %s363
      %s366 = sphi 0, %s365
      %s380 = sphi 0, %s366
      %s384 = sphi 0, %s384
      %s386 = sphi 0, %s384
      %s387 = sphi 0, %s386
      %s401 = sphi 0, %s387
      %s405 = sphi 0, %s405
      %s407 = sphi 0, %s405
      %s408 = sphi 0, %s407
      %s422 = sphi 0, %s408
      %s426 = sphi 0, %s426
      %s428 = sphi 0, %s426
      %s429 = sphi 0, %s428
      %s443 = sphi 0, %s429
      %s447 = sphi 0, %s447
      %s449 = sphi 0, %s447
      %s450 = sphi 0, %s449
      %s464 = sphi 0, %s450
      %s468 = sphi 0, %s468
      %s470 = sphi 0, %s468
      %s471 = sphi 0, %s470
      %s485 = sphi 0, %s471
      %s489 = sphi 0, %s489
      %s491 = sphi 0, %s489
      %s492 = sphi 0, %s491
      %s506 = sphi 0, %s492
      %s510 = sphi 0, %s510
      %s512 = sphi 0, %s510
      %s513 = sphi 0, %s512
      %s527 = sphi 0, %s513
      %s531 = sphi 0, %s531
      %s533 = sphi 0, %s531
      %s534 = sphi 0, %s533
      %s548 = sphi 0, %s534
      %s552 = sphi 0, %s552
      %s554 = sphi 0, %s552
      %s555 = sphi 0, %s554
      %s569 = sphi 0, %s555
      %s575 = sphi 0, %s577
      %s578 = sphi 0, %s575
      %s579 = sphi 0, %s578
      %s595 = sphi 0, %s579
    $region4: #{sagnet_forward.1} parent=1 // loop_header_branch
      %39 = sbr.rel (%p37) target = $region8
    $region5: #{sagnet_forward.1} parent=1 // loop_body
      %s41 = ssub.s32 %s36, 1
      %s42 = ssub.s32 %s36, 2
      %s43 = sadd.s32 %s36, 1
      %s44 = ssub.s32 %s36, %s43
      %p45 = scmp.eq.s32.totalorder %s44, 0
      %s47 = sadd.s32 %s46, 1
      %s48 = scalar_select %p45, %s46, %s47
      %p51 = pneg %p45
      %p52 = scmp.eq.s32.totalorder %s36, 1
      %p53 = por %p51, %p52
      %p54 = scmp.ne.s32.totalorder %s46, %s49
      %p55 = scmp.eq.s32.totalorder %s36, 0
      %p56 = por %p54, %p55
      %p57 = scmp.ne.s32.totalorder %s46, %s49
      %p58 = scmp.eq.s32.totalorder %s41, 1
      %p59 = por %p57, %p58
      %p60 = scmp.ne.s32.totalorder %s49, %s50
      %p61 = scmp.eq.s32.totalorder %s41, 0
      %p62 = por %p60, %p61
      %p63 = scmp.ne.s32.totalorder %s49, %s50
      %p64 = scmp.eq.s32.totalorder %s42, 1
      %p65 = por %p63, %p64
      %p67 = scmp.ne.s32.totalorder %s50, %s66
      %p68 = scmp.eq.s32.totalorder %s42, 0
      %p69 = por %p67, %p68
      %s70 = ssub.s32 %s36, %s43
      %p71 = scmp.eq.s32.totalorder %s70, 0
      %s73 = sadd.s32 %s72, 1
      %s74 = scalar_select %p71, %s72, %s73
      %p77 = pneg %p71
      %p78 = scmp.eq.s32.totalorder %s36, 1
      %p79 = por %p77, %p78
      %p80 = scmp.ne.s32.totalorder %s72, %s75
      %p81 = scmp.eq.s32.totalorder %s36, 0
      %p82 = por %p80, %p81
      %p83 = scmp.ne.s32.totalorder %s72, %s75
      %p84 = scmp.eq.s32.totalorder %s41, 1
      %p85 = por %p83, %p84
      %p86 = scmp.ne.s32.totalorder %s75, %s76
      %p87 = scmp.eq.s32.totalorder %s41, 0
      %p88 = por %p86, %p87
      %p89 = scmp.ne.s32.totalorder %s75, %s76
      %p90 = scmp.eq.s32.totalorder %s42, 1
      %p91 = por %p89, %p90
      %p93 = scmp.ne.s32.totalorder %s76, %s92
      %p94 = scmp.eq.s32.totalorder %s42, 0
      %p95 = por %p93, %p94
      %s96 = ssub.s32 %s36, %s43
      %p97 = scmp.eq.s32.totalorder %s96, 0
      %s99 = sadd.s32 %s98, 1
      %s100 = scalar_select %p97, %s98, %s99
      %p103 = pneg %p97
      %p104 = scmp.eq.s32.totalorder %s36, 1
      %p105 = por %p103, %p104
      %p106 = scmp.ne.s32.totalorder %s98, %s101
      %p107 = scmp.eq.s32.totalorder %s36, 0
      %p108 = por %p106, %p107
      %p109 = scmp.ne.s32.totalorder %s98, %s101
      %p110 = scmp.eq.s32.totalorder %s41, 1
      %p111 = por %p109, %p110
      %p112 = scmp.ne.s32.totalorder %s101, %s102
      %p113 = scmp.eq.s32.totalorder %s41, 0
      %p114 = por %p112, %p113
      %p115 = scmp.ne.s32.totalorder %s101, %s102
      %p116 = scmp.eq.s32.totalorder %s42, 1
      %p117 = por %p115, %p116
      %p119 = scmp.ne.s32.totalorder %s102, %s118
      %p120 = scmp.eq.s32.totalorder %s42, 0
      %p121 = por %p119, %p120
      %s122 = ssub.s32 %s36, %s43
      %p123 = scmp.eq.s32.totalorder %s122, 0
      %s125 = sadd.s32 %s124, 1
      %s126 = scalar_select %p123, %s124, %s125
      %p129 = pneg %p123
      %p130 = scmp.eq.s32.totalorder %s36, 1
      %p131 = por %p129, %p130
      %p132 = scmp.ne.s32.totalorder %s124, %s127
      %p133 = scmp.eq.s32.totalorder %s36, 0
      %p134 = por %p132, %p133
      %p135 = scmp.ne.s32.totalorder %s124, %s127
      %p136 = scmp.eq.s32.totalorder %s41, 1
      %p137 = por %p135, %p136
      %p138 = scmp.ne.s32.totalorder %s127, %s128
      %p139 = scmp.eq.s32.totalorder %s41, 0
      %p140 = por %p138, %p139
      %p141 = scmp.ne.s32.totalorder %s127, %s128
      %p142 = scmp.eq.s32.totalorder %s42, 1
      %p143 = por %p141, %p142
      %p145 = scmp.ne.s32.totalorder %s128, %s144
      %p146 = scmp.eq.s32.totalorder %s42, 0
      %p147 = por %p145, %p146
      %s148 = ssub.s32 %s36, %s43
      %p149 = scmp.eq.s32.totalorder %s148, 0
      %s151 = sadd.s32 %s150, 1
      %s152 = scalar_select %p149, %s150, %s151
      %p155 = pneg %p149
      %p156 = scmp.eq.s32.totalorder %s36, 1
      %p157 = por %p155, %p156
      %p158 = scmp.ne.s32.totalorder %s150, %s153
      %p159 = scmp.eq.s32.totalorder %s36, 0
      %p160 = por %p158, %p159
      %p161 = scmp.ne.s32.totalorder %s150, %s153
      %p162 = scmp.eq.s32.totalorder %s41, 1
      %p163 = por %p161, %p162
      %p164 = scmp.ne.s32.totalorder %s153, %s154
      %p165 = scmp.eq.s32.totalorder %s41, 0
      %p166 = por %p164, %p165
      %p167 = scmp.ne.s32.totalorder %s153, %s154
      %p168 = scmp.eq.s32.totalorder %s42, 1
      %p169 = por %p167, %p168
      %p171 = scmp.ne.s32.totalorder %s154, %s170
      %p172 = scmp.eq.s32.totalorder %s42, 0
      %p173 = por %p171, %p172
      %s175 = sadd.s32 %s174, 1
      %p178 = scmp.eq.s32.totalorder %s36, 1
      %p179 = scmp.ne.s32.totalorder %s174, %s176
      %p180 = scmp.eq.s32.totalorder %s36, 0
      %p181 = por %p179, %p180
      %p182 = scmp.ne.s32.totalorder %s174, %s176
      %p183 = scmp.eq.s32.totalorder %s41, 1
      %p184 = por %p182, %p183
      %p185 = scmp.ne.s32.totalorder %s176, %s177
      %p186 = scmp.eq.s32.totalorder %s41, 0
      %p187 = por %p185, %p186
      %p188 = scmp.ne.s32.totalorder %s176, %s177
      %p189 = scmp.eq.s32.totalorder %s42, 1
      %p190 = por %p188, %p189
      %p192 = scmp.ne.s32.totalorder %s177, %s191
      %p193 = scmp.eq.s32.totalorder %s42, 0
      %p194 = por %p192, %p193
      %s196 = sadd.s32 %s195, 1
      %p199 = scmp.eq.s32.totalorder %s36, 1
      %p200 = scmp.ne.s32.totalorder %s195, %s197
      %p201 = scmp.eq.s32.totalorder %s36, 0
      %p202 = por %p200, %p201
      %p203 = scmp.ne.s32.totalorder %s195, %s197
      %p204 = scmp.eq.s32.totalorder %s41, 1
      %p205 = por %p203, %p204
      %p206 = scmp.ne.s32.totalorder %s197, %s198
      %p207 = scmp.eq.s32.totalorder %s41, 0
      %p208 = por %p206, %p207
      %p209 = scmp.ne.s32.totalorder %s197, %s198
      %p210 = scmp.eq.s32.totalorder %s42, 1
      %p211 = por %p209, %p210
      %p213 = scmp.ne.s32.totalorder %s198, %s212
      %p214 = scmp.eq.s32.totalorder %s42, 0
      %p215 = por %p213, %p214
      %s217 = sadd.s32 %s216, 1
      %p220 = scmp.eq.s32.totalorder %s36, 1
      %p221 = scmp.ne.s32.totalorder %s216, %s218
      %p222 = scmp.eq.s32.totalorder %s36, 0
      %p223 = por %p221, %p222
      %p224 = scmp.ne.s32.totalorder %s216, %s218
      %p225 = scmp.eq.s32.totalorder %s41, 1
      %p226 = por %p224, %p225
      %p227 = scmp.ne.s32.totalorder %s218, %s219
      %p228 = scmp.eq.s32.totalorder %s41, 0
      %p229 = por %p227, %p228
      %p230 = scmp.ne.s32.totalorder %s218, %s219
      %p231 = scmp.eq.s32.totalorder %s42, 1
      %p232 = por %p230, %p231
      %p234 = scmp.ne.s32.totalorder %s219, %s233
      %p235 = scmp.eq.s32.totalorder %s42, 0
      %p236 = por %p234, %p235
      %s238 = sadd.s32 %s237, 1
      %p241 = scmp.eq.s32.totalorder %s36, 1
      %p242 = scmp.ne.s32.totalorder %s237, %s239
      %p243 = scmp.eq.s32.totalorder %s36, 0
      %p244 = por %p242, %p243
      %p245 = scmp.ne.s32.totalorder %s237, %s239
      %p246 = scmp.eq.s32.totalorder %s41, 1
      %p247 = por %p245, %p246
      %p248 = scmp.ne.s32.totalorder %s239, %s240
      %p249 = scmp.eq.s32.totalorder %s41, 0
      %p250 = por %p248, %p249
      %p251 = scmp.ne.s32.totalorder %s239, %s240
      %p252 = scmp.eq.s32.totalorder %s42, 1
      %p253 = por %p251, %p252
      %p255 = scmp.ne.s32.totalorder %s240, %s254
      %p256 = scmp.eq.s32.totalorder %s42, 0
      %p257 = por %p255, %p256
      %s259 = sadd.s32 %s258, 1
      %p262 = scmp.eq.s32.totalorder %s36, 1
      %p263 = scmp.ne.s32.totalorder %s258, %s260
      %p264 = scmp.eq.s32.totalorder %s36, 0
      %p265 = por %p263, %p264
      %p266 = scmp.ne.s32.totalorder %s258, %s260
      %p267 = scmp.eq.s32.totalorder %s41, 1
      %p268 = por %p266, %p267
      %p269 = scmp.ne.s32.totalorder %s260, %s261
      %p270 = scmp.eq.s32.totalorder %s41, 0
      %p271 = por %p269, %p270
      %p272 = scmp.ne.s32.totalorder %s260, %s261
      %p273 = scmp.eq.s32.totalorder %s42, 1
      %p274 = por %p272, %p273
      %p276 = scmp.ne.s32.totalorder %s261, %s275
      %p277 = scmp.eq.s32.totalorder %s42, 0
      %p278 = por %p276, %p277
      %s280 = sadd.s32 %s279, 1
      %p283 = scmp.eq.s32.totalorder %s36, 1
      %p284 = scmp.ne.s32.totalorder %s279, %s281
      %p285 = scmp.eq.s32.totalorder %s36, 0
      %p286 = por %p284, %p285
      %p287 = scmp.ne.s32.totalorder %s279, %s281
      %p288 = scmp.eq.s32.totalorder %s41, 1
      %p289 = por %p287, %p288
      %p290 = scmp.ne.s32.totalorder %s281, %s282
      %p291 = scmp.eq.s32.totalorder %s41, 0
      %p292 = por %p290, %p291
      %p293 = scmp.ne.s32.totalorder %s281, %s282
      %p294 = scmp.eq.s32.totalorder %s42, 1
      %p295 = por %p293, %p294
      %p297 = scmp.ne.s32.totalorder %s282, %s296
      %p298 = scmp.eq.s32.totalorder %s42, 0
      %p299 = por %p297, %p298
      %s301 = sadd.s32 %s300, 1
      %p304 = scmp.eq.s32.totalorder %s36, 1
      %p305 = scmp.ne.s32.totalorder %s300, %s302
      %p306 = scmp.eq.s32.totalorder %s36, 0
      %p307 = por %p305, %p306
      %p308 = scmp.ne.s32.totalorder %s300, %s302
      %p309 = scmp.eq.s32.totalorder %s41, 1
      %p310 = por %p308, %p309
      %p311 = scmp.ne.s32.totalorder %s302, %s303
      %p312 = scmp.eq.s32.totalorder %s41, 0
      %p313 = por %p311, %p312
      %p314 = scmp.ne.s32.totalorder %s302, %s303
      %p315 = scmp.eq.s32.totalorder %s42, 1
      %p316 = por %p314, %p315
      %p318 = scmp.ne.s32.totalorder %s303, %s317
      %p319 = scmp.eq.s32.totalorder %s42, 0
      %p320 = por %p318, %p319
      %s322 = sadd.s32 %s321, 1
      %p325 = scmp.eq.s32.totalorder %s36, 1
      %p326 = scmp.ne.s32.totalorder %s321, %s323
      %p327 = scmp.eq.s32.totalorder %s36, 0
      %p328 = por %p326, %p327
      %p329 = scmp.ne.s32.totalorder %s321, %s323
      %p330 = scmp.eq.s32.totalorder %s41, 1
      %p331 = por %p329, %p330
      %p332 = scmp.ne.s32.totalorder %s323, %s324
      %p333 = scmp.eq.s32.totalorder %s41, 0
      %p334 = por %p332, %p333
      %p335 = scmp.ne.s32.totalorder %s323, %s324
      %p336 = scmp.eq.s32.totalorder %s42, 1
      %p337 = por %p335, %p336
      %p339 = scmp.ne.s32.totalorder %s324, %s338
      %p340 = scmp.eq.s32.totalorder %s42, 0
      %p341 = por %p339, %p340
      %s343 = sadd.s32 %s342, 1
      %p346 = scmp.eq.s32.totalorder %s36, 1
      %p347 = scmp.ne.s32.totalorder %s342, %s344
      %p348 = scmp.eq.s32.totalorder %s36, 0
      %p349 = por %p347, %p348
      %p350 = scmp.ne.s32.totalorder %s342, %s344
      %p351 = scmp.eq.s32.totalorder %s41, 1
      %p352 = por %p350, %p351
      %p353 = scmp.ne.s32.totalorder %s344, %s345
      %p354 = scmp.eq.s32.totalorder %s41, 0
      %p355 = por %p353, %p354
      %p356 = scmp.ne.s32.totalorder %s344, %s345
      %p357 = scmp.eq.s32.totalorder %s42, 1
      %p358 = por %p356, %p357
      %p360 = scmp.ne.s32.totalorder %s345, %s359
      %p361 = scmp.eq.s32.totalorder %s42, 0
      %p362 = por %p360, %p361
      %s364 = sadd.s32 %s363, 1
      %p367 = scmp.eq.s32.totalorder %s36, 1
      %p368 = scmp.ne.s32.totalorder %s363, %s365
      %p369 = scmp.eq.s32.totalorder %s36, 0
      %p370 = por %p368, %p369
      %p371 = scmp.ne.s32.totalorder %s363, %s365
      %p372 = scmp.eq.s32.totalorder %s41, 1
      %p373 = por %p371, %p372
      %p374 = scmp.ne.s32.totalorder %s365, %s366
      %p375 = scmp.eq.s32.totalorder %s41, 0
      %p376 = por %p374, %p375
      %p377 = scmp.ne.s32.totalorder %s365, %s366
      %p378 = scmp.eq.s32.totalorder %s42, 1
      %p379 = por %p377, %p378
      %p381 = scmp.ne.s32.totalorder %s366, %s380
      %p382 = scmp.eq.s32.totalorder %s42, 0
      %p383 = por %p381, %p382
      %s385 = sadd.s32 %s384, 1
      %p388 = scmp.eq.s32.totalorder %s36, 1
      %p389 = scmp.ne.s32.totalorder %s384, %s386
      %p390 = scmp.eq.s32.totalorder %s36, 0
      %p391 = por %p389, %p390
      %p392 = scmp.ne.s32.totalorder %s384, %s386
      %p393 = scmp.eq.s32.totalorder %s41, 1
      %p394 = por %p392, %p393
      %p395 = scmp.ne.s32.totalorder %s386, %s387
      %p396 = scmp.eq.s32.totalorder %s41, 0
      %p397 = por %p395, %p396
      %p398 = scmp.ne.s32.totalorder %s386, %s387
      %p399 = scmp.eq.s32.totalorder %s42, 1
      %p400 = por %p398, %p399
      %p402 = scmp.ne.s32.totalorder %s387, %s401
      %p403 = scmp.eq.s32.totalorder %s42, 0
      %p404 = por %p402, %p403
      %s406 = sadd.s32 %s405, 1
      %p409 = scmp.eq.s32.totalorder %s36, 1
      %p410 = scmp.ne.s32.totalorder %s405, %s407
      %p411 = scmp.eq.s32.totalorder %s36, 0
      %p412 = por %p410, %p411
      %p413 = scmp.ne.s32.totalorder %s405, %s407
      %p414 = scmp.eq.s32.totalorder %s41, 1
      %p415 = por %p413, %p414
      %p416 = scmp.ne.s32.totalorder %s407, %s408
      %p417 = scmp.eq.s32.totalorder %s41, 0
      %p418 = por %p416, %p417
      %p419 = scmp.ne.s32.totalorder %s407, %s408
      %p420 = scmp.eq.s32.totalorder %s42, 1
      %p421 = por %p419, %p420
      %p423 = scmp.ne.s32.totalorder %s408, %s422
      %p424 = scmp.eq.s32.totalorder %s42, 0
      %p425 = por %p423, %p424
      %s427 = sadd.s32 %s426, 1
      %p430 = scmp.eq.s32.totalorder %s36, 1
      %p431 = scmp.ne.s32.totalorder %s426, %s428
      %p432 = scmp.eq.s32.totalorder %s36, 0
      %p433 = por %p431, %p432
      %p434 = scmp.ne.s32.totalorder %s426, %s428
      %p435 = scmp.eq.s32.totalorder %s41, 1
      %p436 = por %p434, %p435
      %p437 = scmp.ne.s32.totalorder %s428, %s429
      %p438 = scmp.eq.s32.totalorder %s41, 0
      %p439 = por %p437, %p438
      %p440 = scmp.ne.s32.totalorder %s428, %s429
      %p441 = scmp.eq.s32.totalorder %s42, 1
      %p442 = por %p440, %p441
      %p444 = scmp.ne.s32.totalorder %s429, %s443
      %p445 = scmp.eq.s32.totalorder %s42, 0
      %p446 = por %p444, %p445
      %s448 = sadd.s32 %s447, 1
      %p451 = scmp.eq.s32.totalorder %s36, 1
      %p452 = scmp.ne.s32.totalorder %s447, %s449
      %p453 = scmp.eq.s32.totalorder %s36, 0
      %p454 = por %p452, %p453
      %p455 = scmp.ne.s32.totalorder %s447, %s449
      %p456 = scmp.eq.s32.totalorder %s41, 1
      %p457 = por %p455, %p456
      %p458 = scmp.ne.s32.totalorder %s449, %s450
      %p459 = scmp.eq.s32.totalorder %s41, 0
      %p460 = por %p458, %p459
      %p461 = scmp.ne.s32.totalorder %s449, %s450
      %p462 = scmp.eq.s32.totalorder %s42, 1
      %p463 = por %p461, %p462
      %p465 = scmp.ne.s32.totalorder %s450, %s464
      %p466 = scmp.eq.s32.totalorder %s42, 0
      %p467 = por %p465, %p466
      %s469 = sadd.s32 %s468, 1
      %p472 = scmp.eq.s32.totalorder %s36, 1
      %p473 = scmp.ne.s32.totalorder %s468, %s470
      %p474 = scmp.eq.s32.totalorder %s36, 0
      %p475 = por %p473, %p474
      %p476 = scmp.ne.s32.totalorder %s468, %s470
      %p477 = scmp.eq.s32.totalorder %s41, 1
      %p478 = por %p476, %p477
      %p479 = scmp.ne.s32.totalorder %s470, %s471
      %p480 = scmp.eq.s32.totalorder %s41, 0
      %p481 = por %p479, %p480
      %p482 = scmp.ne.s32.totalorder %s470, %s471
      %p483 = scmp.eq.s32.totalorder %s42, 1
      %p484 = por %p482, %p483
      %p486 = scmp.ne.s32.totalorder %s471, %s485
      %p487 = scmp.eq.s32.totalorder %s42, 0
      %p488 = por %p486, %p487
      %s490 = sadd.s32 %s489, 1
      %p493 = scmp.eq.s32.totalorder %s36, 1
      %p494 = scmp.ne.s32.totalorder %s489, %s491
      %p495 = scmp.eq.s32.totalorder %s36, 0
      %p496 = por %p494, %p495
      %p497 = scmp.ne.s32.totalorder %s489, %s491
      %p498 = scmp.eq.s32.totalorder %s41, 1
      %p499 = por %p497, %p498
      %p500 = scmp.ne.s32.totalorder %s491, %s492
      %p501 = scmp.eq.s32.totalorder %s41, 0
      %p502 = por %p500, %p501
      %p503 = scmp.ne.s32.totalorder %s491, %s492
      %p504 = scmp.eq.s32.totalorder %s42, 1
      %p505 = por %p503, %p504
      %p507 = scmp.ne.s32.totalorder %s492, %s506
      %p508 = scmp.eq.s32.totalorder %s42, 0
      %p509 = por %p507, %p508
      %s511 = sadd.s32 %s510, 1
      %p514 = scmp.eq.s32.totalorder %s36, 1
      %p515 = scmp.ne.s32.totalorder %s510, %s512
      %p516 = scmp.eq.s32.totalorder %s36, 0
      %p517 = por %p515, %p516
      %p518 = scmp.ne.s32.totalorder %s510, %s512
      %p519 = scmp.eq.s32.totalorder %s41, 1
      %p520 = por %p518, %p519
      %p521 = scmp.ne.s32.totalorder %s512, %s513
      %p522 = scmp.eq.s32.totalorder %s41, 0
      %p523 = por %p521, %p522
      %p524 = scmp.ne.s32.totalorder %s512, %s513
      %p525 = scmp.eq.s32.totalorder %s42, 1
      %p526 = por %p524, %p525
      %p528 = scmp.ne.s32.totalorder %s513, %s527
      %p529 = scmp.eq.s32.totalorder %s42, 0
      %p530 = por %p528, %p529
      %s532 = sadd.s32 %s531, 1
      %p535 = scmp.eq.s32.totalorder %s36, 1
      %p536 = scmp.ne.s32.totalorder %s531, %s533
      %p537 = scmp.eq.s32.totalorder %s36, 0
      %p538 = por %p536, %p537
      %p539 = scmp.ne.s32.totalorder %s531, %s533
      %p540 = scmp.eq.s32.totalorder %s41, 1
      %p541 = por %p539, %p540
      %p542 = scmp.ne.s32.totalorder %s533, %s534
      %p543 = scmp.eq.s32.totalorder %s41, 0
      %p544 = por %p542, %p543
      %p545 = scmp.ne.s32.totalorder %s533, %s534
      %p546 = scmp.eq.s32.totalorder %s42, 1
      %p547 = por %p545, %p546
      %p549 = scmp.ne.s32.totalorder %s534, %s548
      %p550 = scmp.eq.s32.totalorder %s42, 0
      %p551 = por %p549, %p550
      %s553 = sadd.s32 %s552, 1
      %p556 = scmp.eq.s32.totalorder %s36, 1
      %p557 = scmp.ne.s32.totalorder %s552, %s554
      %p558 = scmp.eq.s32.totalorder %s36, 0
      %p559 = por %p557, %p558
      %p560 = scmp.ne.s32.totalorder %s552, %s554
      %p561 = scmp.eq.s32.totalorder %s41, 1
      %p562 = por %p560, %p561
      %p563 = scmp.ne.s32.totalorder %s554, %s555
      %p564 = scmp.eq.s32.totalorder %s41, 0
      %p565 = por %p563, %p564
      %p566 = scmp.ne.s32.totalorder %s554, %s555
      %p567 = scmp.eq.s32.totalorder %s42, 1
      %p568 = por %p566, %p567
      %p570 = scmp.ne.s32.totalorder %s555, %s569
      %p571 = scmp.eq.s32.totalorder %s42, 0
      %p572 = por %p570, %p571
      %s573 = ssub.s32 %s36, %s43
      %p574 = scmp.eq.s32.totalorder %s573, 0
      %s576 = sadd.s32 %s575, 1
      %s577 = scalar_select %p574, %s575, %s576
      %p580 = pneg %p574
      %p581 = scmp.eq.s32.totalorder %s36, 1
      %p582 = por %p580, %p581
      %p583 = scmp.ne.s32.totalorder %s575, %s578
      %p584 = scmp.eq.s32.totalorder %s36, 0
      %p585 = por %p583, %p584
      %p586 = scmp.ne.s32.totalorder %s575, %s578
      %p587 = scmp.eq.s32.totalorder %s41, 1
      %p588 = por %p586, %p587
      %p589 = scmp.ne.s32.totalorder %s578, %s579
      %p590 = scmp.eq.s32.totalorder %s41, 0
      %p591 = por %p589, %p590
      %p592 = scmp.ne.s32.totalorder %s578, %s579
      %p593 = scmp.eq.s32.totalorder %s42, 1
      %p594 = por %p592, %p593
      %p596 = scmp.ne.s32.totalorder %s579, %s595
      %p597 = scmp.eq.s32.totalorder %s42, 0
      %p598 = por %p596, %p597
      %p599 = scmp.le.s32.totalorder 1, %s36
      %p600 = scmp.lt.s32.totalorder %s36, 3
      %p601 = pnand %p599, %p600
      %p602 = pneg %p601
      // Predicated region
      $region9: #{sagnet_forward.1} parent=5 // pred_check
        _
      $region10: #{sagnet_forward.1} parent=5 // pred_check_branch
        %604 = sbr.rel (%p601) target = $region12
      $region11: #{sagnet_forward.1} parent=5 // pred_region
        %s605 = ssub.s32 %s36, 1
        // Predicated region
        $region13: #{sagnet_forward.1} parent=11 // pred_check
          %p606 = pneg %p187
        $region14: #{sagnet_forward.1} parent=11 // pred_check_branch
          %608 = sbr.rel (%p606) target = $region16
        $region15: #{sagnet_forward.1} parent=11 // pred_region
          _
        $region16: #{sagnet_forward.1} parent=11 // pred_fallthru
          _
        // Predicated region
        $region17: #{sagnet_forward.1} parent=11 // pred_check
          %p609 = pneg %p208
        $region18: #{sagnet_forward.1} parent=11 // pred_check_branch
          %611 = sbr.rel (%p609) target = $region20
        $region19: #{sagnet_forward.1} parent=11 // pred_region
          _
        $region20: #{sagnet_forward.1} parent=11 // pred_fallthru
          _
        // Predicated region
        $region21: #{sagnet_forward.1} parent=11 // pred_check
          %p612 = pneg %p229
        $region22: #{sagnet_forward.1} parent=11 // pred_check_branch
          %614 = sbr.rel (%p612) target = $region24
        $region23: #{sagnet_forward.1} parent=11 // pred_region
          _
        $region24: #{sagnet_forward.1} parent=11 // pred_fallthru
          _
        // Predicated region
        $region25: #{sagnet_forward.1} parent=11 // pred_check
          %p615 = pneg %p250
        $region26: #{sagnet_forward.1} parent=11 // pred_check_branch
          %617 = sbr.rel (%p615) target = $region28
        $region27: #{sagnet_forward.1} parent=11 // pred_region
          _
        $region28: #{sagnet_forward.1} parent=11 // pred_fallthru
          _
        // Predicated region
        $region29: #{sagnet_forward.1} parent=11 // pred_check
          %p618 = pneg %p271
        $region30: #{sagnet_forward.1} parent=11 // pred_check_branch
          %620 = sbr.rel (%p618) target = $region32
        $region31: #{sagnet_forward.1} parent=11 // pred_region
          _
        $region32: #{sagnet_forward.1} parent=11 // pred_fallthru
          _
        // Predicated region
        $region33: #{sagnet_forward.1} parent=11 // pred_check
          %p621 = pneg %p292
        $region34: #{sagnet_forward.1} parent=11 // pred_check_branch
          %623 = sbr.rel (%p621) target = $region36
        $region35: #{sagnet_forward.1} parent=11 // pred_region
          _
        $region36: #{sagnet_forward.1} parent=11 // pred_fallthru
          _
        // Predicated region
        $region37: #{sagnet_forward.1} parent=11 // pred_check
          %p624 = pneg %p313
        $region38: #{sagnet_forward.1} parent=11 // pred_check_branch
          %626 = sbr.rel (%p624) target = $region40
        $region39: #{sagnet_forward.1} parent=11 // pred_region
          _
        $region40: #{sagnet_forward.1} parent=11 // pred_fallthru
          _
        // Predicated region
        $region41: #{sagnet_forward.1} parent=11 // pred_check
          %p627 = pneg %p334
        $region42: #{sagnet_forward.1} parent=11 // pred_check_branch
          %629 = sbr.rel (%p627) target = $region44
        $region43: #{sagnet_forward.1} parent=11 // pred_region
          _
        $region44: #{sagnet_forward.1} parent=11 // pred_fallthru
          _
        // Predicated region
        $region45: #{sagnet_forward.1} parent=11 // pred_check
          %p630 = pneg %p355
        $region46: #{sagnet_forward.1} parent=11 // pred_check_branch
          %632 = sbr.rel (%p630) target = $region48
        $region47: #{sagnet_forward.1} parent=11 // pred_region
          _
        $region48: #{sagnet_forward.1} parent=11 // pred_fallthru
          _
        // Predicated region
        $region49: #{sagnet_forward.1} parent=11 // pred_check
          %p633 = pneg %p376
        $region50: #{sagnet_forward.1} parent=11 // pred_check_branch
          %635 = sbr.rel (%p633) target = $region52
        $region51: #{sagnet_forward.1} parent=11 // pred_region
          _
        $region52: #{sagnet_forward.1} parent=11 // pred_fallthru
          _
        // Predicated region
        $region53: #{sagnet_forward.1} parent=11 // pred_check
          %p636 = pneg %p397
        $region54: #{sagnet_forward.1} parent=11 // pred_check_branch
          %638 = sbr.rel (%p636) target = $region56
        $region55: #{sagnet_forward.1} parent=11 // pred_region
          _
        $region56: #{sagnet_forward.1} parent=11 // pred_fallthru
          _
        // Predicated region
        $region57: #{sagnet_forward.1} parent=11 // pred_check
          %p639 = pneg %p418
        $region58: #{sagnet_forward.1} parent=11 // pred_check_branch
          %641 = sbr.rel (%p639) target = $region60
        $region59: #{sagnet_forward.1} parent=11 // pred_region
          _
        $region60: #{sagnet_forward.1} parent=11 // pred_fallthru
          _
        // Predicated region
        $region61: #{sagnet_forward.1} parent=11 // pred_check
          %p642 = pneg %p439
        $region62: #{sagnet_forward.1} parent=11 // pred_check_branch
          %644 = sbr.rel (%p642) target = $region64
        $region63: #{sagnet_forward.1} parent=11 // pred_region
          _
        $region64: #{sagnet_forward.1} parent=11 // pred_fallthru
          _
        // Predicated region
        $region65: #{sagnet_forward.1} parent=11 // pred_check
          %p645 = pneg %p460
        $region66: #{sagnet_forward.1} parent=11 // pred_check_branch
          %647 = sbr.rel (%p645) target = $region68
        $region67: #{sagnet_forward.1} parent=11 // pred_region
          _
        $region68: #{sagnet_forward.1} parent=11 // pred_fallthru
          _
        // Predicated region
        $region69: #{sagnet_forward.1} parent=11 // pred_check
          %p648 = pneg %p481
        $region70: #{sagnet_forward.1} parent=11 // pred_check_branch
          %650 = sbr.rel (%p648) target = $region72
        $region71: #{sagnet_forward.1} parent=11 // pred_region
          _
        $region72: #{sagnet_forward.1} parent=11 // pred_fallthru
          _
        // Predicated region
        $region73: #{sagnet_forward.1} parent=11 // pred_check
          %p651 = pneg %p502
        $region74: #{sagnet_forward.1} parent=11 // pred_check_branch
          %653 = sbr.rel (%p651) target = $region76
        $region75: #{sagnet_forward.1} parent=11 // pred_region
          _
        $region76: #{sagnet_forward.1} parent=11 // pred_fallthru
          _
        // Predicated region
        $region77: #{sagnet_forward.1} parent=11 // pred_check
          %p654 = pneg %p523
        $region78: #{sagnet_forward.1} parent=11 // pred_check_branch
          %656 = sbr.rel (%p654) target = $region80
        $region79: #{sagnet_forward.1} parent=11 // pred_region
          _
        $region80: #{sagnet_forward.1} parent=11 // pred_fallthru
          _
        // Predicated region
        $region81: #{sagnet_forward.1} parent=11 // pred_check
          %p657 = pneg %p544
        $region82: #{sagnet_forward.1} parent=11 // pred_check_branch
          %659 = sbr.rel (%p657) target = $region84
        $region83: #{sagnet_forward.1} parent=11 // pred_region
          _
        $region84: #{sagnet_forward.1} parent=11 // pred_fallthru
          _
        // Predicated region
        $region85: #{sagnet_forward.1} parent=11 // pred_check
          %p660 = pneg %p565
        $region86: #{sagnet_forward.1} parent=11 // pred_check_branch
          %662 = sbr.rel (%p660) target = $region88
        $region87: #{sagnet_forward.1} parent=11 // pred_region
          _
        $region88: #{sagnet_forward.1} parent=11 // pred_fallthru
          _
      $region12: #{sagnet_forward.1} parent=5 // pred_fallthru
        _
      %p663 = scmp.lt.s32.totalorder %s36, 2
      // Predicated region
      $region89: #{sagnet_forward.1} parent=5 // pred_check
        %p664 = pneg %p663
      $region90: #{sagnet_forward.1} parent=5 // pred_check_branch
        %666 = sbr.rel (%p664) target = $region92
      $region91: #{sagnet_forward.1} parent=5 // pred_region
        // Predicated region
        $region93: #{sagnet_forward.1} parent=91 // pred_check
          %p667 = pneg %p56
        $region94: #{sagnet_forward.1} parent=91 // pred_check_branch
          %669 = sbr.rel (%p667) target = $region96
        $region95: #{sagnet_forward.1} parent=91 // pred_region
          %p670 = scmp.lt.s32.totalorder %s36, 1
          %s671 = scalar_select %p670, %s36, 1
          %s672 = smul.addr %s671, 4
          %s673 = smul.addr %s672, 4
          %s674 = scalar_lea.vmem %s0, %s673
        $region96: #{sagnet_forward.1} parent=91 // pred_fallthru
          _
        // Predicated region
        $region97: #{sagnet_forward.1} parent=91 // pred_check
          %p675 = pneg %p82
        $region98: #{sagnet_forward.1} parent=91 // pred_check_branch
          %677 = sbr.rel (%p675) target = $region100
        $region99: #{sagnet_forward.1} parent=91 // pred_region
          %p678 = scmp.lt.s32.totalorder %s36, 1
          %s679 = scalar_select %p678, %s36, 1
          %s680 = smul.addr %s679, 4
          %s681 = smul.addr %s680, 4
          %s682 = scalar_lea.vmem %s1, %s681
        $region100: #{sagnet_forward.1} parent=91 // pred_fallthru
          _
        // Predicated region
        $region101: #{sagnet_forward.1} parent=91 // pred_check
          %p683 = pneg %p108
        $region102: #{sagnet_forward.1} parent=91 // pred_check_branch
          %685 = sbr.rel (%p683) target = $region104
        $region103: #{sagnet_forward.1} parent=91 // pred_region
          %p686 = scmp.lt.s32.totalorder %s36, 1
          %s687 = scalar_select %p686, %s36, 1
          %s688 = smul.addr %s687, 2
          %s689 = scalar_lea.vmem %s2, %s688
        $region104: #{sagnet_forward.1} parent=91 // pred_fallthru
          _
        // Predicated region
        $region105: #{sagnet_forward.1} parent=91 // pred_check
          %p690 = pneg %p134
        $region106: #{sagnet_forward.1} parent=91 // pred_check_branch
          %692 = sbr.rel (%p690) target = $region108
        $region107: #{sagnet_forward.1} parent=91 // pred_region
          %p693 = scmp.lt.s32.totalorder %s36, 1
          %s694 = scalar_select %p693, %s36, 1
          %s695 = smul.addr %s694, 4
          %s696 = smul.addr %s695, 8
          %s697 = scalar_lea.vmem %s3, %s696
        $region108: #{sagnet_forward.1} parent=91 // pred_fallthru
          _
        // Predicated region
        $region109: #{sagnet_forward.1} parent=91 // pred_check
          %p698 = pneg %p160
        $region110: #{sagnet_forward.1} parent=91 // pred_check_branch
          %700 = sbr.rel (%p698) target = $region112
        $region111: #{sagnet_forward.1} parent=91 // pred_region
          %p701 = scmp.lt.s32.totalorder %s36, 1
          %s702 = scalar_select %p701, %s36, 1
          %s703 = scalar_lea.vmem %s4, %s702
        $region112: #{sagnet_forward.1} parent=91 // pred_fallthru
          _
      $region92: #{sagnet_forward.1} parent=5 // pred_fallthru
        _
      %p704 = scmp.le.s32.totalorder 1, %s36
      %p705 = scmp.lt.s32.totalorder %s36, 3
      %p706 = pnand %p704, %p705
      %p707 = pneg %p706
      // Predicated region
      $region113: #{sagnet_forward.1} parent=5 // pred_check
        _
      $region114: #{sagnet_forward.1} parent=5 // pred_check_branch
        %709 = sbr.rel (%p706) target = $region116
      $region115: #{sagnet_forward.1} parent=5 // pred_region
        %s710 = ssub.s32 %s36, 1
        %p711 = scmp.lt.s32.totalorder %s41, 1
        %s712 = scalar_select %p711, %s41, 1
        %s713 = smul.addr %s712, 4
        %s714 = smul.addr %s713, 4
        %s715 = scalar_lea.vmem %s0, %s714
        %p716 = pneg %p62
        %p717 = pneg %p59
        %p718 = scmp.lt.s32.totalorder %s41, 1
        %s719 = scalar_select %p718, %s41, 1
        %s720 = smul.addr %s719, 4
        %s721 = smul.addr %s720, 4
        %s722 = scalar_lea.vmem %s1, %s721
        %p723 = pneg %p88
        %p724 = pneg %p85
        %p725 = scmp.lt.s32.totalorder %s41, 1
        %s726 = scalar_select %p725, %s41, 1
        %s727 = smul.addr %s726, 2
        %s728 = scalar_lea.vmem %s2, %s727
        %p729 = pneg %p114
        %p730 = pneg %p111
        %p731 = scmp.lt.s32.totalorder %s41, 1
        %s732 = scalar_select %p731, %s41, 1
        %s733 = smul.addr %s732, 4
        %s734 = smul.addr %s733, 8
        %s735 = scalar_lea.vmem %s3, %s734
        %p736 = pneg %p140
        %p737 = pneg %p137
        %p738 = scmp.lt.s32.totalorder %s41, 1
        %s739 = scalar_select %p738, %s41, 1
        %s740 = scalar_lea.vmem %s4, %s739
        %p741 = pneg %p166
        %p742 = pneg %p163
        %p743 = pneg %p187
        %p744 = pneg %p184
        %p745 = pneg %p208
        %p746 = pneg %p205
        %p747 = pneg %p229
        %p748 = pneg %p226
        %p749 = pneg %p250
        %p750 = pneg %p247
        %p751 = pneg %p271
        %p752 = pneg %p268
        %p753 = pneg %p292
        %p754 = pneg %p289
        %p755 = pneg %p313
        %p756 = pneg %p310
        %p757 = pneg %p334
        %p758 = pneg %p331
        %p759 = pneg %p355
        %p760 = pneg %p352
        %p761 = pneg %p376
        %p762 = pneg %p373
        %p763 = pneg %p397
        %p764 = pneg %p394
        %p765 = pneg %p418
        %p766 = pneg %p415
        %p767 = pneg %p439
        %p768 = pneg %p436
        %p769 = pneg %p460
        %p770 = pneg %p457
        %p771 = pneg %p481
        %p772 = pneg %p478
        %p773 = pneg %p502
        %p774 = pneg %p499
        %p775 = pneg %p523
        %p776 = pneg %p520
        %p777 = pneg %p544
        %p778 = pneg %p541
        %p779 = pneg %p565
        %p780 = pneg %p562
        %p781 = pneg %p591
        %p782 = pneg %p588
        %s783 = sand.u32 %s578, 1
        %s784 = scalar_lea.sflag [#allocation6], %s783
        %s785 = sand.u32 %s578, 1
        %s786 = smul.addr %s785, 2
        %s787 = scalar_lea.vmem [#allocation5], %s786
        %p788 = scmp.lt.s32.totalorder %s41, 1
        %s789 = scalar_select %p788, %s41, 1
        %s790 = smul.addr %s789, 4
        %s791 = smul.addr %s790, 4
        %s792 = scalar_lea.vmem %s0, %s791
        %p793 = scmp.lt.s32.totalorder %s41, 1
        %s794 = scalar_select %p793, %s41, 1
        %s795 = smul.addr %s794, 4
        %s796 = smul.addr %s795, 4
        %s797 = scalar_lea.vmem %s1, %s796
        %p798 = scmp.lt.s32.totalorder %s41, 1
        %s799 = scalar_select %p798, %s41, 1
        %s800 = smul.addr %s799, 2
        %s801 = scalar_lea.vmem %s2, %s800
        %p802 = scmp.lt.s32.totalorder %s41, 1
        %s803 = scalar_select %p802, %s41, 1
        %s804 = smul.addr %s803, 4
        %s805 = smul.addr %s804, 8
        %s806 = scalar_lea.vmem %s3, %s805
        %p807 = scmp.lt.s32.totalorder %s41, 1
        %s808 = scalar_select %p807, %s41, 1
        %s809 = scalar_lea.vmem %s4, %s808
        %v811 = vlaneseq
        %v812 = vshrl.u32 %v811, 7
        %v813 = vadd.s32 %v812, 8
        %v814 = vadd.s32 %v812, 16
        %v815 = vadd.s32 %v812, 24
        %v816 = vlaneseq
        %v817 = vand.u32 %v816, 127
        %vm818 = vcmp.eq.s32.totalorder %v812, %v817
        %vm819 = vcmp.eq.s32.totalorder %v813, %v817
        %vm820 = vcmp.eq.s32.totalorder %v814, %v817
        %vm821 = vcmp.eq.s32.totalorder %v815, %v817
        %v822 = vsel %vm818, 1, 0
        %v823 = vsel %vm819, 1, 0
        %v824 = vsel %vm820, 1, 0
        %v825 = vsel %vm821, 1, 0
        %v826 = vcvt.s32.f32 %v822
        %v827 = vcvt.s32.f32 %v823
        %v828 = vcvt.s32.f32 %v824
        %v829 = vcvt.s32.f32 %v825
        %v830 = vld [vmem:[%s792] sm:$0xf]
        %v831 = vld [vmem:[%s792 + $0x4] sm:$0xf]
        %v832 = vld [vmem:[%s792 + $0x8] sm:$0xf]
        %v833 = vld [vmem:[%s792 + $0xc] sm:$0xf]
        %v834 = vunpack.c.l.bf16 %v830
        %v835 = vunpack.c.l.bf16 %v831
        %v836 = vunpack.c.l.bf16 %v832
        %v837 = vunpack.c.l.bf16 %v833
        %v838 = vadd.f32 %v834, %v826
        %v839 = vadd.f32 %v835, %v827
        %v840 = vadd.f32 %v836, %v828
        %v841 = vadd.f32 %v837, %v829
        %v842 = vpack.c.bf16 %v839, %v838
        %v843 = vpack.c.bf16 %v841, %v840
        %v844 = vld [vmem:[%s806] sm:$0xff]
        %v845 = vld [vmem:[%s806 + $0x8] sm:$0xff]
        %v846 = vld [vmem:[%s806 + $0x10] sm:$0xff]
        %v847 = vld [vmem:[%s806 + $0x18] sm:$0xff]
        %v848 = vld [vmem:[%s809] sm:$0x1]
        %849 = vset.pattern.permute.xlu0 0
        %850 = vperm.xlu0 %849, %v844
        %v851 = vpop.permute.xlu0 %850
        %852 = vset.pattern.permute.xlu0 0
        %853 = vperm.xlu0 %852, %v845
        %v854 = vpop.permute.xlu0 %853
        %855 = vset.pattern.permute.xlu0 0
        %856 = vperm.xlu0 %855, %v846
        %v857 = vpop.permute.xlu0 %856
        %858 = vset.pattern.permute.xlu0 0
        %859 = vperm.xlu0 %858, %v847
        %v860 = vpop.permute.xlu0 %859
        %v861 = vlaneseq
        %v862 = vshrl.u32 %v861, 7
        %v863 = vsub.s32 0, %v862
        %v864 = vrot.slane %v848, %v863
        %vm865 = vcmp.eq.s32.totalorder %v851, %v864
        %vm866 = vcmp.eq.s32.totalorder %v854, %v864
        %vm867 = vcmp.eq.s32.totalorder %v857, %v864
        %vm868 = vcmp.eq.s32.totalorder %v860, %v864
        %v869 = vsel %vm865, 1, 0
        %v870 = vsel %vm866, 1, 0
        %v871 = vsel %vm867, 1, 0
        %v872 = vsel %vm868, 1, 0
        %v873 = vcvt.s32.f32 %v869
        %v874 = vcvt.s32.f32 %v870
        %v875 = vcvt.s32.f32 %v871
        %v876 = vcvt.s32.f32 %v872
        %v877 = vld [vmem:[%s801] sm:$0x3]
        %v878 = vld [vmem:[%s797] sm:$0xf]
        %v879 = vld [vmem:[%s797 + $0x4] sm:$0xf]
        %v880 = vld [vmem:[%s797 + $0x8] sm:$0xf]
        %v881 = vld [vmem:[%s797 + $0xc] sm:$0xf]
        %vm882 = vcmask 261120
        %v884 = vsel %vm882, %v838, 0
        %v887 = vsel %vm882, %v839, 0
        %v890 = vsel %vm882, %v840, 0
        %v893 = vsel %vm882, %v841, 0
        %895 = vmatprep.subr.mxu0 0.0
        %896 = vmatpush1.msra.mxu0 1.0
        %897 = vmatprep.subr.mxu0 0.0
        %898 = vmatpush1.msra.mxu0 1.0
        %899 = vmatprep.subr.mxu0 0.0
        %900 = vmatpush1.msra.mxu0 1.0
        %901 = vmatprep.subr.mxu0 0.0
        %902 = vmatpush1.msra.mxu0 1.0
        %903 = vmatprep.subr.mxu0 0.0
        %904 = vmatpush1.msra.mxu0 0.0
        %905 = vmatprep.subr.mxu0 0.0
        %906 = vmatpush1.msra.mxu0 0.0
        %907 = vmatprep.subr.mxu0 0.0
        %908 = vmatpush1.msra.mxu0 0.0
        %909 = vmatprep.subr.mxu0 0.0
        %910 = vmatpush1.msra.mxu0 0.0
        %911 = vmatprep.subr.mxu0 0.0
        %912 = vmatpush1.msra.mxu0 0.0
        %913 = vmatprep.subr.mxu0 0.0
        %914 = vmatpush1.msra.mxu0 0.0
        %915 = vmatprep.subr.mxu0 0.0
        %916 = vmatpush1.msra.mxu0 0.0
        %917 = vmatprep.subr.mxu0 0.0
        %918 = vmatpush1.msra.mxu0 0.0
        %919 = vmatprep.subr.mxu0 0.0
        %920 = vmatpush1.msra.mxu0 0.0
        %921 = vmatprep.subr.mxu0 0.0
        %922 = vmatpush1.msra.mxu0 0.0
        %923 = vmatprep.subr.mxu0 0.0
        %924 = vmatpush1.msra.mxu0 0.0
        %925 = vmatprep.subr.mxu0 0.0
        %926 = vmatpush1.msra.mxu0 0.0
        %927 = vmatprep.subr.mxu0 0.0
        %928 = vmatpush1.msra.mxu0 0.0
        %929 = vmatprep.subr.mxu0 0.0
        %930 = vmatpush1.msra.mxu0 0.0
        %931 = vmatprep.subr.mxu0 0.0
        %932 = vmatpush1.msra.mxu0 0.0
        %933 = vmatprep.subr.mxu0 0.0
        %934 = vmatpush1.msra.mxu0 0.0
        %935 = vmatprep.subr.mxu0 0.0
        %936 = vmatpush1.msra.mxu0 0.0
        %937 = vmatprep.subr.mxu0 0.0
        %938 = vmatpush1.msra.mxu0 0.0
        %939 = vmatprep.subr.mxu0 0.0
        %940 = vmatpush1.msra.mxu0 0.0
        %941 = vmatprep.subr.mxu0 0.0
        %942 = vmatpush1.msra.mxu0 0.0
        %943 = vmatprep.subr.mxu0 0.0
        %944 = vmatpush1.msra.mxu0 0.0
        %945 = vmatprep.subr.mxu0 0.0
        %946 = vmatpush1.msra.mxu0 0.0
        %947 = vmatprep.subr.mxu0 0.0
        %948 = vmatpush1.msra.mxu0 0.0
        %949 = vmatprep.subr.mxu0 0.0
        %950 = vmatpush1.msra.mxu0 0.0
        %951 = vmatprep.subr.mxu0 0.0
        %952 = vmatpush1.msra.mxu0 0.0
        %953 = vmatprep.subr.mxu0 0.0
        %954 = vmatpush1.msra.mxu0 0.0
        %955 = vmatprep.subr.mxu0 0.0
        %956 = vmatpush1.msra.mxu0 0.0
        %957 = vmatprep.subr.mxu0 0.0
        %958 = vmatpush1.msra.mxu0 0.0
        %959 = vmatprep.mubr.f32.mxu0 0.0
        %960 = vmatmul.mubr.f32.gmra.mrb[0].mxu0 %v884
        %v961 = vpop.f32.mrb[0].mxu0
        %v962 = vadd.f32 0.0, %v961
        %v963 = vpop.f32.mrb[0].mxu0
        %964 = vmatprep.mubr.f32.mxu0 0.0
        %965 = vmatmul.mubr.f32.gmra.mrb[0].mxu0 %v887
        %v966 = vpop.f32.mrb[0].mxu0
        %v967 = vadd.f32 0.0, %v966
        %v968 = vpop.f32.mrb[0].mxu0
        %969 = vmatprep.mubr.f32.mxu0 0.0
        %970 = vmatmul.mubr.f32.gmra.mrb[0].mxu0 %v890
        %v971 = vpop.f32.mrb[0].mxu0
        %v972 = vadd.f32 0.0, %v971
        %v973 = vpop.f32.mrb[0].mxu0
        %974 = vmatprep.mubr.f32.mxu0 0.0
        %975 = vmatmul.mubr.f32.gmra.mrb[0].mxu0 %v893
        %v976 = vpop.f32.mrb[0].mxu0
        %v977 = vadd.f32 0.0, %v976
        %v978 = vpop.f32.mrb[0].mxu0
        %979 = vdwg.mxu0
        %vm980 = vcmp.gt.f32.partialorder %v962, 0.0
        %vm981 = vcmp.gt.f32.partialorder %v967, 0.0
        %vm982 = vcmp.gt.f32.partialorder %v972, 0.0
        %vm983 = vcmp.gt.f32.partialorder %v977, 0.0
        %v984 = vmax.f32 %v962, 1e-12
        %v985 = vmax.f32 %v967, 1e-12
        %v986 = vmax.f32 %v972, 1e-12
        %v987 = vmax.f32 %v977, 1e-12
        %v988 = vrsqrt.pop %v984
        %v989 = vrsqrt.pop %v985
        %v990 = vrsqrt.pop %v986
        %v991 = vrsqrt.pop %v987
        %v992 = vsel %vm980, %v988, 0.0
        %v993 = vsel %vm981, %v989, 0.0
        %v994 = vsel %vm982, %v990, 0.0
        %v995 = vsel %vm983, %v991, 0.0
        %v996 = vld [vmem:[%s5] sm:$0xf]
        %v1001 = vunpack.c.l.b16 %v878
        %v1002 = vunpack.c.l.b16 %v879
        %v1003 = vunpack.c.l.b16 %v880
        %v1004 = vunpack.c.l.b16 %v881
        %v1005 = vpack.c.b16 %v1002, %v1001
        %v1006 = vpack.c.b16 %v1004, %v1003
        %vm1007 = vcmask 64512
        %v1009 = vsel %vm1007, %v1005, 0
        %v1012 = vsel %vm1007, %v1006, 0
        %vm1014 = vcmask 1043456
        %v1016 = vsel %vm1014, %v996, 0
        %1018 = vmatprep.subr.bf16.mxu0 0
        %1019 = vmatpush1.bf16.msra.mxu0 %v1016
        %1020 = vmatprep.subr.bf16.mxu0 0
        %1021 = vmatpush1.bf16.msra.mxu0 0
        %1022 = vmatprep.subr.bf16.mxu0 0
        %1023 = vmatpush1.bf16.msra.mxu0 0
        %1024 = vmatprep.subr.bf16.mxu0 0
        %1025 = vmatpush1.bf16.msra.mxu0 0
        %1026 = vmatprep.subr.bf16.mxu0 0
        %1027 = vmatpush1.bf16.msra.mxu0 0
        %1028 = vmatprep.subr.bf16.mxu0 0
        %1029 = vmatpush1.bf16.msra.mxu0 0
        %1030 = vmatprep.subr.bf16.mxu0 0
        %1031 = vmatpush1.bf16.msra.mxu0 0
        %1032 = vmatprep.subr.bf16.mxu0 0
        %1033 = vmatpush1.bf16.msra.mxu0 0
        %1034 = vmatprep.subr.bf16.mxu0 0
        %1035 = vmatpush1.bf16.msra.mxu0 0
        %1036 = vmatprep.subr.bf16.mxu0 0
        %1037 = vmatpush1.bf16.msra.mxu0 0
        %1038 = vmatprep.subr.bf16.mxu0 0
        %1039 = vmatpush1.bf16.msra.mxu0 0
        %1040 = vmatprep.subr.bf16.mxu0 0
        %1041 = vmatpush1.bf16.msra.mxu0 0
        %1042 = vmatprep.subr.bf16.mxu0 0
        %1043 = vmatpush1.bf16.msra.mxu0 0
        %1044 = vmatprep.subr.bf16.mxu0 0
        %1045 = vmatpush1.bf16.msra.mxu0 0
        %1046 = vmatprep.subr.bf16.mxu0 0
        %1047 = vmatpush1.bf16.msra.mxu0 0
        %1048 = vmatprep.subr.bf16.mxu0 0
        %1049 = vmatpush1.bf16.msra.mxu0 0
        %1050 = vmatprep.mubr.bf16.mxu0 0
        %1051 = vmatmul.mubr.bf16.gmra.mrb[0].mxu0 %v1009
        %v1052 = vpop.f32.mrb[0].mxu0
        %v1053 = vadd.f32 0.0, %v1052
        %v1054 = vpop.f32.mrb[0].mxu0
        %v1055 = vpop.f32.mrb[0].mxu0
        %v1056 = vadd.f32 0.0, %v1055
        %v1057 = vpop.f32.mrb[0].mxu0
        %1058 = vmatprep.mubr.bf16.mxu0 0
        %1059 = vmatmul.mubr.bf16.gmra.mrb[0].mxu0 %v1012
        %v1060 = vpop.f32.mrb[0].mxu0
        %v1061 = vadd.f32 0.0, %v1060
        %v1062 = vpop.f32.mrb[0].mxu0
        %v1063 = vpop.f32.mrb[0].mxu0
        %v1064 = vadd.f32 0.0, %v1063
        %v1065 = vpop.f32.mrb[0].mxu0
        %1066 = vdwg.mxu0
        %1068 = vset.pattern.permute.xlu0 0
        %1069 = vperm.xlu0 %1068, %v992
        %v1070 = vpop.permute.xlu0 %1069
        %1073 = vset.pattern.permute.xlu0 0
        %1074 = vperm.xlu0 %1073, %v993
        %v1075 = vpop.permute.xlu0 %1074
        %1078 = vset.pattern.permute.xlu0 0
        %1079 = vperm.xlu0 %1078, %v994
        %v1080 = vpop.permute.xlu0 %1079
        %1083 = vset.pattern.permute.xlu0 0
        %1084 = vperm.xlu0 %1083, %v995
        %v1085 = vpop.permute.xlu0 %1084
        %v1087 = vmul.f32 %v1070, %v1053
        %v1088 = vmul.f32 %v1075, %v1056
        %v1089 = vmul.f32 %v1080, %v1061
        %v1090 = vmul.f32 %v1085, %v1064
        %v1091 = vpack.c.bf16 %v1088, %v1087
        %v1092 = vpack.c.bf16 %v1090, %v1089
        %v1094 = vsel %vm882, %v842, 0
        %v1097 = vsel %vm882, %v843, 0
        %1099 = vmatprep.subr.bf16.mxu0 0
        %1100 = vmatpush1.bf16.msra.mxu0 %v1091
        %1101 = vmatprep.subr.bf16.mxu0 0
        %1102 = vmatpush1.bf16.msra.mxu0 %v1092
        %1103 = vmatprep.subr.bf16.mxu0 0
        %1104 = vmatpush1.bf16.msra.mxu0 0
        %1105 = vmatprep.subr.bf16.mxu0 0
        %1106 = vmatpush1.bf16.msra.mxu0 0
        %1107 = vmatprep.subr.bf16.mxu0 0
        %1108 = vmatpush1.bf16.msra.mxu0 0
        %1109 = vmatprep.subr.bf16.mxu0 0
        %1110 = vmatpush1.bf16.msra.mxu0 0
        %1111 = vmatprep.subr.bf16.mxu0 0
        %1112 = vmatpush1.bf16.msra.mxu0 0
        %1113 = vmatprep.subr.bf16.mxu0 0
        %1114 = vmatpush1.bf16.msra.mxu0 0
        %1115 = vmatprep.subr.bf16.mxu0 0
        %1116 = vmatpush1.bf16.msra.mxu0 0
        %1117 = vmatprep.subr.bf16.mxu0 0
        %1118 = vmatpush1.bf16.msra.mxu0 0
        %1119 = vmatprep.subr.bf16.mxu0 0
        %1120 = vmatpush1.bf16.msra.mxu0 0
        %1121 = vmatprep.subr.bf16.mxu0 0
        %1122 = vmatpush1.bf16.msra.mxu0 0
        %1123 = vmatprep.subr.bf16.mxu0 0
        %1124 = vmatpush1.bf16.msra.mxu0 0
        %1125 = vmatprep.subr.bf16.mxu0 0
        %1126 = vmatpush1.bf16.msra.mxu0 0
        %1127 = vmatprep.subr.bf16.mxu0 0
        %1128 = vmatpush1.bf16.msra.mxu0 0
        %1129 = vmatprep.subr.bf16.mxu0 0
        %1130 = vmatpush1.bf16.msra.mxu0 0
        %1131 = vmatprep.mubr.bf16.mxu0 0
        %1132 = vmatmul.mubr.bf16.gmra.mrb[0].mxu0 %v1094
        %v1133 = vpop.f32.mrb[0].mxu0
        %v1134 = vadd.f32 0.0, %v1133
        %v1135 = vpop.f32.mrb[0].mxu0
        %v1136 = vpop.f32.mrb[0].mxu0
        %v1137 = vadd.f32 0.0, %v1136
        %v1138 = vpop.f32.mrb[0].mxu0
        %1139 = vmatprep.mubr.bf16.mxu0 0
        %1140 = vmatmul.mubr.bf16.gmra.mrb[0].mxu0 %v1097
        %v1141 = vpop.f32.mrb[0].mxu0
        %v1142 = vadd.f32 0.0, %v1141
        %v1143 = vpop.f32.mrb[0].mxu0
        %v1144 = vpop.f32.mrb[0].mxu0
        %v1145 = vadd.f32 0.0, %v1144
        %v1146 = vpop.f32.mrb[0].mxu0
        %1147 = vdwg.mxu0
        %v1148 = vmul.f32 %v1070, %v1134
        %v1149 = vmul.f32 %v1075, %v1137
        %v1150 = vmul.f32 %v1080, %v1142
        %v1151 = vmul.f32 %v1085, %v1145
        %v1152 = vld [vmem:[%s6] sm:$0x1]
        %v1154 = vlaneseq
        %v1155 = vshrl.u32 %v1154, 7
        %v1156 = vsub.s32 0, %v1155
        %v1157 = vrot.slane %v1152, %v1156
        %v1159 = vadd.f32 %v1148, %v1157
        %v1160 = vadd.f32 %v1149, %v1157
        %v1161 = vadd.f32 %v1150, %v1157
        %v1162 = vadd.f32 %v1151, %v1157
        %v1163 = vmax.f32 %v1159, 0.0
        %v1164 = vmax.f32 %v1160, 0.0
        %v1165 = vmax.f32 %v1161, 0.0
        %v1166 = vmax.f32 %v1162, 0.0
        %v1167 = vld [vmem:[%s7] sm:$0x1]
        %v1169 = vlaneseq
        %v1170 = vshrl.u32 %v1169, 7
        %v1171 = vsub.s32 0, %v1170
        %v1172 = vrot.slane %v1167, %v1171
        %v1174 = vmul.f32 %v1163, %v1172
        %v1175 = vmul.f32 %v1164, %v1172
        %v1176 = vmul.f32 %v1165, %v1172
        %v1177 = vmul.f32 %v1166, %v1172
        %v1178 = vsel %vm882, %v1174, 0.0
        %1179 = vadd.xlane.f32.xlu0 %v1178
        %v1180 = vpop.xlane.xlu0 %1179
        %v1181 = vsel %vm882, %v1175, 0.0
        %1182 = vadd.xlane.f32.xlu0 %v1181
        %v1183 = vpop.xlane.xlu0 %1182
        %v1184 = vsel %vm882, %v1176, 0.0
        %1185 = vadd.xlane.f32.xlu0 %v1184
        %v1186 = vpop.xlane.xlu0 %1185
        %v1187 = vsel %vm882, %v1177, 0.0
        %1188 = vadd.xlane.f32.xlu0 %v1187
        %v1189 = vpop.xlane.xlu0 %1188
        %v1190 = vmul.f32 %v992, %v1180
        %v1191 = vmul.f32 %v993, %v1183
        %v1192 = vmul.f32 %v994, %v1186
        %v1193 = vmul.f32 %v995, %v1189
        %1194 = vmatprep.subr.mxu0 0.0
        %1195 = vmatpush1.msra.mxu0 %v1190
        %1196 = vmatprep.subr.mxu0 0.0
        %1197 = vmatpush1.msra.mxu0 %v1191
        %1198 = vmatprep.subr.mxu0 0.0
        %1199 = vmatpush1.msra.mxu0 %v1192
        %1200 = vmatprep.subr.mxu0 0.0
        %1201 = vmatpush1.msra.mxu0 %v1193
        %1202 = vmatprep.subr.mxu0 0.0
        %1203 = vmatpush1.msra.mxu0 0.0
        %1204 = vmatprep.subr.mxu0 0.0
        %1205 = vmatpush1.msra.mxu0 0.0
        %1206 = vmatprep.subr.mxu0 0.0
        %1207 = vmatpush1.msra.mxu0 0.0
        %1208 = vmatprep.subr.mxu0 0.0
        %1209 = vmatpush1.msra.mxu0 0.0
        %1210 = vmatprep.subr.mxu0 0.0
        %1211 = vmatpush1.msra.mxu0 0.0
        %1212 = vmatprep.subr.mxu0 0.0
        %1213 = vmatpush1.msra.mxu0 0.0
        %1214 = vmatprep.subr.mxu0 0.0
        %1215 = vmatpush1.msra.mxu0 0.0
        %1216 = vmatprep.subr.mxu0 0.0
        %1217 = vmatpush1.msra.mxu0 0.0
        %1218 = vmatprep.subr.mxu0 0.0
        %1219 = vmatpush1.msra.mxu0 0.0
        %1220 = vmatprep.subr.mxu0 0.0
        %1221 = vmatpush1.msra.mxu0 0.0
        %1222 = vmatprep.subr.mxu0 0.0
        %1223 = vmatpush1.msra.mxu0 0.0
        %1224 = vmatprep.subr.mxu0 0.0
        %1225 = vmatpush1.msra.mxu0 0.0
        %1226 = vmatprep.subr.mxu0 0.0
        %1227 = vmatpush1.msra.mxu0 0.0
        %1228 = vmatprep.subr.mxu0 0.0
        %1229 = vmatpush1.msra.mxu0 0.0
        %1230 = vmatprep.subr.mxu0 0.0
        %1231 = vmatpush1.msra.mxu0 0.0
        %1232 = vmatprep.subr.mxu0 0.0
        %1233 = vmatpush1.msra.mxu0 0.0
        %1234 = vmatprep.subr.mxu0 0.0
        %1235 = vmatpush1.msra.mxu0 0.0
        %1236 = vmatprep.subr.mxu0 0.0
        %1237 = vmatpush1.msra.mxu0 0.0
        %1238 = vmatprep.subr.mxu0 0.0
        %1239 = vmatpush1.msra.mxu0 0.0
        %1240 = vmatprep.subr.mxu0 0.0
        %1241 = vmatpush1.msra.mxu0 0.0
        %1242 = vmatprep.subr.mxu0 0.0
        %1243 = vmatpush1.msra.mxu0 0.0
        %1244 = vmatprep.subr.mxu0 0.0
        %1245 = vmatpush1.msra.mxu0 0.0
        %1246 = vmatprep.subr.mxu0 0.0
        %1247 = vmatpush1.msra.mxu0 0.0
        %1248 = vmatprep.subr.mxu0 0.0
        %1249 = vmatpush1.msra.mxu0 0.0
        %1250 = vmatprep.subr.mxu0 0.0
        %1251 = vmatpush1.msra.mxu0 0.0
        %1252 = vmatprep.subr.mxu0 0.0
        %1253 = vmatpush1.msra.mxu0 0.0
        %1254 = vmatprep.subr.mxu0 0.0
        %1255 = vmatpush1.msra.mxu0 0.0
        %1256 = vmatprep.subr.mxu0 0.0
        %1257 = vmatpush1.msra.mxu0 0.0
        %1258 = vmatprep.mubr.f32.mxu0 0.0
        %1259 = vmatmul.mubr.f32.gmra.mrb[0].mxu0 %v884
        %v1260 = vpop.f32.mrb[0].mxu0
        %v1261 = vadd.f32 0.0, %v1260
        %v1262 = vpop.f32.mrb[0].mxu0
        %1263 = vmatprep.mubr.f32.mxu0 0.0
        %1264 = vmatmul.mubr.f32.gmra.mrb[0].mxu0 %v887
        %v1265 = vpop.f32.mrb[0].mxu0
        %v1266 = vadd.f32 0.0, %v1265
        %v1267 = vpop.f32.mrb[0].mxu0
        %1268 = vmatprep.mubr.f32.mxu0 0.0
        %1269 = vmatmul.mubr.f32.gmra.mrb[0].mxu0 %v890
        %v1270 = vpop.f32.mrb[0].mxu0
        %v1271 = vadd.f32 0.0, %v1270
        %v1272 = vpop.f32.mrb[0].mxu0
        %1273 = vmatprep.mubr.f32.mxu0 0.0
        %1274 = vmatmul.mubr.f32.gmra.mrb[0].mxu0 %v893
        %v1275 = vpop.f32.mrb[0].mxu0
        %v1276 = vadd.f32 0.0, %v1275
        %v1277 = vpop.f32.mrb[0].mxu0
        %1278 = vdwg.mxu0
        %v1279 = vmul.f32 %v992, %v1261
        %v1280 = vmul.f32 %v993, %v1266
        %v1281 = vmul.f32 %v994, %v1271
        %v1282 = vmul.f32 %v995, %v1276
        %s1283 = sld [smem:[#allocation2]]
        %v1284 = vstv %s1283
        %v1285 = vadd.f32 %v1279, %v1284
        %v1286 = vadd.f32 %v1280, %v1284
        %v1287 = vadd.f32 %v1281, %v1284
        %v1288 = vadd.f32 %v1282, %v1284
        %vm1289 = vcmp.gt.f32.partialorder 1.0, 0.0
        %v1290 = vsel %vm1289, %v1285, -1e+30
        %v1291 = vsel %vm1289, %v1286, -1e+30
        %v1292 = vsel %vm1289, %v1287, -1e+30
        %v1293 = vsel %vm1289, %v1288, -1e+30
        %1295 = vset.pattern.permute.xlu0 0
        %1296 = vperm.xlu0 %1295, %v1290
        %v1297 = vpop.permute.xlu0 %1296
        %1300 = vset.pattern.permute.xlu0 0
        %1301 = vperm.xlu0 %1300, %v1291
        %v1302 = vpop.permute.xlu0 %1301
        %1305 = vset.pattern.permute.xlu0 0
        %1306 = vperm.xlu0 %1305, %v1292
        %v1307 = vpop.permute.xlu0 %1306
        %1310 = vset.pattern.permute.xlu0 0
        %1311 = vperm.xlu0 %1310, %v1293
        %v1312 = vpop.permute.xlu0 %1311
        %v1314 = vmul.f32 %v826, %v1297
        %v1315 = vmul.f32 %v827, %v1302
        %v1316 = vmul.f32 %v828, %v1307
        %v1317 = vmul.f32 %v829, %v1312
        %v1318 = vsel %vm882, %v1314, 0.0
        %v1319 = vsel %vm882, %v1315, 0.0
        %v1320 = vadd.f32 %v1318, %v1319
        %v1321 = vsel %vm882, %v1316, 0.0
        %v1322 = vadd.f32 %v1320, %v1321
        %v1323 = vsel %vm882, %v1317, 0.0
        %v1324 = vadd.f32 %v1322, %v1323
        %v1325 = vrot.slane %v1324, 4
        %v1326 = vadd.f32 %v1324, %v1325
        %v1327 = vrot.slane %v1326, 2
        %v1328 = vadd.f32 %v1326, %v1327
        %v1329 = vrot.slane %v1328, 1
        %v1330 = vadd.f32 %v1328, %v1329
        %vm1331 = vcmp.gt.f32.partialorder %v1330, %v1297
        %vm1332 = vcmp.gt.f32.partialorder %v1330, %v1302
        %vm1333 = vcmp.gt.f32.partialorder %v1330, %v1307
        %vm1334 = vcmp.gt.f32.partialorder %v1330, %v1312
        %vm1335 = vcmp.eq.f32.partialorder %v1330, %v1297
        %vm1336 = vcmp.eq.f32.partialorder %v1330, %v1302
        %vm1337 = vcmp.eq.f32.partialorder %v1330, %v1307
        %vm1338 = vcmp.eq.f32.partialorder %v1330, %v1312
        %vm1339 = vcmp.lt.s32.totalorder %v817, %v812
        %vm1340 = vcmp.lt.s32.totalorder %v817, %v813
        %vm1341 = vcmp.lt.s32.totalorder %v817, %v814
        %vm1342 = vcmp.lt.s32.totalorder %v817, %v815
        %vm1343 = vmand %vm1335, %vm1339
        %vm1344 = vmand %vm1336, %vm1340
        %vm1345 = vmand %vm1337, %vm1341
        %vm1346 = vmand %vm1338, %vm1342
        %vm1347 = vmor %vm1331, %vm1343
        %vm1348 = vmor %vm1332, %vm1344
        %vm1349 = vmor %vm1333, %vm1345
        %vm1350 = vmor %vm1334, %vm1346
        %v1351 = vsel %vm1347, 1, 0
        %v1352 = vsel %vm1348, 1, 0
        %v1353 = vsel %vm1349, 1, 0
        %v1354 = vsel %vm1350, 1, 0
        %v1355 = vcvt.s32.f32 %v1351
        %v1356 = vcvt.s32.f32 %v1352
        %v1357 = vcvt.s32.f32 %v1353
        %v1358 = vcvt.s32.f32 %v1354
        %v1359 = vmul.f32 %v873, %v1355
        %v1360 = vmul.f32 %v874, %v1356
        %v1361 = vmul.f32 %v875, %v1357
        %v1362 = vmul.f32 %v876, %v1358
        %v1363 = vsel %vm882, %v1359, 0.0
        %1364 = vadd.xlane.f32.xlu0 %v1363
        %v1365 = vpop.xlane.xlu0 %1364
        %v1366 = vsel %vm882, %v1360, 0.0
        %1367 = vadd.xlane.f32.xlu0 %v1366
        %v1368 = vpop.xlane.xlu0 %1367
        %v1369 = vsel %vm882, %v1361, 0.0
        %1370 = vadd.xlane.f32.xlu0 %v1369
        %v1371 = vpop.xlane.xlu0 %1370
        %v1372 = vsel %vm882, %v1362, 0.0
        %1373 = vadd.xlane.f32.xlu0 %v1372
        %v1374 = vpop.xlane.xlu0 %1373
        %v1376 = vsel %vm882, %v873, 0
        %v1379 = vsel %vm882, %v874, 0
        %v1382 = vsel %vm882, %v875, 0
        %v1385 = vsel %vm882, %v876, 0
        %1387 = vmatprep.subr.mxu0 0.0
        %1388 = vmatpush1.msra.mxu0 1.0
        %1389 = vmatprep.subr.mxu0 0.0
        %1390 = vmatpush1.msra.mxu0 1.0
        %1391 = vmatprep.subr.mxu0 0.0
        %1392 = vmatpush1.msra.mxu0 1.0
        %1393 = vmatprep.subr.mxu0 0.0
        %1394 = vmatpush1.msra.mxu0 1.0
        %1395 = vmatprep.subr.mxu0 0.0
        %1396 = vmatpush1.msra.mxu0 0.0
        %1397 = vmatprep.subr.mxu0 0.0
        %1398 = vmatpush1.msra.mxu0 0.0
        %1399 = vmatprep.subr.mxu0 0.0
        %1400 = vmatpush1.msra.mxu0 0.0
        %1401 = vmatprep.subr.mxu0 0.0
        %1402 = vmatpush1.msra.mxu0 0.0
        %1403 = vmatprep.subr.mxu0 0.0
        %1404 = vmatpush1.msra.mxu0 0.0
        %1405 = vmatprep.subr.mxu0 0.0
        %1406 = vmatpush1.msra.mxu0 0.0
        %1407 = vmatprep.subr.mxu0 0.0
        %1408 = vmatpush1.msra.mxu0 0.0
        %1409 = vmatprep.subr.mxu0 0.0
        %1410 = vmatpush1.msra.mxu0 0.0
        %1411 = vmatprep.subr.mxu0 0.0
        %1412 = vmatpush1.msra.mxu0 0.0
        %1413 = vmatprep.subr.mxu0 0.0
        %1414 = vmatpush1.msra.mxu0 0.0
        %1415 = vmatprep.subr.mxu0 0.0
        %1416 = vmatpush1.msra.mxu0 0.0
        %1417 = vmatprep.subr.mxu0 0.0
        %1418 = vmatpush1.msra.mxu0 0.0
        %1419 = vmatprep.subr.mxu0 0.0
        %1420 = vmatpush1.msra.mxu0 0.0
        %1421 = vmatprep.subr.mxu0 0.0
        %1422 = vmatpush1.msra.mxu0 0.0
        %1423 = vmatprep.subr.mxu0 0.0
        %1424 = vmatpush1.msra.mxu0 0.0
        %1425 = vmatprep.subr.mxu0 0.0
        %1426 = vmatpush1.msra.mxu0 0.0
        %1427 = vmatprep.subr.mxu0 0.0
        %1428 = vmatpush1.msra.mxu0 0.0
        %1429 = vmatprep.subr.mxu0 0.0
        %1430 = vmatpush1.msra.mxu0 0.0
        %1431 = vmatprep.subr.mxu0 0.0
        %1432 = vmatpush1.msra.mxu0 0.0
        %1433 = vmatprep.subr.mxu0 0.0
        %1434 = vmatpush1.msra.mxu0 0.0
        %1435 = vmatprep.subr.mxu0 0.0
        %1436 = vmatpush1.msra.mxu0 0.0
        %1437 = vmatprep.subr.mxu0 0.0
        %1438 = vmatpush1.msra.mxu0 0.0
        %1439 = vmatprep.subr.mxu0 0.0
        %1440 = vmatpush1.msra.mxu0 0.0
        %1441 = vmatprep.subr.mxu0 0.0
        %1442 = vmatpush1.msra.mxu0 0.0
        %1443 = vmatprep.subr.mxu0 0.0
        %1444 = vmatpush1.msra.mxu0 0.0
        %1445 = vmatprep.subr.mxu0 0.0
        %1446 = vmatpush1.msra.mxu0 0.0
        %1447 = vmatprep.subr.mxu0 0.0
        %1448 = vmatpush1.msra.mxu0 0.0
        %1449 = vmatprep.subr.mxu0 0.0
        %1450 = vmatpush1.msra.mxu0 0.0
        %1451 = vmatprep.mubr.f32.mxu0 0.0
        %1452 = vmatmul.mubr.f32.gmra.mrb[0].mxu0 %v1376
        %v1453 = vpop.f32.mrb[0].mxu0
        %v1454 = vadd.f32 0.0, %v1453
        %v1455 = vpop.f32.mrb[0].mxu0
        %1456 = vmatprep.mubr.f32.mxu0 0.0
        %1457 = vmatmul.mubr.f32.gmra.mrb[0].mxu0 %v1379
        %v1458 = vpop.f32.mrb[0].mxu0
        %v1459 = vadd.f32 0.0, %v1458
        %v1460 = vpop.f32.mrb[0].mxu0
        %1461 = vmatprep.mubr.f32.mxu0 0.0
        %1462 = vmatmul.mubr.f32.gmra.mrb[0].mxu0 %v1382
        %v1463 = vpop.f32.mrb[0].mxu0
        %v1464 = vadd.f32 0.0, %v1463
        %v1465 = vpop.f32.mrb[0].mxu0
        %1466 = vmatprep.mubr.f32.mxu0 0.0
        %1467 = vmatmul.mubr.f32.gmra.mrb[0].mxu0 %v1385
        %v1468 = vpop.f32.mrb[0].mxu0
        %v1469 = vadd.f32 0.0, %v1468
        %v1470 = vpop.f32.mrb[0].mxu0
        %1471 = vdwg.mxu0
        %v1472 = vmul.f32 %v1454, 0.5
        %v1473 = vmul.f32 %v1459, 0.5
        %v1474 = vmul.f32 %v1464, 0.5
        %v1475 = vmul.f32 %v1469, 0.5
        %v1476 = vceil.f32 %v1472
        %v1477 = vceil.f32 %v1473
        %v1478 = vceil.f32 %v1474
        %v1479 = vceil.f32 %v1475
        %vm1480 = vcmp.lt.f32.partialorder %v1365, %v1476
        %vm1481 = vcmp.lt.f32.partialorder %v1368, %v1477
        %vm1482 = vcmp.lt.f32.partialorder %v1371, %v1478
        %vm1483 = vcmp.lt.f32.partialorder %v1374, %v1479
        %vm1484 = vmand %vm1289, %vm1480
        %vm1485 = vmand %vm1289, %vm1481
        %vm1486 = vmand %vm1289, %vm1482
        %vm1487 = vmand %vm1289, %vm1483
        %v1488 = vsel %vm1484, 1, 0
        %v1489 = vsel %vm1485, 1, 0
        %v1490 = vsel %vm1486, 1, 0
        %v1491 = vsel %vm1487, 1, 0
        %v1492 = vcvt.s32.f32 %v1488
        %v1493 = vcvt.s32.f32 %v1489
        %v1494 = vcvt.s32.f32 %v1490
        %v1495 = vcvt.s32.f32 %v1491
        %v1496 = vtanh.pop %v1285
        %v1497 = vtanh.pop %v1286
        %v1498 = vtanh.pop %v1287
        %v1499 = vtanh.pop %v1288
        %1501 = vset.pattern.permute.xlu0 0
        %1502 = vperm.xlu0 %1501, %v1496
        %v1503 = vpop.permute.xlu0 %1502
        %1506 = vset.pattern.permute.xlu0 0
        %1507 = vperm.xlu0 %1506, %v1497
        %v1508 = vpop.permute.xlu0 %1507
        %1511 = vset.pattern.permute.xlu0 0
        %1512 = vperm.xlu0 %1511, %v1498
        %v1513 = vpop.permute.xlu0 %1512
        %1516 = vset.pattern.permute.xlu0 0
        %1517 = vperm.xlu0 %1516, %v1499
        %v1518 = vpop.permute.xlu0 %1517
        %v1520 = vmul.f32 %v1163, %v1503
        %v1521 = vmul.f32 %v1164, %v1508
        %v1522 = vmul.f32 %v1165, %v1513
        %v1523 = vmul.f32 %v1166, %v1518
        %1525 = vset.pattern.permute.xlu0 0
        %1526 = vperm.xlu0 %1525, %v1492
        %v1527 = vpop.permute.xlu0 %1526
        %1530 = vset.pattern.permute.xlu0 0
        %1531 = vperm.xlu0 %1530, %v1493
        %v1532 = vpop.permute.xlu0 %1531
        %1535 = vset.pattern.permute.xlu0 0
        %1536 = vperm.xlu0 %1535, %v1494
        %v1537 = vpop.permute.xlu0 %1536
        %1540 = vset.pattern.permute.xlu0 0
        %1541 = vperm.xlu0 %1540, %v1495
        %v1542 = vpop.permute.xlu0 %1541
        %v1544 = vmul.f32 %v1520, %v1527
        %v1545 = vmul.f32 %v1521, %v1532
        %v1546 = vmul.f32 %v1522, %v1537
        %v1547 = vmul.f32 %v1523, %v1542
        %v1549 = vsel %vm882, %v877, 0
        %1551 = vmatprep.subr.mxu0 0.0
        %1552 = vmatpush1.msra.mxu0 %v1492
        %1553 = vmatprep.subr.mxu0 0.0
        %1554 = vmatpush1.msra.mxu0 %v1493
        %1555 = vmatprep.subr.mxu0 0.0
        %1556 = vmatpush1.msra.mxu0 %v1494
        %1557 = vmatprep.subr.mxu0 0.0
        %1558 = vmatpush1.msra.mxu0 %v1495
        %1559 = vmatprep.subr.mxu0 0.0
        %1560 = vmatpush1.msra.mxu0 0.0
        %1561 = vmatprep.subr.mxu0 0.0
        %1562 = vmatpush1.msra.mxu0 0.0
        %1563 = vmatprep.subr.mxu0 0.0
        %1564 = vmatpush1.msra.mxu0 0.0
        %1565 = vmatprep.subr.mxu0 0.0
        %1566 = vmatpush1.msra.mxu0 0.0
        %1567 = vmatprep.subr.mxu0 0.0
        %1568 = vmatpush1.msra.mxu0 0.0
        %1569 = vmatprep.subr.mxu0 0.0
        %1570 = vmatpush1.msra.mxu0 0.0
        %1571 = vmatprep.subr.mxu0 0.0
        %1572 = vmatpush1.msra.mxu0 0.0
        %1573 = vmatprep.subr.mxu0 0.0
        %1574 = vmatpush1.msra.mxu0 0.0
        %1575 = vmatprep.subr.mxu0 0.0
        %1576 = vmatpush1.msra.mxu0 0.0
        %1577 = vmatprep.subr.mxu0 0.0
        %1578 = vmatpush1.msra.mxu0 0.0
        %1579 = vmatprep.subr.mxu0 0.0
        %1580 = vmatpush1.msra.mxu0 0.0
        %1581 = vmatprep.subr.mxu0 0.0
        %1582 = vmatpush1.msra.mxu0 0.0
        %1583 = vmatprep.subr.mxu0 0.0
        %1584 = vmatpush1.msra.mxu0 0.0
        %1585 = vmatprep.subr.mxu0 0.0
        %1586 = vmatpush1.msra.mxu0 0.0
        %1587 = vmatprep.subr.mxu0 0.0
        %1588 = vmatpush1.msra.mxu0 0.0
        %1589 = vmatprep.subr.mxu0 0.0
        %1590 = vmatpush1.msra.mxu0 0.0
        %1591 = vmatprep.subr.mxu0 0.0
        %1592 = vmatpush1.msra.mxu0 0.0
        %1593 = vmatprep.subr.mxu0 0.0
        %1594 = vmatpush1.msra.mxu0 0.0
        %1595 = vmatprep.subr.mxu0 0.0
        %1596 = vmatpush1.msra.mxu0 0.0
        %1597 = vmatprep.subr.mxu0 0.0
        %1598 = vmatpush1.msra.mxu0 0.0
        %1599 = vmatprep.subr.mxu0 0.0
        %1600 = vmatpush1.msra.mxu0 0.0
        %1601 = vmatprep.subr.mxu0 0.0
        %1602 = vmatpush1.msra.mxu0 0.0
        %1603 = vmatprep.subr.mxu0 0.0
        %1604 = vmatpush1.msra.mxu0 0.0
        %1605 = vmatprep.subr.mxu0 0.0
        %1606 = vmatpush1.msra.mxu0 0.0
        %1607 = vmatprep.subr.mxu0 0.0
        %1608 = vmatpush1.msra.mxu0 0.0
        %1609 = vmatprep.subr.mxu0 0.0
        %1610 = vmatpush1.msra.mxu0 0.0
        %1611 = vmatprep.subr.mxu0 0.0
        %1612 = vmatpush1.msra.mxu0 0.0
        %1613 = vmatprep.subr.mxu0 0.0
        %1614 = vmatpush1.msra.mxu0 0.0
        %1615 = vmatprep.mubr.f32.mxu0 0.0
        %1616 = vmatmul.mubr.f32.gmra.mrb[0].mxu0 %v1549
        %v1617 = vpop.f32.mrb[0].mxu0
        %v1618 = vadd.f32 0.0, %v1617
        %v1619 = vpop.f32.mrb[0].mxu0
        %1620 = vdwg.mxu0
        %v1621 = vpack.c.bf16 %v877, %v877
        %v1622 = vpack.c.bf16 %v1545, %v1544
        %v1623 = vpack.c.bf16 %v1547, %v1546
        %v1625 = vsel %vm882, %v1621, 0
        %1627 = vmatprep.subr.bf16.mxu0 0
        %1628 = vmatpush1.bf16.msra.mxu0 %v1622
        %1629 = vmatprep.subr.bf16.mxu0 0
        %1630 = vmatpush1.bf16.msra.mxu0 %v1623
        %1631 = vmatprep.subr.bf16.mxu0 0
        %1632 = vmatpush1.bf16.msra.mxu0 0
        %1633 = vmatprep.subr.bf16.mxu0 0
        %1634 = vmatpush1.bf16.msra.mxu0 0
        %1635 = vmatprep.subr.bf16.mxu0 0
        %1636 = vmatpush1.bf16.msra.mxu0 0
        %1637 = vmatprep.subr.bf16.mxu0 0
        %1638 = vmatpush1.bf16.msra.mxu0 0
        %1639 = vmatprep.subr.bf16.mxu0 0
        %1640 = vmatpush1.bf16.msra.mxu0 0
        %1641 = vmatprep.subr.bf16.mxu0 0
        %1642 = vmatpush1.bf16.msra.mxu0 0
        %1643 = vmatprep.subr.bf16.mxu0 0
        %1644 = vmatpush1.bf16.msra.mxu0 0
        %1645 = vmatprep.subr.bf16.mxu0 0
        %1646 = vmatpush1.bf16.msra.mxu0 0
        %1647 = vmatprep.subr.bf16.mxu0 0
        %1648 = vmatpush1.bf16.msra.mxu0 0
        %1649 = vmatprep.subr.bf16.mxu0 0
        %1650 = vmatpush1.bf16.msra.mxu0 0
        %1651 = vmatprep.subr.bf16.mxu0 0
        %1652 = vmatpush1.bf16.msra.mxu0 0
        %1653 = vmatprep.subr.bf16.mxu0 0
        %1654 = vmatpush1.bf16.msra.mxu0 0
        %1655 = vmatprep.subr.bf16.mxu0 0
        %1656 = vmatpush1.bf16.msra.mxu0 0
        %1657 = vmatprep.subr.bf16.mxu0 0
        %1658 = vmatpush1.bf16.msra.mxu0 0
        %1659 = vmatprep.mubr.bf16.mxu0 0
        %1660 = vmatmul.mubr.bf16.gmra.mrb[0].mxu0 %v1625
        %v1661 = vpop.f32.mrb[0].mxu0
        %v1662 = vadd.f32 0.0, %v1661
        %v1663 = vpop.f32.mrb[0].mxu0
        %v1664 = vpop.f32.mrb[0].mxu0
        %v1665 = vpop.f32.mrb[0].mxu0
        %1666 = vdwg.mxu0
        %v1667 = vmax.f32 %v1618, 1.0
        %1669 = vset.pattern.permute.xlu0 0
        %1670 = vperm.xlu0 %1669, %v1667
        %v1671 = vpop.permute.xlu0 %1670
        %v1673 = vrcp.pop %v1671
        %v1674 = vmul.f32 %v1662, %v1673
        %v1675 = vsub.f32 %v1492, 1.0
        %v1676 = vsub.f32 %v1493, 1.0
        %v1677 = vsub.f32 %v1494, 1.0
        %v1678 = vsub.f32 %v1495, 1.0
        %v1679 = vmul.f32 %v1675, 1e+30
        %v1680 = vmul.f32 %v1676, 1e+30
        %v1681 = vmul.f32 %v1677, 1e+30
        %v1682 = vmul.f32 %v1678, 1e+30
        %1684 = vset.pattern.permute.xlu0 0
        %1685 = vperm.xlu0 %1684, %v1679
        %v1686 = vpop.permute.xlu0 %1685
        %1689 = vset.pattern.permute.xlu0 0
        %1690 = vperm.xlu0 %1689, %v1680
        %v1691 = vpop.permute.xlu0 %1690
        %1694 = vset.pattern.permute.xlu0 0
        %1695 = vperm.xlu0 %1694, %v1681
        %v1696 = vpop.permute.xlu0 %1695
        %1699 = vset.pattern.permute.xlu0 0
        %1700 = vperm.xlu0 %1699, %v1682
        %v1701 = vpop.permute.xlu0 %1700
        %v1703 = vadd.f32 %v1544, %v1686
        %v1704 = vadd.f32 %v1545, %v1691
        %v1705 = vadd.f32 %v1546, %v1696
        %v1706 = vadd.f32 %v1547, %v1701
        %vm1707 = vcmp.gt.f32.partialorder %v1618, 0.0
        %v1708 = vsel %vm882, %v1703, -inf
        %v1709 = vsel %vm882, %v1704, -inf
        %v1710 = vmax.f32 %v1708, %v1709
        %v1711 = vrot.slane %v1710, 4
        %v1712 = vmax.f32 %v1710, %v1711
        %v1713 = vrot.slane %v1712, 2
        %v1714 = vmax.f32 %v1712, %v1713
        %v1715 = vrot.slane %v1714, 1
        %v1716 = vmax.f32 %v1714, %v1715
        %v1717 = vsel %vm882, %v1705, -inf
        %v1718 = vsel %vm882, %v1706, -inf
        %v1719 = vmax.f32 %v1717, %v1718
        %v1720 = vrot.slane %v1719, 4
        %v1721 = vmax.f32 %v1719, %v1720
        %v1722 = vrot.slane %v1721, 2
        %v1723 = vmax.f32 %v1721, %v1722
        %v1724 = vrot.slane %v1723, 1
        %v1725 = vmax.f32 %v1723, %v1724
        %v1726 = vsel %vm1707, 1, 0
        %1727 = vset.pattern.permute.xlu0 0
        %1728 = vperm.xlu0 %1727, %v1726
        %v1729 = vpop.permute.xlu0 %1728
        %vm1730 = vcmp.eq.s32.totalorder %v1729, 1
        %vm1733 = vcmask 1041409
        %v1734 = vsel %vm1733, %v1725, %v1716
        %v1736 = vsel %vm1730, %v1734, 0.0
        %v1737 = vadd.f32 %v1736, 0.0
        %v1738 = vadd.f32 %v1674, 0.0
        %1739 = vmatprep.subr.mxu0 0.0
        %1740 = vmatpush1.msra.mxu0 %v1492
        %1741 = vmatprep.subr.mxu0 0.0
        %1742 = vmatpush1.msra.mxu0 %v1493
        %1743 = vmatprep.subr.mxu0 0.0
        %1744 = vmatpush1.msra.mxu0 %v1494
        %1745 = vmatprep.subr.mxu0 0.0
        %1746 = vmatpush1.msra.mxu0 %v1495
        %1747 = vmatprep.subr.mxu0 0.0
        %1748 = vmatpush1.msra.mxu0 0.0
        %1749 = vmatprep.subr.mxu0 0.0
        %1750 = vmatpush1.msra.mxu0 0.0
        %1751 = vmatprep.subr.mxu0 0.0
        %1752 = vmatpush1.msra.mxu0 0.0
        %1753 = vmatprep.subr.mxu0 0.0
        %1754 = vmatpush1.msra.mxu0 0.0
        %1755 = vmatprep.subr.mxu0 0.0
        %1756 = vmatpush1.msra.mxu0 0.0
        %1757 = vmatprep.subr.mxu0 0.0
        %1758 = vmatpush1.msra.mxu0 0.0
        %1759 = vmatprep.subr.mxu0 0.0
        %1760 = vmatpush1.msra.mxu0 0.0
        %1761 = vmatprep.subr.mxu0 0.0
        %1762 = vmatpush1.msra.mxu0 0.0
        %1763 = vmatprep.subr.mxu0 0.0
        %1764 = vmatpush1.msra.mxu0 0.0
        %1765 = vmatprep.subr.mxu0 0.0
        %1766 = vmatpush1.msra.mxu0 0.0
        %1767 = vmatprep.subr.mxu0 0.0
        %1768 = vmatpush1.msra.mxu0 0.0
        %1769 = vmatprep.subr.mxu0 0.0
        %1770 = vmatpush1.msra.mxu0 0.0
        %1771 = vmatprep.subr.mxu0 0.0
        %1772 = vmatpush1.msra.mxu0 0.0
        %1773 = vmatprep.subr.mxu0 0.0
        %1774 = vmatpush1.msra.mxu0 0.0
        %1775 = vmatprep.subr.mxu0 0.0
        %1776 = vmatpush1.msra.mxu0 0.0
        %1777 = vmatprep.subr.mxu0 0.0
        %1778 = vmatpush1.msra.mxu0 0.0
        %1779 = vmatprep.subr.mxu0 0.0
        %1780 = vmatpush1.msra.mxu0 0.0
        %1781 = vmatprep.subr.mxu0 0.0
        %1782 = vmatpush1.msra.mxu0 0.0
        %1783 = vmatprep.subr.mxu0 0.0
        %1784 = vmatpush1.msra.mxu0 0.0
        %1785 = vmatprep.subr.mxu0 0.0
        %1786 = vmatpush1.msra.mxu0 0.0
        %1787 = vmatprep.subr.mxu0 0.0
        %1788 = vmatpush1.msra.mxu0 0.0
        %1789 = vmatprep.subr.mxu0 0.0
        %1790 = vmatpush1.msra.mxu0 0.0
        %1791 = vmatprep.subr.mxu0 0.0
        %1792 = vmatpush1.msra.mxu0 0.0
        %1793 = vmatprep.subr.mxu0 0.0
        %1794 = vmatpush1.msra.mxu0 0.0
        %1795 = vmatprep.subr.mxu0 0.0
        %1796 = vmatpush1.msra.mxu0 0.0
        %1797 = vmatprep.subr.mxu0 0.0
        %1798 = vmatpush1.msra.mxu0 0.0
        %1799 = vmatprep.subr.mxu0 0.0
        %1800 = vmatpush1.msra.mxu0 0.0
        %1801 = vmatprep.subr.mxu0 0.0
        %1802 = vmatpush1.msra.mxu0 0.0
        %1803 = vmatprep.mubr.f32.mxu0 0.0
        %1804 = vmatmul.mubr.f32.gmra.mrb[0].mxu0 %v884
        %v1805 = vpop.f32.mrb[0].mxu0
        %v1806 = vadd.f32 0.0, %v1805
        %v1807 = vpop.f32.mrb[0].mxu0
        %1808 = vmatprep.mubr.f32.mxu0 0.0
        %1809 = vmatmul.mubr.f32.gmra.mrb[0].mxu0 %v887
        %v1810 = vpop.f32.mrb[0].mxu0
        %v1811 = vadd.f32 0.0, %v1810
        %v1812 = vpop.f32.mrb[0].mxu0
        %1813 = vmatprep.mubr.f32.mxu0 0.0
        %1814 = vmatmul.mubr.f32.gmra.mrb[0].mxu0 %v890
        %v1815 = vpop.f32.mrb[0].mxu0
        %v1816 = vadd.f32 0.0, %v1815
        %v1817 = vpop.f32.mrb[0].mxu0
        %1818 = vmatprep.mubr.f32.mxu0 0.0
        %1819 = vmatmul.mubr.f32.gmra.mrb[0].mxu0 %v893
        %v1820 = vpop.f32.mrb[0].mxu0
        %v1821 = vadd.f32 0.0, %v1820
        %v1822 = vpop.f32.mrb[0].mxu0
        %1823 = vdwg.mxu0
        %vm1824 = vcmp.gt.f32.partialorder %v1806, 0.0
        %vm1825 = vcmp.gt.f32.partialorder %v1811, 0.0
        %vm1826 = vcmp.gt.f32.partialorder %v1816, 0.0
        %vm1827 = vcmp.gt.f32.partialorder %v1821, 0.0
        %v1828 = vmax.f32 %v1806, 1e-12
        %v1829 = vmax.f32 %v1811, 1e-12
        %v1830 = vmax.f32 %v1816, 1e-12
        %v1831 = vmax.f32 %v1821, 1e-12
        %v1832 = vrsqrt.pop %v1828
        %v1833 = vrsqrt.pop %v1829
        %v1834 = vrsqrt.pop %v1830
        %v1835 = vrsqrt.pop %v1831
        %v1836 = vsel %vm1824, %v1832, 0.0
        %v1837 = vsel %vm1825, %v1833, 0.0
        %v1838 = vsel %vm1826, %v1834, 0.0
        %v1839 = vsel %vm1827, %v1835, 0.0
        %v1840 = vmul.f32 %v1492, %v1836
        %v1841 = vmul.f32 %v1493, %v1837
        %v1842 = vmul.f32 %v1494, %v1838
        %v1843 = vmul.f32 %v1495, %v1839
        %v1844 = vld [vmem:[%s9] sm:$0xf]
        %v1845 = vld [vmem:[%s9 + $0x4] sm:$0xf]
        %v1846 = vld [vmem:[%s9 + $0x8] sm:$0xf]
        %v1847 = vld [vmem:[%s9 + $0xc] sm:$0xf]
        %v1852 = vunpack.c.l.b16 %v1844
        %v1853 = vunpack.c.l.b16 %v1845
        %v1854 = vunpack.c.l.b16 %v1846
        %v1855 = vunpack.c.l.b16 %v1847
        %v1856 = vpack.c.b16 %v1853, %v1852
        %v1857 = vpack.c.b16 %v1855, %v1854
        %v1861 = vsel %vm882, %v1622, 0
        %v1864 = vsel %vm882, %v1623, 0
        %1866 = vmatprep.subr.bf16.mxu0 0
        %1867 = vmatpush1.bf16.msra.mxu0 %v1856
        %1868 = vmatprep.subr.bf16.mxu0 0
        %1869 = vmatpush1.bf16.msra.mxu0 %v1857
        %1870 = vmatprep.subr.bf16.mxu0 0
        %1871 = vmatpush1.bf16.msra.mxu0 0
        %1872 = vmatprep.subr.bf16.mxu0 0
        %1873 = vmatpush1.bf16.msra.mxu0 0
        %1874 = vmatprep.subr.bf16.mxu0 0
        %1875 = vmatpush1.bf16.msra.mxu0 0
        %1876 = vmatprep.subr.bf16.mxu0 0
        %1877 = vmatpush1.bf16.msra.mxu0 0
        %1878 = vmatprep.subr.bf16.mxu0 0
        %1879 = vmatpush1.bf16.msra.mxu0 0
        %1880 = vmatprep.subr.bf16.mxu0 0
        %1881 = vmatpush1.bf16.msra.mxu0 0
        %1882 = vmatprep.subr.bf16.mxu0 0
        %1883 = vmatpush1.bf16.msra.mxu0 0
        %1884 = vmatprep.subr.bf16.mxu0 0
        %1885 = vmatpush1.bf16.msra.mxu0 0
        %1886 = vmatprep.subr.bf16.mxu0 0
        %1887 = vmatpush1.bf16.msra.mxu0 0
        %1888 = vmatprep.subr.bf16.mxu0 0
        %1889 = vmatpush1.bf16.msra.mxu0 0
        %1890 = vmatprep.subr.bf16.mxu0 0
        %1891 = vmatpush1.bf16.msra.mxu0 0
        %1892 = vmatprep.subr.bf16.mxu0 0
        %1893 = vmatpush1.bf16.msra.mxu0 0
        %1894 = vmatprep.subr.bf16.mxu0 0
        %1895 = vmatpush1.bf16.msra.mxu0 0
        %1896 = vmatprep.subr.bf16.mxu0 0
        %1897 = vmatpush1.bf16.msra.mxu0 0
        %1898 = vmatprep.mubr.bf16.mxu0 0
        %1899 = vmatmul.mubr.bf16.gmra.mrb[0].mxu0 %v1861
        %v1900 = vpop.f32.mrb[0].mxu0
        %v1901 = vadd.f32 0.0, %v1900
        %v1902 = vpop.f32.mrb[0].mxu0
        %v1903 = vpop.f32.mrb[0].mxu0
        %v1904 = vadd.f32 0.0, %v1903
        %v1905 = vpop.f32.mrb[0].mxu0
        %1906 = vmatprep.mubr.bf16.mxu0 0
        %1907 = vmatmul.mubr.bf16.gmra.mrb[0].mxu0 %v1864
        %v1908 = vpop.f32.mrb[0].mxu0
        %v1909 = vadd.f32 0.0, %v1908
        %v1910 = vpop.f32.mrb[0].mxu0
        %v1911 = vpop.f32.mrb[0].mxu0
        %v1912 = vadd.f32 0.0, %v1911
        %v1913 = vpop.f32.mrb[0].mxu0
        %1914 = vdwg.mxu0
        %1916 = vset.pattern.permute.xlu0 0
        %1917 = vperm.xlu0 %1916, %v1840
        %v1918 = vpop.permute.xlu0 %1917
        %1921 = vset.pattern.permute.xlu0 0
        %1922 = vperm.xlu0 %1921, %v1841
        %v1923 = vpop.permute.xlu0 %1922
        %1926 = vset.pattern.permute.xlu0 0
        %1927 = vperm.xlu0 %1926, %v1842
        %v1928 = vpop.permute.xlu0 %1927
        %1931 = vset.pattern.permute.xlu0 0
        %1932 = vperm.xlu0 %1931, %v1843
        %v1933 = vpop.permute.xlu0 %1932
        %v1935 = vmul.f32 %v1918, %v1901
        %v1936 = vmul.f32 %v1923, %v1904
        %v1937 = vmul.f32 %v1928, %v1909
        %v1938 = vmul.f32 %v1933, %v1912
        %v1939 = vpack.c.bf16 %v1936, %v1935
        %v1940 = vpack.c.bf16 %v1938, %v1937
        %1941 = vmatprep.subr.bf16.mxu0 0
        %1942 = vmatpush1.bf16.msra.mxu0 %v1939
        %1943 = vmatprep.subr.bf16.mxu0 0
        %1944 = vmatpush1.bf16.msra.mxu0 %v1940
        %1945 = vmatprep.subr.bf16.mxu0 0
        %1946 = vmatpush1.bf16.msra.mxu0 0
        %1947 = vmatprep.subr.bf16.mxu0 0
        %1948 = vmatpush1.bf16.msra.mxu0 0
        %1949 = vmatprep.subr.bf16.mxu0 0
        %1950 = vmatpush1.bf16.msra.mxu0 0
        %1951 = vmatprep.subr.bf16.mxu0 0
        %1952 = vmatpush1.bf16.msra.mxu0 0
        %1953 = vmatprep.subr.bf16.mxu0 0
        %1954 = vmatpush1.bf16.msra.mxu0 0
        %1955 = vmatprep.subr.bf16.mxu0 0
        %1956 = vmatpush1.bf16.msra.mxu0 0
        %1957 = vmatprep.subr.bf16.mxu0 0
        %1958 = vmatpush1.bf16.msra.mxu0 0
        %1959 = vmatprep.subr.bf16.mxu0 0
        %1960 = vmatpush1.bf16.msra.mxu0 0
        %1961 = vmatprep.subr.bf16.mxu0 0
        %1962 = vmatpush1.bf16.msra.mxu0 0
        %1963 = vmatprep.subr.bf16.mxu0 0
        %1964 = vmatpush1.bf16.msra.mxu0 0
        %1965 = vmatprep.subr.bf16.mxu0 0
        %1966 = vmatpush1.bf16.msra.mxu0 0
        %1967 = vmatprep.subr.bf16.mxu0 0
        %1968 = vmatpush1.bf16.msra.mxu0 0
        %1969 = vmatprep.subr.bf16.mxu0 0
        %1970 = vmatpush1.bf16.msra.mxu0 0
        %1971 = vmatprep.subr.bf16.mxu0 0
        %1972 = vmatpush1.bf16.msra.mxu0 0
        %1973 = vmatprep.mubr.bf16.mxu0 0
        %1974 = vmatmul.mubr.bf16.gmra.mrb[0].mxu0 %v1094
        %v1975 = vpop.f32.mrb[0].mxu0
        %v1976 = vadd.f32 0.0, %v1975
        %v1977 = vpop.f32.mrb[0].mxu0
        %v1978 = vpop.f32.mrb[0].mxu0
        %v1979 = vadd.f32 0.0, %v1978
        %v1980 = vpop.f32.mrb[0].mxu0
        %1981 = vmatprep.mubr.bf16.mxu0 0
        %1982 = vmatmul.mubr.bf16.gmra.mrb[0].mxu0 %v1097
        %v1983 = vpop.f32.mrb[0].mxu0
        %v1984 = vadd.f32 0.0, %v1983
        %v1985 = vpop.f32.mrb[0].mxu0
        %v1986 = vpop.f32.mrb[0].mxu0
        %v1987 = vadd.f32 0.0, %v1986
        %v1988 = vpop.f32.mrb[0].mxu0
        %1989 = vdwg.mxu0
        %v1990 = vmul.f32 %v1918, %v1976
        %v1991 = vmul.f32 %v1923, %v1979
        %v1992 = vmul.f32 %v1928, %v1984
        %v1993 = vmul.f32 %v1933, %v1987
        %v1994 = vld [vmem:[%s10] sm:$0x1]
        %v1996 = vlaneseq
        %v1997 = vshrl.u32 %v1996, 7
        %v1998 = vsub.s32 0, %v1997
        %v1999 = vrot.slane %v1994, %v1998
        %v2001 = vadd.f32 %v1990, %v1999
        %v2002 = vadd.f32 %v1991, %v1999
        %v2003 = vadd.f32 %v1992, %v1999
        %v2004 = vadd.f32 %v1993, %v1999
        %v2005 = vmax.f32 %v2001, 0.0
        %v2006 = vmax.f32 %v2002, 0.0
        %v2007 = vmax.f32 %v2003, 0.0
        %v2008 = vmax.f32 %v2004, 0.0
        %v2009 = vld [vmem:[%s11] sm:$0x1]
        %v2011 = vlaneseq
        %v2012 = vshrl.u32 %v2011, 7
        %v2013 = vsub.s32 0, %v2012
        %v2014 = vrot.slane %v2009, %v2013
        %v2016 = vmul.f32 %v2005, %v2014
        %v2017 = vmul.f32 %v2006, %v2014
        %v2018 = vmul.f32 %v2007, %v2014
        %v2019 = vmul.f32 %v2008, %v2014
        %v2020 = vsel %vm882, %v2016, 0.0
        %2021 = vadd.xlane.f32.xlu0 %v2020
        %v2022 = vpop.xlane.xlu0 %2021
        %v2023 = vsel %vm882, %v2017, 0.0
        %2024 = vadd.xlane.f32.xlu0 %v2023
        %v2025 = vpop.xlane.xlu0 %2024
        %v2026 = vsel %vm882, %v2018, 0.0
        %2027 = vadd.xlane.f32.xlu0 %v2026
        %v2028 = vpop.xlane.xlu0 %2027
        %v2029 = vsel %vm882, %v2019, 0.0
        %2030 = vadd.xlane.f32.xlu0 %v2029
        %v2031 = vpop.xlane.xlu0 %2030
        %v2032 = vmul.f32 %v1840, %v2022
        %v2033 = vmul.f32 %v1841, %v2025
        %v2034 = vmul.f32 %v1842, %v2028
        %v2035 = vmul.f32 %v1843, %v2031
        %2036 = vmatprep.subr.mxu0 0.0
        %2037 = vmatpush1.msra.mxu0 %v2032
        %2038 = vmatprep.subr.mxu0 0.0
        %2039 = vmatpush1.msra.mxu0 %v2033
        %2040 = vmatprep.subr.mxu0 0.0
        %2041 = vmatpush1.msra.mxu0 %v2034
        %2042 = vmatprep.subr.mxu0 0.0
        %2043 = vmatpush1.msra.mxu0 %v2035
        %2044 = vmatprep.subr.mxu0 0.0
        %2045 = vmatpush1.msra.mxu0 0.0
        %2046 = vmatprep.subr.mxu0 0.0
        %2047 = vmatpush1.msra.mxu0 0.0
        %2048 = vmatprep.subr.mxu0 0.0
        %2049 = vmatpush1.msra.mxu0 0.0
        %2050 = vmatprep.subr.mxu0 0.0
        %2051 = vmatpush1.msra.mxu0 0.0
        %2052 = vmatprep.subr.mxu0 0.0
        %2053 = vmatpush1.msra.mxu0 0.0
        %2054 = vmatprep.subr.mxu0 0.0
        %2055 = vmatpush1.msra.mxu0 0.0
        %2056 = vmatprep.subr.mxu0 0.0
        %2057 = vmatpush1.msra.mxu0 0.0
        %2058 = vmatprep.subr.mxu0 0.0
        %2059 = vmatpush1.msra.mxu0 0.0
        %2060 = vmatprep.subr.mxu0 0.0
        %2061 = vmatpush1.msra.mxu0 0.0
        %2062 = vmatprep.subr.mxu0 0.0
        %2063 = vmatpush1.msra.mxu0 0.0
        %2064 = vmatprep.subr.mxu0 0.0
        %2065 = vmatpush1.msra.mxu0 0.0
        %2066 = vmatprep.subr.mxu0 0.0
        %2067 = vmatpush1.msra.mxu0 0.0
        %2068 = vmatprep.subr.mxu0 0.0
        %2069 = vmatpush1.msra.mxu0 0.0
        %2070 = vmatprep.subr.mxu0 0.0
        %2071 = vmatpush1.msra.mxu0 0.0
        %2072 = vmatprep.subr.mxu0 0.0
        %2073 = vmatpush1.msra.mxu0 0.0
        %2074 = vmatprep.subr.mxu0 0.0
        %2075 = vmatpush1.msra.mxu0 0.0
        %2076 = vmatprep.subr.mxu0 0.0
        %2077 = vmatpush1.msra.mxu0 0.0
        %2078 = vmatprep.subr.mxu0 0.0
        %2079 = vmatpush1.msra.mxu0 0.0
        %2080 = vmatprep.subr.mxu0 0.0
        %2081 = vmatpush1.msra.mxu0 0.0
        %2082 = vmatprep.subr.mxu0 0.0
        %2083 = vmatpush1.msra.mxu0 0.0
        %2084 = vmatprep.subr.mxu0 0.0
        %2085 = vmatpush1.msra.mxu0 0.0
        %2086 = vmatprep.subr.mxu0 0.0
        %2087 = vmatpush1.msra.mxu0 0.0
        %2088 = vmatprep.subr.mxu0 0.0
        %2089 = vmatpush1.msra.mxu0 0.0
        %2090 = vmatprep.subr.mxu0 0.0
        %2091 = vmatpush1.msra.mxu0 0.0
        %2092 = vmatprep.subr.mxu0 0.0
        %2093 = vmatpush1.msra.mxu0 0.0
        %2094 = vmatprep.subr.mxu0 0.0
        %2095 = vmatpush1.msra.mxu0 0.0
        %2096 = vmatprep.subr.mxu0 0.0
        %2097 = vmatpush1.msra.mxu0 0.0
        %2098 = vmatprep.subr.mxu0 0.0
        %2099 = vmatpush1.msra.mxu0 0.0
        %2100 = vmatprep.mubr.f32.mxu0 0.0
        %2101 = vmatmul.mubr.f32.gmra.mrb[0].mxu0 %v884
        %v2102 = vpop.f32.mrb[0].mxu0
        %v2103 = vadd.f32 0.0, %v2102
        %v2104 = vpop.f32.mrb[0].mxu0
        %2105 = vmatprep.mubr.f32.mxu0 0.0
        %2106 = vmatmul.mubr.f32.gmra.mrb[0].mxu0 %v887
        %v2107 = vpop.f32.mrb[0].mxu0
        %v2108 = vadd.f32 0.0, %v2107
        %v2109 = vpop.f32.mrb[0].mxu0
        %2110 = vmatprep.mubr.f32.mxu0 0.0
        %2111 = vmatmul.mubr.f32.gmra.mrb[0].mxu0 %v890
        %v2112 = vpop.f32.mrb[0].mxu0
        %v2113 = vadd.f32 0.0, %v2112
        %v2114 = vpop.f32.mrb[0].mxu0
        %2115 = vmatprep.mubr.f32.mxu0 0.0
        %2116 = vmatmul.mubr.f32.gmra.mrb[0].mxu0 %v893
        %v2117 = vpop.f32.mrb[0].mxu0
        %v2118 = vadd.f32 0.0, %v2117
        %v2119 = vpop.f32.mrb[0].mxu0
        %2120 = vdwg.mxu0
        %v2121 = vmul.f32 %v1840, %v2103
        %v2122 = vmul.f32 %v1841, %v2108
        %v2123 = vmul.f32 %v1842, %v2113
        %v2124 = vmul.f32 %v1843, %v2118
        %s2125 = sld [smem:[#allocation3]]
        %v2126 = vstv %s2125
        %v2127 = vadd.f32 %v2121, %v2126
        %v2128 = vadd.f32 %v2122, %v2126
        %v2129 = vadd.f32 %v2123, %v2126
        %v2130 = vadd.f32 %v2124, %v2126
        %vm2131 = vcmp.gt.f32.partialorder %v1492, 0.0
        %vm2132 = vcmp.gt.f32.partialorder %v1493, 0.0
        %vm2133 = vcmp.gt.f32.partialorder %v1494, 0.0
        %vm2134 = vcmp.gt.f32.partialorder %v1495, 0.0
        %v2135 = vsel %vm2131, %v2127, -1e+30
        %v2136 = vsel %vm2132, %v2128, -1e+30
        %v2137 = vsel %vm2133, %v2129, -1e+30
        %v2138 = vsel %vm2134, %v2130, -1e+30
        %2140 = vset.pattern.permute.xlu0 0
        %2141 = vperm.xlu0 %2140, %v2135
        %v2142 = vpop.permute.xlu0 %2141
        %2145 = vset.pattern.permute.xlu0 0
        %2146 = vperm.xlu0 %2145, %v2136
        %v2147 = vpop.permute.xlu0 %2146
        %2150 = vset.pattern.permute.xlu0 0
        %2151 = vperm.xlu0 %2150, %v2137
        %v2152 = vpop.permute.xlu0 %2151
        %2155 = vset.pattern.permute.xlu0 0
        %2156 = vperm.xlu0 %2155, %v2138
        %v2157 = vpop.permute.xlu0 %2156
        %v2159 = vmul.f32 %v826, %v2142
        %v2160 = vmul.f32 %v827, %v2147
        %v2161 = vmul.f32 %v828, %v2152
        %v2162 = vmul.f32 %v829, %v2157
        %v2163 = vsel %vm882, %v2159, 0.0
        %v2164 = vsel %vm882, %v2160, 0.0
        %v2165 = vadd.f32 %v2163, %v2164
        %v2166 = vsel %vm882, %v2161, 0.0
        %v2167 = vadd.f32 %v2165, %v2166
        %v2168 = vsel %vm882, %v2162, 0.0
        %v2169 = vadd.f32 %v2167, %v2168
        %v2170 = vrot.slane %v2169, 4
        %v2171 = vadd.f32 %v2169, %v2170
        %v2172 = vrot.slane %v2171, 2
        %v2173 = vadd.f32 %v2171, %v2172
        %v2174 = vrot.slane %v2173, 1
        %v2175 = vadd.f32 %v2173, %v2174
        %vm2176 = vcmp.gt.f32.partialorder %v2175, %v2142
        %vm2177 = vcmp.gt.f32.partialorder %v2175, %v2147
        %vm2178 = vcmp.gt.f32.partialorder %v2175, %v2152
        %vm2179 = vcmp.gt.f32.partialorder %v2175, %v2157
        %vm2180 = vcmp.eq.f32.partialorder %v2175, %v2142
        %vm2181 = vcmp.eq.f32.partialorder %v2175, %v2147
        %vm2182 = vcmp.eq.f32.partialorder %v2175, %v2152
        %vm2183 = vcmp.eq.f32.partialorder %v2175, %v2157
        %vm2184 = vmand %vm2180, %vm1339
        %vm2185 = vmand %vm2181, %vm1340
        %vm2186 = vmand %vm2182, %vm1341
        %vm2187 = vmand %vm2183, %vm1342
        %vm2188 = vmor %vm2176, %vm2184
        %vm2189 = vmor %vm2177, %vm2185
        %vm2190 = vmor %vm2178, %vm2186
        %vm2191 = vmor %vm2179, %vm2187
        %v2192 = vsel %vm2188, 1, 0
        %v2193 = vsel %vm2189, 1, 0
        %v2194 = vsel %vm2190, 1, 0
        %v2195 = vsel %vm2191, 1, 0
        %v2196 = vcvt.s32.f32 %v2192
        %v2197 = vcvt.s32.f32 %v2193
        %v2198 = vcvt.s32.f32 %v2194
        %v2199 = vcvt.s32.f32 %v2195
        %v2200 = vmul.f32 %v873, %v2196
        %v2201 = vmul.f32 %v874, %v2197
        %v2202 = vmul.f32 %v875, %v2198
        %v2203 = vmul.f32 %v876, %v2199
        %v2204 = vsel %vm882, %v2200, 0.0
        %2205 = vadd.xlane.f32.xlu0 %v2204
        %v2206 = vpop.xlane.xlu0 %2205
        %v2207 = vsel %vm882, %v2201, 0.0
        %2208 = vadd.xlane.f32.xlu0 %v2207
        %v2209 = vpop.xlane.xlu0 %2208
        %v2210 = vsel %vm882, %v2202, 0.0
        %2211 = vadd.xlane.f32.xlu0 %v2210
        %v2212 = vpop.xlane.xlu0 %2211
        %v2213 = vsel %vm882, %v2203, 0.0
        %2214 = vadd.xlane.f32.xlu0 %v2213
        %v2215 = vpop.xlane.xlu0 %2214
        %2216 = vmatprep.subr.mxu0 0.0
        %2217 = vmatpush1.msra.mxu0 %v1492
        %2218 = vmatprep.subr.mxu0 0.0
        %2219 = vmatpush1.msra.mxu0 %v1493
        %2220 = vmatprep.subr.mxu0 0.0
        %2221 = vmatpush1.msra.mxu0 %v1494
        %2222 = vmatprep.subr.mxu0 0.0
        %2223 = vmatpush1.msra.mxu0 %v1495
        %2224 = vmatprep.subr.mxu0 0.0
        %2225 = vmatpush1.msra.mxu0 0.0
        %2226 = vmatprep.subr.mxu0 0.0
        %2227 = vmatpush1.msra.mxu0 0.0
        %2228 = vmatprep.subr.mxu0 0.0
        %2229 = vmatpush1.msra.mxu0 0.0
        %2230 = vmatprep.subr.mxu0 0.0
        %2231 = vmatpush1.msra.mxu0 0.0
        %2232 = vmatprep.subr.mxu0 0.0
        %2233 = vmatpush1.msra.mxu0 0.0
        %2234 = vmatprep.subr.mxu0 0.0
        %2235 = vmatpush1.msra.mxu0 0.0
        %2236 = vmatprep.subr.mxu0 0.0
        %2237 = vmatpush1.msra.mxu0 0.0
        %2238 = vmatprep.subr.mxu0 0.0
        %2239 = vmatpush1.msra.mxu0 0.0
        %2240 = vmatprep.subr.mxu0 0.0
        %2241 = vmatpush1.msra.mxu0 0.0
        %2242 = vmatprep.subr.mxu0 0.0
        %2243 = vmatpush1.msra.mxu0 0.0
        %2244 = vmatprep.subr.mxu0 0.0
        %2245 = vmatpush1.msra.mxu0 0.0
        %2246 = vmatprep.subr.mxu0 0.0
        %2247 = vmatpush1.msra.mxu0 0.0
        %2248 = vmatprep.subr.mxu0 0.0
        %2249 = vmatpush1.msra.mxu0 0.0
        %2250 = vmatprep.subr.mxu0 0.0
        %2251 = vmatpush1.msra.mxu0 0.0
        %2252 = vmatprep.subr.mxu0 0.0
        %2253 = vmatpush1.msra.mxu0 0.0
        %2254 = vmatprep.subr.mxu0 0.0
        %2255 = vmatpush1.msra.mxu0 0.0
        %2256 = vmatprep.subr.mxu0 0.0
        %2257 = vmatpush1.msra.mxu0 0.0
        %2258 = vmatprep.subr.mxu0 0.0
        %2259 = vmatpush1.msra.mxu0 0.0
        %2260 = vmatprep.subr.mxu0 0.0
        %2261 = vmatpush1.msra.mxu0 0.0
        %2262 = vmatprep.subr.mxu0 0.0
        %2263 = vmatpush1.msra.mxu0 0.0
        %2264 = vmatprep.subr.mxu0 0.0
        %2265 = vmatpush1.msra.mxu0 0.0
        %2266 = vmatprep.subr.mxu0 0.0
        %2267 = vmatpush1.msra.mxu0 0.0
        %2268 = vmatprep.subr.mxu0 0.0
        %2269 = vmatpush1.msra.mxu0 0.0
        %2270 = vmatprep.subr.mxu0 0.0
        %2271 = vmatpush1.msra.mxu0 0.0
        %2272 = vmatprep.subr.mxu0 0.0
        %2273 = vmatpush1.msra.mxu0 0.0
        %2274 = vmatprep.subr.mxu0 0.0
        %2275 = vmatpush1.msra.mxu0 0.0
        %2276 = vmatprep.subr.mxu0 0.0
        %2277 = vmatpush1.msra.mxu0 0.0
        %2278 = vmatprep.subr.mxu0 0.0
        %2279 = vmatpush1.msra.mxu0 0.0
        %2280 = vmatprep.mubr.f32.mxu0 0.0
        %2281 = vmatmul.mubr.f32.gmra.mrb[0].mxu0 %v1376
        %v2282 = vpop.f32.mrb[0].mxu0
        %v2283 = vadd.f32 0.0, %v2282
        %v2284 = vpop.f32.mrb[0].mxu0
        %2285 = vmatprep.mubr.f32.mxu0 0.0
        %2286 = vmatmul.mubr.f32.gmra.mrb[0].mxu0 %v1379
        %v2287 = vpop.f32.mrb[0].mxu0
        %v2288 = vadd.f32 0.0, %v2287
        %v2289 = vpop.f32.mrb[0].mxu0
        %2290 = vmatprep.mubr.f32.mxu0 0.0
        %2291 = vmatmul.mubr.f32.gmra.mrb[0].mxu0 %v1382
        %v2292 = vpop.f32.mrb[0].mxu0
        %v2293 = vadd.f32 0.0, %v2292
        %v2294 = vpop.f32.mrb[0].mxu0
        %2295 = vmatprep.mubr.f32.mxu0 0.0
        %2296 = vmatmul.mubr.f32.gmra.mrb[0].mxu0 %v1385
        %v2297 = vpop.f32.mrb[0].mxu0
        %v2298 = vadd.f32 0.0, %v2297
        %v2299 = vpop.f32.mrb[0].mxu0
        %2300 = vdwg.mxu0
        %v2301 = vmul.f32 %v2283, 0.5
        %v2302 = vmul.f32 %v2288, 0.5
        %v2303 = vmul.f32 %v2293, 0.5
        %v2304 = vmul.f32 %v2298, 0.5
        %v2305 = vceil.f32 %v2301
        %v2306 = vceil.f32 %v2302
        %v2307 = vceil.f32 %v2303
        %v2308 = vceil.f32 %v2304
        %vm2309 = vcmp.lt.f32.partialorder %v2206, %v2305
        %vm2310 = vcmp.lt.f32.partialorder %v2209, %v2306
        %vm2311 = vcmp.lt.f32.partialorder %v2212, %v2307
        %vm2312 = vcmp.lt.f32.partialorder %v2215, %v2308
        %vm2313 = vmand %vm2131, %vm2309
        %vm2314 = vmand %vm2132, %vm2310
        %vm2315 = vmand %vm2133, %vm2311
        %vm2316 = vmand %vm2134, %vm2312
        %v2317 = vsel %vm2313, 1, 0
        %v2318 = vsel %vm2314, 1, 0
        %v2319 = vsel %vm2315, 1, 0
        %v2320 = vsel %vm2316, 1, 0
        %v2321 = vcvt.s32.f32 %v2317
        %v2322 = vcvt.s32.f32 %v2318
        %v2323 = vcvt.s32.f32 %v2319
        %v2324 = vcvt.s32.f32 %v2320
        %v2325 = vtanh.pop %v2127
        %v2326 = vtanh.pop %v2128
        %v2327 = vtanh.pop %v2129
        %v2328 = vtanh.pop %v2130
        %2330 = vset.pattern.permute.xlu0 0
        %2331 = vperm.xlu0 %2330, %v2325
        %v2332 = vpop.permute.xlu0 %2331
        %2335 = vset.pattern.permute.xlu0 0
        %2336 = vperm.xlu0 %2335, %v2326
        %v2337 = vpop.permute.xlu0 %2336
        %2340 = vset.pattern.permute.xlu0 0
        %2341 = vperm.xlu0 %2340, %v2327
        %v2342 = vpop.permute.xlu0 %2341
        %2345 = vset.pattern.permute.xlu0 0
        %2346 = vperm.xlu0 %2345, %v2328
        %v2347 = vpop.permute.xlu0 %2346
        %v2349 = vmul.f32 %v2005, %v2332
        %v2350 = vmul.f32 %v2006, %v2337
        %v2351 = vmul.f32 %v2007, %v2342
        %v2352 = vmul.f32 %v2008, %v2347
        %2354 = vset.pattern.permute.xlu0 0
        %2355 = vperm.xlu0 %2354, %v2321
        %v2356 = vpop.permute.xlu0 %2355
        %2359 = vset.pattern.permute.xlu0 0
        %2360 = vperm.xlu0 %2359, %v2322
        %v2361 = vpop.permute.xlu0 %2360
        %2364 = vset.pattern.permute.xlu0 0
        %2365 = vperm.xlu0 %2364, %v2323
        %v2366 = vpop.permute.xlu0 %2365
        %2369 = vset.pattern.permute.xlu0 0
        %2370 = vperm.xlu0 %2369, %v2324
        %v2371 = vpop.permute.xlu0 %2370
        %v2373 = vmul.f32 %v2349, %v2356
        %v2374 = vmul.f32 %v2350, %v2361
        %v2375 = vmul.f32 %v2351, %v2366
        %v2376 = vmul.f32 %v2352, %v2371
        %2377 = vmatprep.subr.mxu0 0.0
        %2378 = vmatpush1.msra.mxu0 %v2321
        %2379 = vmatprep.subr.mxu0 0.0
        %2380 = vmatpush1.msra.mxu0 %v2322
        %2381 = vmatprep.subr.mxu0 0.0
        %2382 = vmatpush1.msra.mxu0 %v2323
        %2383 = vmatprep.subr.mxu0 0.0
        %2384 = vmatpush1.msra.mxu0 %v2324
        %2385 = vmatprep.subr.mxu0 0.0
        %2386 = vmatpush1.msra.mxu0 0.0
        %2387 = vmatprep.subr.mxu0 0.0
        %2388 = vmatpush1.msra.mxu0 0.0
        %2389 = vmatprep.subr.mxu0 0.0
        %2390 = vmatpush1.msra.mxu0 0.0
        %2391 = vmatprep.subr.mxu0 0.0
        %2392 = vmatpush1.msra.mxu0 0.0
        %2393 = vmatprep.subr.mxu0 0.0
        %2394 = vmatpush1.msra.mxu0 0.0
        %2395 = vmatprep.subr.mxu0 0.0
        %2396 = vmatpush1.msra.mxu0 0.0
        %2397 = vmatprep.subr.mxu0 0.0
        %2398 = vmatpush1.msra.mxu0 0.0
        %2399 = vmatprep.subr.mxu0 0.0
        %2400 = vmatpush1.msra.mxu0 0.0
        %2401 = vmatprep.subr.mxu0 0.0
        %2402 = vmatpush1.msra.mxu0 0.0
        %2403 = vmatprep.subr.mxu0 0.0
        %2404 = vmatpush1.msra.mxu0 0.0
        %2405 = vmatprep.subr.mxu0 0.0
        %2406 = vmatpush1.msra.mxu0 0.0
        %2407 = vmatprep.subr.mxu0 0.0
        %2408 = vmatpush1.msra.mxu0 0.0
        %2409 = vmatprep.subr.mxu0 0.0
        %2410 = vmatpush1.msra.mxu0 0.0
        %2411 = vmatprep.subr.mxu0 0.0
        %2412 = vmatpush1.msra.mxu0 0.0
        %2413 = vmatprep.subr.mxu0 0.0
        %2414 = vmatpush1.msra.mxu0 0.0
        %2415 = vmatprep.subr.mxu0 0.0
        %2416 = vmatpush1.msra.mxu0 0.0
        %2417 = vmatprep.subr.mxu0 0.0
        %2418 = vmatpush1.msra.mxu0 0.0
        %2419 = vmatprep.subr.mxu0 0.0
        %2420 = vmatpush1.msra.mxu0 0.0
        %2421 = vmatprep.subr.mxu0 0.0
        %2422 = vmatpush1.msra.mxu0 0.0
        %2423 = vmatprep.subr.mxu0 0.0
        %2424 = vmatpush1.msra.mxu0 0.0
        %2425 = vmatprep.subr.mxu0 0.0
        %2426 = vmatpush1.msra.mxu0 0.0
        %2427 = vmatprep.subr.mxu0 0.0
        %2428 = vmatpush1.msra.mxu0 0.0
        %2429 = vmatprep.subr.mxu0 0.0
        %2430 = vmatpush1.msra.mxu0 0.0
        %2431 = vmatprep.subr.mxu0 0.0
        %2432 = vmatpush1.msra.mxu0 0.0
        %2433 = vmatprep.subr.mxu0 0.0
        %2434 = vmatpush1.msra.mxu0 0.0
        %2435 = vmatprep.subr.mxu0 0.0
        %2436 = vmatpush1.msra.mxu0 0.0
        %2437 = vmatprep.subr.mxu0 0.0
        %2438 = vmatpush1.msra.mxu0 0.0
        %2439 = vmatprep.subr.mxu0 0.0
        %2440 = vmatpush1.msra.mxu0 0.0
        %2441 = vmatprep.mubr.f32.mxu0 0.0
        %2442 = vmatmul.mubr.f32.gmra.mrb[0].mxu0 %v1549
        %v2443 = vpop.f32.mrb[0].mxu0
        %v2444 = vadd.f32 0.0, %v2443
        %v2445 = vpop.f32.mrb[0].mxu0
        %2446 = vdwg.mxu0
        %v2447 = vpack.c.bf16 %v2374, %v2373
        %v2448 = vpack.c.bf16 %v2376, %v2375
        %2449 = vmatprep.subr.bf16.mxu0 0
        %2450 = vmatpush1.bf16.msra.mxu0 %v2447
        %2451 = vmatprep.subr.bf16.mxu0 0
        %2452 = vmatpush1.bf16.msra.mxu0 %v2448
        %2453 = vmatprep.subr.bf16.mxu0 0
        %2454 = vmatpush1.bf16.msra.mxu0 0
        %2455 = vmatprep.subr.bf16.mxu0 0
        %2456 = vmatpush1.bf16.msra.mxu0 0
        %2457 = vmatprep.subr.bf16.mxu0 0
        %2458 = vmatpush1.bf16.msra.mxu0 0
        %2459 = vmatprep.subr.bf16.mxu0 0
        %2460 = vmatpush1.bf16.msra.mxu0 0
        %2461 = vmatprep.subr.bf16.mxu0 0
        %2462 = vmatpush1.bf16.msra.mxu0 0
        %2463 = vmatprep.subr.bf16.mxu0 0
        %2464 = vmatpush1.bf16.msra.mxu0 0
        %2465 = vmatprep.subr.bf16.mxu0 0
        %2466 = vmatpush1.bf16.msra.mxu0 0
        %2467 = vmatprep.subr.bf16.mxu0 0
        %2468 = vmatpush1.bf16.msra.mxu0 0
        %2469 = vmatprep.subr.bf16.mxu0 0
        %2470 = vmatpush1.bf16.msra.mxu0 0
        %2471 = vmatprep.subr.bf16.mxu0 0
        %2472 = vmatpush1.bf16.msra.mxu0 0
        %2473 = vmatprep.subr.bf16.mxu0 0
        %2474 = vmatpush1.bf16.msra.mxu0 0
        %2475 = vmatprep.subr.bf16.mxu0 0
        %2476 = vmatpush1.bf16.msra.mxu0 0
        %2477 = vmatprep.subr.bf16.mxu0 0
        %2478 = vmatpush1.bf16.msra.mxu0 0
        %2479 = vmatprep.subr.bf16.mxu0 0
        %2480 = vmatpush1.bf16.msra.mxu0 0
        %2481 = vmatprep.mubr.bf16.mxu0 0
        %2482 = vmatmul.mubr.bf16.gmra.mrb[0].mxu0 %v1625
        %v2483 = vpop.f32.mrb[0].mxu0
        %v2484 = vadd.f32 0.0, %v2483
        %v2485 = vpop.f32.mrb[0].mxu0
        %v2486 = vpop.f32.mrb[0].mxu0
        %v2487 = vpop.f32.mrb[0].mxu0
        %2488 = vdwg.mxu0
        %v2489 = vmax.f32 %v2444, 1.0
        %2491 = vset.pattern.permute.xlu0 0
        %2492 = vperm.xlu0 %2491, %v2489
        %v2493 = vpop.permute.xlu0 %2492
        %v2495 = vrcp.pop %v2493
        %v2496 = vmul.f32 %v2484, %v2495
        %v2497 = vsub.f32 %v2321, 1.0
        %v2498 = vsub.f32 %v2322, 1.0
        %v2499 = vsub.f32 %v2323, 1.0
        %v2500 = vsub.f32 %v2324, 1.0
        %v2501 = vmul.f32 %v2497, 1e+30
        %v2502 = vmul.f32 %v2498, 1e+30
        %v2503 = vmul.f32 %v2499, 1e+30
        %v2504 = vmul.f32 %v2500, 1e+30
        %2506 = vset.pattern.permute.xlu0 0
        %2507 = vperm.xlu0 %2506, %v2501
        %v2508 = vpop.permute.xlu0 %2507
        %2511 = vset.pattern.permute.xlu0 0
        %2512 = vperm.xlu0 %2511, %v2502
        %v2513 = vpop.permute.xlu0 %2512
        %2516 = vset.pattern.permute.xlu0 0
        %2517 = vperm.xlu0 %2516, %v2503
        %v2518 = vpop.permute.xlu0 %2517
        %2521 = vset.pattern.permute.xlu0 0
        %2522 = vperm.xlu0 %2521, %v2504
        %v2523 = vpop.permute.xlu0 %2522
        %v2525 = vadd.f32 %v2373, %v2508
        %v2526 = vadd.f32 %v2374, %v2513
        %v2527 = vadd.f32 %v2375, %v2518
        %v2528 = vadd.f32 %v2376, %v2523
        %vm2529 = vcmp.gt.f32.partialorder %v2444, 0.0
        %v2530 = vsel %vm882, %v2525, -inf
        %v2531 = vsel %vm882, %v2526, -inf
        %v2532 = vmax.f32 %v2530, %v2531
        %v2533 = vrot.slane %v2532, 4
        %v2534 = vmax.f32 %v2532, %v2533
        %v2535 = vrot.slane %v2534, 2
        %v2536 = vmax.f32 %v2534, %v2535
        %v2537 = vrot.slane %v2536, 1
        %v2538 = vmax.f32 %v2536, %v2537
        %v2539 = vsel %vm882, %v2527, -inf
        %v2540 = vsel %vm882, %v2528, -inf
        %v2541 = vmax.f32 %v2539, %v2540
        %v2542 = vrot.slane %v2541, 4
        %v2543 = vmax.f32 %v2541, %v2542
        %v2544 = vrot.slane %v2543, 2
        %v2545 = vmax.f32 %v2543, %v2544
        %v2546 = vrot.slane %v2545, 1
        %v2547 = vmax.f32 %v2545, %v2546
        %v2548 = vsel %vm2529, 1, 0
        %2549 = vset.pattern.permute.xlu0 0
        %2550 = vperm.xlu0 %2549, %v2548
        %v2551 = vpop.permute.xlu0 %2550
        %vm2552 = vcmp.eq.s32.totalorder %v2551, 1
        %v2555 = vsel %vm1733, %v2547, %v2538
        %v2557 = vsel %vm2552, %v2555, 0.0
        %v2558 = vadd.f32 %v1737, %v2557
        %v2559 = vadd.f32 %v1738, %v2496
        %2560 = vmatprep.subr.mxu0 0.0
        %2561 = vmatpush1.msra.mxu0 %v2321
        %2562 = vmatprep.subr.mxu0 0.0
        %2563 = vmatpush1.msra.mxu0 %v2322
        %2564 = vmatprep.subr.mxu0 0.0
        %2565 = vmatpush1.msra.mxu0 %v2323
        %2566 = vmatprep.subr.mxu0 0.0
        %2567 = vmatpush1.msra.mxu0 %v2324
        %2568 = vmatprep.subr.mxu0 0.0
        %2569 = vmatpush1.msra.mxu0 0.0
        %2570 = vmatprep.subr.mxu0 0.0
        %2571 = vmatpush1.msra.mxu0 0.0
        %2572 = vmatprep.subr.mxu0 0.0
        %2573 = vmatpush1.msra.mxu0 0.0
        %2574 = vmatprep.subr.mxu0 0.0
        %2575 = vmatpush1.msra.mxu0 0.0
        %2576 = vmatprep.subr.mxu0 0.0
        %2577 = vmatpush1.msra.mxu0 0.0
        %2578 = vmatprep.subr.mxu0 0.0
        %2579 = vmatpush1.msra.mxu0 0.0
        %2580 = vmatprep.subr.mxu0 0.0
        %2581 = vmatpush1.msra.mxu0 0.0
        %2582 = vmatprep.subr.mxu0 0.0
        %2583 = vmatpush1.msra.mxu0 0.0
        %2584 = vmatprep.subr.mxu0 0.0
        %2585 = vmatpush1.msra.mxu0 0.0
        %2586 = vmatprep.subr.mxu0 0.0
        %2587 = vmatpush1.msra.mxu0 0.0
        %2588 = vmatprep.subr.mxu0 0.0
        %2589 = vmatpush1.msra.mxu0 0.0
        %2590 = vmatprep.subr.mxu0 0.0
        %2591 = vmatpush1.msra.mxu0 0.0
        %2592 = vmatprep.subr.mxu0 0.0
        %2593 = vmatpush1.msra.mxu0 0.0
        %2594 = vmatprep.subr.mxu0 0.0
        %2595 = vmatpush1.msra.mxu0 0.0
        %2596 = vmatprep.subr.mxu0 0.0
        %2597 = vmatpush1.msra.mxu0 0.0
        %2598 = vmatprep.subr.mxu0 0.0
        %2599 = vmatpush1.msra.mxu0 0.0
        %2600 = vmatprep.subr.mxu0 0.0
        %2601 = vmatpush1.msra.mxu0 0.0
        %2602 = vmatprep.subr.mxu0 0.0
        %2603 = vmatpush1.msra.mxu0 0.0
        %2604 = vmatprep.subr.mxu0 0.0
        %2605 = vmatpush1.msra.mxu0 0.0
        %2606 = vmatprep.subr.mxu0 0.0
        %2607 = vmatpush1.msra.mxu0 0.0
        %2608 = vmatprep.subr.mxu0 0.0
        %2609 = vmatpush1.msra.mxu0 0.0
        %2610 = vmatprep.subr.mxu0 0.0
        %2611 = vmatpush1.msra.mxu0 0.0
        %2612 = vmatprep.subr.mxu0 0.0
        %2613 = vmatpush1.msra.mxu0 0.0
        %2614 = vmatprep.subr.mxu0 0.0
        %2615 = vmatpush1.msra.mxu0 0.0
        %2616 = vmatprep.subr.mxu0 0.0
        %2617 = vmatpush1.msra.mxu0 0.0
        %2618 = vmatprep.subr.mxu0 0.0
        %2619 = vmatpush1.msra.mxu0 0.0
        %2620 = vmatprep.subr.mxu0 0.0
        %2621 = vmatpush1.msra.mxu0 0.0
        %2622 = vmatprep.subr.mxu0 0.0
        %2623 = vmatpush1.msra.mxu0 0.0
        %2624 = vmatprep.mubr.f32.mxu0 0.0
        %2625 = vmatmul.mubr.f32.gmra.mrb[0].mxu0 %v884
        %v2626 = vpop.f32.mrb[0].mxu0
        %v2627 = vadd.f32 0.0, %v2626
        %v2628 = vpop.f32.mrb[0].mxu0
        %2629 = vmatprep.mubr.f32.mxu0 0.0
        %2630 = vmatmul.mubr.f32.gmra.mrb[0].mxu0 %v887
        %v2631 = vpop.f32.mrb[0].mxu0
        %v2632 = vadd.f32 0.0, %v2631
        %v2633 = vpop.f32.mrb[0].mxu0
        %2634 = vmatprep.mubr.f32.mxu0 0.0
        %2635 = vmatmul.mubr.f32.gmra.mrb[0].mxu0 %v890
        %v2636 = vpop.f32.mrb[0].mxu0
        %v2637 = vadd.f32 0.0, %v2636
        %v2638 = vpop.f32.mrb[0].mxu0
        %2639 = vmatprep.mubr.f32.mxu0 0.0
        %2640 = vmatmul.mubr.f32.gmra.mrb[0].mxu0 %v893
        %v2641 = vpop.f32.mrb[0].mxu0
        %v2642 = vadd.f32 0.0, %v2641
        %v2643 = vpop.f32.mrb[0].mxu0
        %2644 = vdwg.mxu0
        %vm2645 = vcmp.gt.f32.partialorder %v2627, 0.0
        %vm2646 = vcmp.gt.f32.partialorder %v2632, 0.0
        %vm2647 = vcmp.gt.f32.partialorder %v2637, 0.0
        %vm2648 = vcmp.gt.f32.partialorder %v2642, 0.0
        %v2649 = vmax.f32 %v2627, 1e-12
        %v2650 = vmax.f32 %v2632, 1e-12
        %v2651 = vmax.f32 %v2637, 1e-12
        %v2652 = vmax.f32 %v2642, 1e-12
        %v2653 = vrsqrt.pop %v2649
        %v2654 = vrsqrt.pop %v2650
        %v2655 = vrsqrt.pop %v2651
        %v2656 = vrsqrt.pop %v2652
        %v2657 = vsel %vm2645, %v2653, 0.0
        %v2658 = vsel %vm2646, %v2654, 0.0
        %v2659 = vsel %vm2647, %v2655, 0.0
        %v2660 = vsel %vm2648, %v2656, 0.0
        %v2661 = vmul.f32 %v2321, %v2657
        %v2662 = vmul.f32 %v2322, %v2658
        %v2663 = vmul.f32 %v2323, %v2659
        %v2664 = vmul.f32 %v2324, %v2660
        %v2665 = vld [vmem:[%s13] sm:$0xf]
        %v2666 = vld [vmem:[%s13 + $0x4] sm:$0xf]
        %v2667 = vld [vmem:[%s13 + $0x8] sm:$0xf]
        %v2668 = vld [vmem:[%s13 + $0xc] sm:$0xf]
        %v2673 = vunpack.c.l.b16 %v2665
        %v2674 = vunpack.c.l.b16 %v2666
        %v2675 = vunpack.c.l.b16 %v2667
        %v2676 = vunpack.c.l.b16 %v2668
        %v2677 = vpack.c.b16 %v2674, %v2673
        %v2678 = vpack.c.b16 %v2676, %v2675
        %v2682 = vsel %vm882, %v2447, 0
        %v2685 = vsel %vm882, %v2448, 0
        %2687 = vmatprep.subr.bf16.mxu0 0
        %2688 = vmatpush1.bf16.msra.mxu0 %v2677
        %2689 = vmatprep.subr.bf16.mxu0 0
        %2690 = vmatpush1.bf16.msra.mxu0 %v2678
        %2691 = vmatprep.subr.bf16.mxu0 0
        %2692 = vmatpush1.bf16.msra.mxu0 0
        %2693 = vmatprep.subr.bf16.mxu0 0
        %2694 = vmatpush1.bf16.msra.mxu0 0
        %2695 = vmatprep.subr.bf16.mxu0 0
        %2696 = vmatpush1.bf16.msra.mxu0 0
        %2697 = vmatprep.subr.bf16.mxu0 0
        %2698 = vmatpush1.bf16.msra.mxu0 0
        %2699 = vmatprep.subr.bf16.mxu0 0
        %2700 = vmatpush1.bf16.msra.mxu0 0
        %2701 = vmatprep.subr.bf16.mxu0 0
        %2702 = vmatpush1.bf16.msra.mxu0 0
        %2703 = vmatprep.subr.bf16.mxu0 0
        %2704 = vmatpush1.bf16.msra.mxu0 0
        %2705 = vmatprep.subr.bf16.mxu0 0
        %2706 = vmatpush1.bf16.msra.mxu0 0
        %2707 = vmatprep.subr.bf16.mxu0 0
        %2708 = vmatpush1.bf16.msra.mxu0 0
        %2709 = vmatprep.subr.bf16.mxu0 0
        %2710 = vmatpush1.bf16.msra.mxu0 0
        %2711 = vmatprep.subr.bf16.mxu0 0
        %2712 = vmatpush1.bf16.msra.mxu0 0
        %2713 = vmatprep.subr.bf16.mxu0 0
        %2714 = vmatpush1.bf16.msra.mxu0 0
        %2715 = vmatprep.subr.bf16.mxu0 0
        %2716 = vmatpush1.bf16.msra.mxu0 0
        %2717 = vmatprep.subr.bf16.mxu0 0
        %2718 = vmatpush1.bf16.msra.mxu0 0
        %2719 = vmatprep.mubr.bf16.mxu0 0
        %2720 = vmatmul.mubr.bf16.gmra.mrb[0].mxu0 %v2682
        %v2721 = vpop.f32.mrb[0].mxu0
        %v2722 = vadd.f32 0.0, %v2721
        %v2723 = vpop.f32.mrb[0].mxu0
        %v2724 = vpop.f32.mrb[0].mxu0
        %v2725 = vadd.f32 0.0, %v2724
        %v2726 = vpop.f32.mrb[0].mxu0
        %2727 = vmatprep.mubr.bf16.mxu0 0
        %2728 = vmatmul.mubr.bf16.gmra.mrb[0].mxu0 %v2685
        %v2729 = vpop.f32.mrb[0].mxu0
        %v2730 = vadd.f32 0.0, %v2729
        %v2731 = vpop.f32.mrb[0].mxu0
        %v2732 = vpop.f32.mrb[0].mxu0
        %v2733 = vadd.f32 0.0, %v2732
        %v2734 = vpop.f32.mrb[0].mxu0
        %2735 = vdwg.mxu0
        %2737 = vset.pattern.permute.xlu0 0
        %2738 = vperm.xlu0 %2737, %v2661
        %v2739 = vpop.permute.xlu0 %2738
        %2742 = vset.pattern.permute.xlu0 0
        %2743 = vperm.xlu0 %2742, %v2662
        %v2744 = vpop.permute.xlu0 %2743
        %2747 = vset.pattern.permute.xlu0 0
        %2748 = vperm.xlu0 %2747, %v2663
        %v2749 = vpop.permute.xlu0 %2748
        %2752 = vset.pattern.permute.xlu0 0
        %2753 = vperm.xlu0 %2752, %v2664
        %v2754 = vpop.permute.xlu0 %2753
        %v2756 = vmul.f32 %v2739, %v2722
        %v2757 = vmul.f32 %v2744, %v2725
        %v2758 = vmul.f32 %v2749, %v2730
        %v2759 = vmul.f32 %v2754, %v2733
        %v2760 = vpack.c.bf16 %v2757, %v2756
        %v2761 = vpack.c.bf16 %v2759, %v2758
        %2762 = vmatprep.subr.bf16.mxu0 0
        %2763 = vmatpush1.bf16.msra.mxu0 %v2760
        %2764 = vmatprep.subr.bf16.mxu0 0
        %2765 = vmatpush1.bf16.msra.mxu0 %v2761
        %2766 = vmatprep.subr.bf16.mxu0 0
        %2767 = vmatpush1.bf16.msra.mxu0 0
        %2768 = vmatprep.subr.bf16.mxu0 0
        %2769 = vmatpush1.bf16.msra.mxu0 0
        %2770 = vmatprep.subr.bf16.mxu0 0
        %2771 = vmatpush1.bf16.msra.mxu0 0
        %2772 = vmatprep.subr.bf16.mxu0 0
        %2773 = vmatpush1.bf16.msra.mxu0 0
        %2774 = vmatprep.subr.bf16.mxu0 0
        %2775 = vmatpush1.bf16.msra.mxu0 0
        %2776 = vmatprep.subr.bf16.mxu0 0
        %2777 = vmatpush1.bf16.msra.mxu0 0
        %2778 = vmatprep.subr.bf16.mxu0 0
        %2779 = vmatpush1.bf16.msra.mxu0 0
        %2780 = vmatprep.subr.bf16.mxu0 0
        %2781 = vmatpush1.bf16.msra.mxu0 0
        %2782 = vmatprep.subr.bf16.mxu0 0
        %2783 = vmatpush1.bf16.msra.mxu0 0
        %2784 = vmatprep.subr.bf16.mxu0 0
        %2785 = vmatpush1.bf16.msra.mxu0 0
        %2786 = vmatprep.subr.bf16.mxu0 0
        %2787 = vmatpush1.bf16.msra.mxu0 0
        %2788 = vmatprep.subr.bf16.mxu0 0
        %2789 = vmatpush1.bf16.msra.mxu0 0
        %2790 = vmatprep.subr.bf16.mxu0 0
        %2791 = vmatpush1.bf16.msra.mxu0 0
        %2792 = vmatprep.subr.bf16.mxu0 0
        %2793 = vmatpush1.bf16.msra.mxu0 0
        %2794 = vmatprep.mubr.bf16.mxu0 0
        %2795 = vmatmul.mubr.bf16.gmra.mrb[0].mxu0 %v1094
        %v2796 = vpop.f32.mrb[0].mxu0
        %v2797 = vadd.f32 0.0, %v2796
        %v2798 = vpop.f32.mrb[0].mxu0
        %v2799 = vpop.f32.mrb[0].mxu0
        %v2800 = vadd.f32 0.0, %v2799
        %v2801 = vpop.f32.mrb[0].mxu0
        %2802 = vmatprep.mubr.bf16.mxu0 0
        %2803 = vmatmul.mubr.bf16.gmra.mrb[0].mxu0 %v1097
        %v2804 = vpop.f32.mrb[0].mxu0
        %v2805 = vadd.f32 0.0, %v2804
        %v2806 = vpop.f32.mrb[0].mxu0
        %v2807 = vpop.f32.mrb[0].mxu0
        %v2808 = vadd.f32 0.0, %v2807
        %v2809 = vpop.f32.mrb[0].mxu0
        %2810 = vdwg.mxu0
        %v2811 = vmul.f32 %v2739, %v2797
        %v2812 = vmul.f32 %v2744, %v2800
        %v2813 = vmul.f32 %v2749, %v2805
        %v2814 = vmul.f32 %v2754, %v2808
        %v2815 = vld [vmem:[%s14] sm:$0x1]
        %v2817 = vlaneseq
        %v2818 = vshrl.u32 %v2817, 7
        %v2819 = vsub.s32 0, %v2818
        %v2820 = vrot.slane %v2815, %v2819
        %v2822 = vadd.f32 %v2811, %v2820
        %v2823 = vadd.f32 %v2812, %v2820
        %v2824 = vadd.f32 %v2813, %v2820
        %v2825 = vadd.f32 %v2814, %v2820
        %v2826 = vmax.f32 %v2822, 0.0
        %v2827 = vmax.f32 %v2823, 0.0
        %v2828 = vmax.f32 %v2824, 0.0
        %v2829 = vmax.f32 %v2825, 0.0
        %v2830 = vld [vmem:[%s15] sm:$0x1]
        %v2832 = vlaneseq
        %v2833 = vshrl.u32 %v2832, 7
        %v2834 = vsub.s32 0, %v2833
        %v2835 = vrot.slane %v2830, %v2834
        %v2837 = vmul.f32 %v2826, %v2835
        %v2838 = vmul.f32 %v2827, %v2835
        %v2839 = vmul.f32 %v2828, %v2835
        %v2840 = vmul.f32 %v2829, %v2835
        %v2841 = vsel %vm882, %v2837, 0.0
        %2842 = vadd.xlane.f32.xlu0 %v2841
        %v2843 = vpop.xlane.xlu0 %2842
        %v2844 = vsel %vm882, %v2838, 0.0
        %2845 = vadd.xlane.f32.xlu0 %v2844
        %v2846 = vpop.xlane.xlu0 %2845
        %v2847 = vsel %vm882, %v2839, 0.0
        %2848 = vadd.xlane.f32.xlu0 %v2847
        %v2849 = vpop.xlane.xlu0 %2848
        %v2850 = vsel %vm882, %v2840, 0.0
        %2851 = vadd.xlane.f32.xlu0 %v2850
        %v2852 = vpop.xlane.xlu0 %2851
        %v2853 = vmul.f32 %v2661, %v2843
        %v2854 = vmul.f32 %v2662, %v2846
        %v2855 = vmul.f32 %v2663, %v2849
        %v2856 = vmul.f32 %v2664, %v2852
        %2857 = vmatprep.subr.mxu0 0.0
        %2858 = vmatpush1.msra.mxu0 %v2853
        %2859 = vmatprep.subr.mxu0 0.0
        %2860 = vmatpush1.msra.mxu0 %v2854
        %2861 = vmatprep.subr.mxu0 0.0
        %2862 = vmatpush1.msra.mxu0 %v2855
        %2863 = vmatprep.subr.mxu0 0.0
        %2864 = vmatpush1.msra.mxu0 %v2856
        %2865 = vmatprep.subr.mxu0 0.0
        %2866 = vmatpush1.msra.mxu0 0.0
        %2867 = vmatprep.subr.mxu0 0.0
        %2868 = vmatpush1.msra.mxu0 0.0
        %2869 = vmatprep.subr.mxu0 0.0
        %2870 = vmatpush1.msra.mxu0 0.0
        %2871 = vmatprep.subr.mxu0 0.0
        %2872 = vmatpush1.msra.mxu0 0.0
        %2873 = vmatprep.subr.mxu0 0.0
        %2874 = vmatpush1.msra.mxu0 0.0
        %2875 = vmatprep.subr.mxu0 0.0
        %2876 = vmatpush1.msra.mxu0 0.0
        %2877 = vmatprep.subr.mxu0 0.0
        %2878 = vmatpush1.msra.mxu0 0.0
        %2879 = vmatprep.subr.mxu0 0.0
        %2880 = vmatpush1.msra.mxu0 0.0
        %2881 = vmatprep.subr.mxu0 0.0
        %2882 = vmatpush1.msra.mxu0 0.0
        %2883 = vmatprep.subr.mxu0 0.0
        %2884 = vmatpush1.msra.mxu0 0.0
        %2885 = vmatprep.subr.mxu0 0.0
        %2886 = vmatpush1.msra.mxu0 0.0
        %2887 = vmatprep.subr.mxu0 0.0
        %2888 = vmatpush1.msra.mxu0 0.0
        %2889 = vmatprep.subr.mxu0 0.0
        %2890 = vmatpush1.msra.mxu0 0.0
        %2891 = vmatprep.subr.mxu0 0.0
        %2892 = vmatpush1.msra.mxu0 0.0
        %2893 = vmatprep.subr.mxu0 0.0
        %2894 = vmatpush1.msra.mxu0 0.0
        %2895 = vmatprep.subr.mxu0 0.0
        %2896 = vmatpush1.msra.mxu0 0.0
        %2897 = vmatprep.subr.mxu0 0.0
        %2898 = vmatpush1.msra.mxu0 0.0
        %2899 = vmatprep.subr.mxu0 0.0
        %2900 = vmatpush1.msra.mxu0 0.0
        %2901 = vmatprep.subr.mxu0 0.0
        %2902 = vmatpush1.msra.mxu0 0.0
        %2903 = vmatprep.subr.mxu0 0.0
        %2904 = vmatpush1.msra.mxu0 0.0
        %2905 = vmatprep.subr.mxu0 0.0
        %2906 = vmatpush1.msra.mxu0 0.0
        %2907 = vmatprep.subr.mxu0 0.0
        %2908 = vmatpush1.msra.mxu0 0.0
        %2909 = vmatprep.subr.mxu0 0.0
        %2910 = vmatpush1.msra.mxu0 0.0
        %2911 = vmatprep.subr.mxu0 0.0
        %2912 = vmatpush1.msra.mxu0 0.0
        %2913 = vmatprep.subr.mxu0 0.0
        %2914 = vmatpush1.msra.mxu0 0.0
        %2915 = vmatprep.subr.mxu0 0.0
        %2916 = vmatpush1.msra.mxu0 0.0
        %2917 = vmatprep.subr.mxu0 0.0
        %2918 = vmatpush1.msra.mxu0 0.0
        %2919 = vmatprep.subr.mxu0 0.0
        %2920 = vmatpush1.msra.mxu0 0.0
        %2921 = vmatprep.mubr.f32.mxu0 0.0
        %2922 = vmatmul.mubr.f32.gmra.mrb[0].mxu0 %v884
        %v2923 = vpop.f32.mrb[0].mxu0
        %v2924 = vadd.f32 0.0, %v2923
        %v2925 = vpop.f32.mrb[0].mxu0
        %2926 = vmatprep.mubr.f32.mxu0 0.0
        %2927 = vmatmul.mubr.f32.gmra.mrb[0].mxu0 %v887
        %v2928 = vpop.f32.mrb[0].mxu0
        %v2929 = vadd.f32 0.0, %v2928
        %v2930 = vpop.f32.mrb[0].mxu0
        %2931 = vmatprep.mubr.f32.mxu0 0.0
        %2932 = vmatmul.mubr.f32.gmra.mrb[0].mxu0 %v890
        %v2933 = vpop.f32.mrb[0].mxu0
        %v2934 = vadd.f32 0.0, %v2933
        %v2935 = vpop.f32.mrb[0].mxu0
        %2936 = vmatprep.mubr.f32.mxu0 0.0
        %2937 = vmatmul.mubr.f32.gmra.mrb[0].mxu0 %v893
        %v2938 = vpop.f32.mrb[0].mxu0
        %v2939 = vadd.f32 0.0, %v2938
        %v2940 = vpop.f32.mrb[0].mxu0
        %2941 = vdwg.mxu0
        %v2942 = vmul.f32 %v2661, %v2924
        %v2943 = vmul.f32 %v2662, %v2929
        %v2944 = vmul.f32 %v2663, %v2934
        %v2945 = vmul.f32 %v2664, %v2939
        %s2946 = sld [smem:[#allocation4]]
        %v2947 = vstv %s2946
        %v2948 = vadd.f32 %v2942, %v2947
        %v2949 = vadd.f32 %v2943, %v2947
        %v2950 = vadd.f32 %v2944, %v2947
        %v2951 = vadd.f32 %v2945, %v2947
        %vm2952 = vcmp.gt.f32.partialorder %v2321, 0.0
        %vm2953 = vcmp.gt.f32.partialorder %v2322, 0.0
        %vm2954 = vcmp.gt.f32.partialorder %v2323, 0.0
        %vm2955 = vcmp.gt.f32.partialorder %v2324, 0.0
        %v2956 = vsel %vm2952, %v2948, -1e+30
        %v2957 = vsel %vm2953, %v2949, -1e+30
        %v2958 = vsel %vm2954, %v2950, -1e+30
        %v2959 = vsel %vm2955, %v2951, -1e+30
        %2961 = vset.pattern.permute.xlu0 0
        %2962 = vperm.xlu0 %2961, %v2956
        %v2963 = vpop.permute.xlu0 %2962
        %2966 = vset.pattern.permute.xlu0 0
        %2967 = vperm.xlu0 %2966, %v2957
        %v2968 = vpop.permute.xlu0 %2967
        %2971 = vset.pattern.permute.xlu0 0
        %2972 = vperm.xlu0 %2971, %v2958
        %v2973 = vpop.permute.xlu0 %2972
        %2976 = vset.pattern.permute.xlu0 0
        %2977 = vperm.xlu0 %2976, %v2959
        %v2978 = vpop.permute.xlu0 %2977
        %v2980 = vmul.f32 %v826, %v2963
        %v2981 = vmul.f32 %v827, %v2968
        %v2982 = vmul.f32 %v828, %v2973
        %v2983 = vmul.f32 %v829, %v2978
        %v2984 = vsel %vm882, %v2980, 0.0
        %v2985 = vsel %vm882, %v2981, 0.0
        %v2986 = vadd.f32 %v2984, %v2985
        %v2987 = vsel %vm882, %v2982, 0.0
        %v2988 = vadd.f32 %v2986, %v2987
        %v2989 = vsel %vm882, %v2983, 0.0
        %v2990 = vadd.f32 %v2988, %v2989
        %v2991 = vrot.slane %v2990, 4
        %v2992 = vadd.f32 %v2990, %v2991
        %v2993 = vrot.slane %v2992, 2
        %v2994 = vadd.f32 %v2992, %v2993
        %v2995 = vrot.slane %v2994, 1
        %v2996 = vadd.f32 %v2994, %v2995
        %vm2997 = vcmp.gt.f32.partialorder %v2996, %v2963
        %vm2998 = vcmp.gt.f32.partialorder %v2996, %v2968
        %vm2999 = vcmp.gt.f32.partialorder %v2996, %v2973
        %vm3000 = vcmp.gt.f32.partialorder %v2996, %v2978
        %vm3001 = vcmp.eq.f32.partialorder %v2996, %v2963
        %vm3002 = vcmp.eq.f32.partialorder %v2996, %v2968
        %vm3003 = vcmp.eq.f32.partialorder %v2996, %v2973
        %vm3004 = vcmp.eq.f32.partialorder %v2996, %v2978
        %vm3005 = vmand %vm3001, %vm1339
        %vm3006 = vmand %vm3002, %vm1340
        %vm3007 = vmand %vm3003, %vm1341
        %vm3008 = vmand %vm3004, %vm1342
        %vm3009 = vmor %vm2997, %vm3005
        %vm3010 = vmor %vm2998, %vm3006
        %vm3011 = vmor %vm2999, %vm3007
        %vm3012 = vmor %vm3000, %vm3008
        %v3013 = vsel %vm3009, 1, 0
        %v3014 = vsel %vm3010, 1, 0
        %v3015 = vsel %vm3011, 1, 0
        %v3016 = vsel %vm3012, 1, 0
        %v3017 = vcvt.s32.f32 %v3013
        %v3018 = vcvt.s32.f32 %v3014
        %v3019 = vcvt.s32.f32 %v3015
        %v3020 = vcvt.s32.f32 %v3016
        %v3021 = vmul.f32 %v873, %v3017
        %v3022 = vmul.f32 %v874, %v3018
        %v3023 = vmul.f32 %v875, %v3019
        %v3024 = vmul.f32 %v876, %v3020
        %v3025 = vsel %vm882, %v3021, 0.0
        %3026 = vadd.xlane.f32.xlu0 %v3025
        %v3027 = vpop.xlane.xlu0 %3026
        %v3028 = vsel %vm882, %v3022, 0.0
        %3029 = vadd.xlane.f32.xlu0 %v3028
        %v3030 = vpop.xlane.xlu0 %3029
        %v3031 = vsel %vm882, %v3023, 0.0
        %3032 = vadd.xlane.f32.xlu0 %v3031
        %v3033 = vpop.xlane.xlu0 %3032
        %v3034 = vsel %vm882, %v3024, 0.0
        %3035 = vadd.xlane.f32.xlu0 %v3034
        %v3036 = vpop.xlane.xlu0 %3035
        %3037 = vmatprep.subr.mxu0 0.0
        %3038 = vmatpush1.msra.mxu0 %v2321
        %3039 = vmatprep.subr.mxu0 0.0
        %3040 = vmatpush1.msra.mxu0 %v2322
        %3041 = vmatprep.subr.mxu0 0.0
        %3042 = vmatpush1.msra.mxu0 %v2323
        %3043 = vmatprep.subr.mxu0 0.0
        %3044 = vmatpush1.msra.mxu0 %v2324
        %3045 = vmatprep.subr.mxu0 0.0
        %3046 = vmatpush1.msra.mxu0 0.0
        %3047 = vmatprep.subr.mxu0 0.0
        %3048 = vmatpush1.msra.mxu0 0.0
        %3049 = vmatprep.subr.mxu0 0.0
        %3050 = vmatpush1.msra.mxu0 0.0
        %3051 = vmatprep.subr.mxu0 0.0
        %3052 = vmatpush1.msra.mxu0 0.0
        %3053 = vmatprep.subr.mxu0 0.0
        %3054 = vmatpush1.msra.mxu0 0.0
        %3055 = vmatprep.subr.mxu0 0.0
        %3056 = vmatpush1.msra.mxu0 0.0
        %3057 = vmatprep.subr.mxu0 0.0
        %3058 = vmatpush1.msra.mxu0 0.0
        %3059 = vmatprep.subr.mxu0 0.0
        %3060 = vmatpush1.msra.mxu0 0.0
        %3061 = vmatprep.subr.mxu0 0.0
        %3062 = vmatpush1.msra.mxu0 0.0
        %3063 = vmatprep.subr.mxu0 0.0
        %3064 = vmatpush1.msra.mxu0 0.0
        %3065 = vmatprep.subr.mxu0 0.0
        %3066 = vmatpush1.msra.mxu0 0.0
        %3067 = vmatprep.subr.mxu0 0.0
        %3068 = vmatpush1.msra.mxu0 0.0
        %3069 = vmatprep.subr.mxu0 0.0
        %3070 = vmatpush1.msra.mxu0 0.0
        %3071 = vmatprep.subr.mxu0 0.0
        %3072 = vmatpush1.msra.mxu0 0.0
        %3073 = vmatprep.subr.mxu0 0.0
        %3074 = vmatpush1.msra.mxu0 0.0
        %3075 = vmatprep.subr.mxu0 0.0
        %3076 = vmatpush1.msra.mxu0 0.0
        %3077 = vmatprep.subr.mxu0 0.0
        %3078 = vmatpush1.msra.mxu0 0.0
        %3079 = vmatprep.subr.mxu0 0.0
        %3080 = vmatpush1.msra.mxu0 0.0
        %3081 = vmatprep.subr.mxu0 0.0
        %3082 = vmatpush1.msra.mxu0 0.0
        %3083 = vmatprep.subr.mxu0 0.0
        %3084 = vmatpush1.msra.mxu0 0.0
        %3085 = vmatprep.subr.mxu0 0.0
        %3086 = vmatpush1.msra.mxu0 0.0
        %3087 = vmatprep.subr.mxu0 0.0
        %3088 = vmatpush1.msra.mxu0 0.0
        %3089 = vmatprep.subr.mxu0 0.0
        %3090 = vmatpush1.msra.mxu0 0.0
        %3091 = vmatprep.subr.mxu0 0.0
        %3092 = vmatpush1.msra.mxu0 0.0
        %3093 = vmatprep.subr.mxu0 0.0
        %3094 = vmatpush1.msra.mxu0 0.0
        %3095 = vmatprep.subr.mxu0 0.0
        %3096 = vmatpush1.msra.mxu0 0.0
        %3097 = vmatprep.subr.mxu0 0.0
        %3098 = vmatpush1.msra.mxu0 0.0
        %3099 = vmatprep.subr.mxu0 0.0
        %3100 = vmatpush1.msra.mxu0 0.0
        %3101 = vmatprep.mubr.f32.mxu0 0.0
        %3102 = vmatmul.mubr.f32.gmra.mrb[0].mxu0 %v1376
        %v3103 = vpop.f32.mrb[0].mxu0
        %v3104 = vadd.f32 0.0, %v3103
        %v3105 = vpop.f32.mrb[0].mxu0
        %3106 = vmatprep.mubr.f32.mxu0 0.0
        %3107 = vmatmul.mubr.f32.gmra.mrb[0].mxu0 %v1379
        %v3108 = vpop.f32.mrb[0].mxu0
        %v3109 = vadd.f32 0.0, %v3108
        %v3110 = vpop.f32.mrb[0].mxu0
        %3111 = vmatprep.mubr.f32.mxu0 0.0
        %3112 = vmatmul.mubr.f32.gmra.mrb[0].mxu0 %v1382
        %v3113 = vpop.f32.mrb[0].mxu0
        %v3114 = vadd.f32 0.0, %v3113
        %v3115 = vpop.f32.mrb[0].mxu0
        %3116 = vmatprep.mubr.f32.mxu0 0.0
        %3117 = vmatmul.mubr.f32.gmra.mrb[0].mxu0 %v1385
        %v3118 = vpop.f32.mrb[0].mxu0
        %v3119 = vadd.f32 0.0, %v3118
        %v3120 = vpop.f32.mrb[0].mxu0
        %3121 = vdwg.mxu0
        %v3122 = vmul.f32 %v3104, 0.5
        %v3123 = vmul.f32 %v3109, 0.5
        %v3124 = vmul.f32 %v3114, 0.5
        %v3125 = vmul.f32 %v3119, 0.5
        %v3126 = vceil.f32 %v3122
        %v3127 = vceil.f32 %v3123
        %v3128 = vceil.f32 %v3124
        %v3129 = vceil.f32 %v3125
        %vm3130 = vcmp.lt.f32.partialorder %v3027, %v3126
        %vm3131 = vcmp.lt.f32.partialorder %v3030, %v3127
        %vm3132 = vcmp.lt.f32.partialorder %v3033, %v3128
        %vm3133 = vcmp.lt.f32.partialorder %v3036, %v3129
        %vm3134 = vmand %vm2952, %vm3130
        %vm3135 = vmand %vm2953, %vm3131
        %vm3136 = vmand %vm2954, %vm3132
        %vm3137 = vmand %vm2955, %vm3133
        %v3138 = vsel %vm3134, 1, 0
        %v3139 = vsel %vm3135, 1, 0
        %v3140 = vsel %vm3136, 1, 0
        %v3141 = vsel %vm3137, 1, 0
        %v3142 = vcvt.s32.f32 %v3138
        %v3143 = vcvt.s32.f32 %v3139
        %v3144 = vcvt.s32.f32 %v3140
        %v3145 = vcvt.s32.f32 %v3141
        %v3146 = vtanh.pop %v2948
        %v3147 = vtanh.pop %v2949
        %v3148 = vtanh.pop %v2950
        %v3149 = vtanh.pop %v2951
        %3151 = vset.pattern.permute.xlu0 0
        %3152 = vperm.xlu0 %3151, %v3146
        %v3153 = vpop.permute.xlu0 %3152
        %3156 = vset.pattern.permute.xlu0 0
        %3157 = vperm.xlu0 %3156, %v3147
        %v3158 = vpop.permute.xlu0 %3157
        %3161 = vset.pattern.permute.xlu0 0
        %3162 = vperm.xlu0 %3161, %v3148
        %v3163 = vpop.permute.xlu0 %3162
        %3166 = vset.pattern.permute.xlu0 0
        %3167 = vperm.xlu0 %3166, %v3149
        %v3168 = vpop.permute.xlu0 %3167
        %v3170 = vmul.f32 %v2826, %v3153
        %v3171 = vmul.f32 %v2827, %v3158
        %v3172 = vmul.f32 %v2828, %v3163
        %v3173 = vmul.f32 %v2829, %v3168
        %3175 = vset.pattern.permute.xlu0 0
        %3176 = vperm.xlu0 %3175, %v3142
        %v3177 = vpop.permute.xlu0 %3176
        %3180 = vset.pattern.permute.xlu0 0
        %3181 = vperm.xlu0 %3180, %v3143
        %v3182 = vpop.permute.xlu0 %3181
        %3185 = vset.pattern.permute.xlu0 0
        %3186 = vperm.xlu0 %3185, %v3144
        %v3187 = vpop.permute.xlu0 %3186
        %3190 = vset.pattern.permute.xlu0 0
        %3191 = vperm.xlu0 %3190, %v3145
        %v3192 = vpop.permute.xlu0 %3191
        %v3194 = vmul.f32 %v3170, %v3177
        %v3195 = vmul.f32 %v3171, %v3182
        %v3196 = vmul.f32 %v3172, %v3187
        %v3197 = vmul.f32 %v3173, %v3192
        %3198 = vmatprep.subr.mxu0 0.0
        %3199 = vmatpush1.msra.mxu0 %v3142
        %3200 = vmatprep.subr.mxu0 0.0
        %3201 = vmatpush1.msra.mxu0 %v3143
        %3202 = vmatprep.subr.mxu0 0.0
        %3203 = vmatpush1.msra.mxu0 %v3144
        %3204 = vmatprep.subr.mxu0 0.0
        %3205 = vmatpush1.msra.mxu0 %v3145
        %3206 = vmatprep.subr.mxu0 0.0
        %3207 = vmatpush1.msra.mxu0 0.0
        %3208 = vmatprep.subr.mxu0 0.0
        %3209 = vmatpush1.msra.mxu0 0.0
        %3210 = vmatprep.subr.mxu0 0.0
        %3211 = vmatpush1.msra.mxu0 0.0
        %3212 = vmatprep.subr.mxu0 0.0
        %3213 = vmatpush1.msra.mxu0 0.0
        %3214 = vmatprep.subr.mxu0 0.0
        %3215 = vmatpush1.msra.mxu0 0.0
        %3216 = vmatprep.subr.mxu0 0.0
        %3217 = vmatpush1.msra.mxu0 0.0
        %3218 = vmatprep.subr.mxu0 0.0
        %3219 = vmatpush1.msra.mxu0 0.0
        %3220 = vmatprep.subr.mxu0 0.0
        %3221 = vmatpush1.msra.mxu0 0.0
        %3222 = vmatprep.subr.mxu0 0.0
        %3223 = vmatpush1.msra.mxu0 0.0
        %3224 = vmatprep.subr.mxu0 0.0
        %3225 = vmatpush1.msra.mxu0 0.0
        %3226 = vmatprep.subr.mxu0 0.0
        %3227 = vmatpush1.msra.mxu0 0.0
        %3228 = vmatprep.subr.mxu0 0.0
        %3229 = vmatpush1.msra.mxu0 0.0
        %3230 = vmatprep.subr.mxu0 0.0
        %3231 = vmatpush1.msra.mxu0 0.0
        %3232 = vmatprep.subr.mxu0 0.0
        %3233 = vmatpush1.msra.mxu0 0.0
        %3234 = vmatprep.subr.mxu0 0.0
        %3235 = vmatpush1.msra.mxu0 0.0
        %3236 = vmatprep.subr.mxu0 0.0
        %3237 = vmatpush1.msra.mxu0 0.0
        %3238 = vmatprep.subr.mxu0 0.0
        %3239 = vmatpush1.msra.mxu0 0.0
        %3240 = vmatprep.subr.mxu0 0.0
        %3241 = vmatpush1.msra.mxu0 0.0
        %3242 = vmatprep.subr.mxu0 0.0
        %3243 = vmatpush1.msra.mxu0 0.0
        %3244 = vmatprep.subr.mxu0 0.0
        %3245 = vmatpush1.msra.mxu0 0.0
        %3246 = vmatprep.subr.mxu0 0.0
        %3247 = vmatpush1.msra.mxu0 0.0
        %3248 = vmatprep.subr.mxu0 0.0
        %3249 = vmatpush1.msra.mxu0 0.0
        %3250 = vmatprep.subr.mxu0 0.0
        %3251 = vmatpush1.msra.mxu0 0.0
        %3252 = vmatprep.subr.mxu0 0.0
        %3253 = vmatpush1.msra.mxu0 0.0
        %3254 = vmatprep.subr.mxu0 0.0
        %3255 = vmatpush1.msra.mxu0 0.0
        %3256 = vmatprep.subr.mxu0 0.0
        %3257 = vmatpush1.msra.mxu0 0.0
        %3258 = vmatprep.subr.mxu0 0.0
        %3259 = vmatpush1.msra.mxu0 0.0
        %3260 = vmatprep.subr.mxu0 0.0
        %3261 = vmatpush1.msra.mxu0 0.0
        %3262 = vmatprep.mubr.f32.mxu0 0.0
        %3263 = vmatmul.mubr.f32.gmra.mrb[0].mxu0 %v1549
        %v3264 = vpop.f32.mrb[0].mxu0
        %v3265 = vadd.f32 0.0, %v3264
        %v3266 = vpop.f32.mrb[0].mxu0
        %3267 = vdwg.mxu0
        %v3268 = vpack.c.bf16 %v3195, %v3194
        %v3269 = vpack.c.bf16 %v3197, %v3196
        %3270 = vmatprep.subr.bf16.mxu0 0
        %3271 = vmatpush1.bf16.msra.mxu0 %v3268
        %3272 = vmatprep.subr.bf16.mxu0 0
        %3273 = vmatpush1.bf16.msra.mxu0 %v3269
        %3274 = vmatprep.subr.bf16.mxu0 0
        %3275 = vmatpush1.bf16.msra.mxu0 0
        %3276 = vmatprep.subr.bf16.mxu0 0
        %3277 = vmatpush1.bf16.msra.mxu0 0
        %3278 = vmatprep.subr.bf16.mxu0 0
        %3279 = vmatpush1.bf16.msra.mxu0 0
        %3280 = vmatprep.subr.bf16.mxu0 0
        %3281 = vmatpush1.bf16.msra.mxu0 0
        %3282 = vmatprep.subr.bf16.mxu0 0
        %3283 = vmatpush1.bf16.msra.mxu0 0
        %3284 = vmatprep.subr.bf16.mxu0 0
        %3285 = vmatpush1.bf16.msra.mxu0 0
        %3286 = vmatprep.subr.bf16.mxu0 0
        %3287 = vmatpush1.bf16.msra.mxu0 0
        %3288 = vmatprep.subr.bf16.mxu0 0
        %3289 = vmatpush1.bf16.msra.mxu0 0
        %3290 = vmatprep.subr.bf16.mxu0 0
        %3291 = vmatpush1.bf16.msra.mxu0 0
        %3292 = vmatprep.subr.bf16.mxu0 0
        %3293 = vmatpush1.bf16.msra.mxu0 0
        %3294 = vmatprep.subr.bf16.mxu0 0
        %3295 = vmatpush1.bf16.msra.mxu0 0
        %3296 = vmatprep.subr.bf16.mxu0 0
        %3297 = vmatpush1.bf16.msra.mxu0 0
        %3298 = vmatprep.subr.bf16.mxu0 0
        %3299 = vmatpush1.bf16.msra.mxu0 0
        %3300 = vmatprep.subr.bf16.mxu0 0
        %3301 = vmatpush1.bf16.msra.mxu0 0
        %3302 = vmatprep.mubr.bf16.mxu0 0
        %3303 = vmatmul.mubr.bf16.gmra.mrb[0].mxu0 %v1625
        %v3304 = vpop.f32.mrb[0].mxu0
        %v3305 = vadd.f32 0.0, %v3304
        %v3306 = vpop.f32.mrb[0].mxu0
        %v3307 = vpop.f32.mrb[0].mxu0
        %v3308 = vpop.f32.mrb[0].mxu0
        %3309 = vdwg.mxu0
        %v3310 = vmax.f32 %v3265, 1.0
        %3312 = vset.pattern.permute.xlu0 0
        %3313 = vperm.xlu0 %3312, %v3310
        %v3314 = vpop.permute.xlu0 %3313
        %v3316 = vrcp.pop %v3314
        %v3317 = vmul.f32 %v3305, %v3316
        %v3318 = vsub.f32 %v3142, 1.0
        %v3319 = vsub.f32 %v3143, 1.0
        %v3320 = vsub.f32 %v3144, 1.0
        %v3321 = vsub.f32 %v3145, 1.0
        %v3322 = vmul.f32 %v3318, 1e+30
        %v3323 = vmul.f32 %v3319, 1e+30
        %v3324 = vmul.f32 %v3320, 1e+30
        %v3325 = vmul.f32 %v3321, 1e+30
        %3327 = vset.pattern.permute.xlu0 0
        %3328 = vperm.xlu0 %3327, %v3322
        %v3329 = vpop.permute.xlu0 %3328
        %3332 = vset.pattern.permute.xlu0 0
        %3333 = vperm.xlu0 %3332, %v3323
        %v3334 = vpop.permute.xlu0 %3333
        %3337 = vset.pattern.permute.xlu0 0
        %3338 = vperm.xlu0 %3337, %v3324
        %v3339 = vpop.permute.xlu0 %3338
        %3342 = vset.pattern.permute.xlu0 0
        %3343 = vperm.xlu0 %3342, %v3325
        %v3344 = vpop.permute.xlu0 %3343
        %v3346 = vadd.f32 %v3194, %v3329
        %v3347 = vadd.f32 %v3195, %v3334
        %v3348 = vadd.f32 %v3196, %v3339
        %v3349 = vadd.f32 %v3197, %v3344
        %vm3350 = vcmp.gt.f32.partialorder %v3265, 0.0
        %v3351 = vsel %vm882, %v3346, -inf
        %v3352 = vsel %vm882, %v3347, -inf
        %v3353 = vmax.f32 %v3351, %v3352
        %v3354 = vrot.slane %v3353, 4
        %v3355 = vmax.f32 %v3353, %v3354
        %v3356 = vrot.slane %v3355, 2
        %v3357 = vmax.f32 %v3355, %v3356
        %v3358 = vrot.slane %v3357, 1
        %v3359 = vmax.f32 %v3357, %v3358
        %v3360 = vsel %vm882, %v3348, -inf
        %v3361 = vsel %vm882, %v3349, -inf
        %v3362 = vmax.f32 %v3360, %v3361
        %v3363 = vrot.slane %v3362, 4
        %v3364 = vmax.f32 %v3362, %v3363
        %v3365 = vrot.slane %v3364, 2
        %v3366 = vmax.f32 %v3364, %v3365
        %v3367 = vrot.slane %v3366, 1
        %v3368 = vmax.f32 %v3366, %v3367
        %v3369 = vsel %vm3350, 1, 0
        %3370 = vset.pattern.permute.xlu0 0
        %3371 = vperm.xlu0 %3370, %v3369
        %v3372 = vpop.permute.xlu0 %3371
        %vm3373 = vcmp.eq.s32.totalorder %v3372, 1
        %v3376 = vsel %vm1733, %v3368, %v3359
        %v3378 = vsel %vm3373, %v3376, 0.0
        %v3379 = vadd.f32 %v2558, %v3378
        %v3380 = vadd.f32 %v2559, %v3317
        %v3381 = vld [vmem:[%s17] sm:$0xf]
        %v3382 = vld [vmem:[%s17 + $0x4] sm:$0xf]
        %v3383 = vld [vmem:[%s17 + $0x8] sm:$0xf]
        %v3384 = vld [vmem:[%s17 + $0xc] sm:$0xf]
        %v3385 = vpack.c.bf16 %v3379, %v3379
        %v3386 = vld [vmem:[%s18] sm:$0xf]
        %v3387 = vld [vmem:[%s18 + $0x4] sm:$0xf]
        %v3388 = vld [vmem:[%s18 + $0x8] sm:$0xf]
        %v3389 = vld [vmem:[%s18 + $0xc] sm:$0xf]
        %v3390 = vpack.c.bf16 %v3380, %v3380
        %v3395 = vunpack.c.l.b16 %v3386
        %v3396 = vunpack.c.l.b16 %v3387
        %v3397 = vunpack.c.l.b16 %v3388
        %v3398 = vunpack.c.l.b16 %v3389
        %v3399 = vpack.c.b16 %v3396, %v3395
        %v3400 = vpack.c.b16 %v3398, %v3397
        %v3404 = vsel %vm882, %v3390, 0
        %3406 = vmatprep.subr.bf16.mxu0 0
        %3407 = vmatpush1.bf16.msra.mxu0 %v3399
        %3408 = vmatprep.subr.bf16.mxu0 0
        %3409 = vmatpush1.bf16.msra.mxu0 %v3400
        %3410 = vmatprep.subr.bf16.mxu0 0
        %3411 = vmatpush1.bf16.msra.mxu0 0
        %3412 = vmatprep.subr.bf16.mxu0 0
        %3413 = vmatpush1.bf16.msra.mxu0 0
        %3414 = vmatprep.subr.bf16.mxu0 0
        %3415 = vmatpush1.bf16.msra.mxu0 0
        %3416 = vmatprep.subr.bf16.mxu0 0
        %3417 = vmatpush1.bf16.msra.mxu0 0
        %3418 = vmatprep.subr.bf16.mxu0 0
        %3419 = vmatpush1.bf16.msra.mxu0 0
        %3420 = vmatprep.subr.bf16.mxu0 0
        %3421 = vmatpush1.bf16.msra.mxu0 0
        %3422 = vmatprep.subr.bf16.mxu0 0
        %3423 = vmatpush1.bf16.msra.mxu0 0
        %3424 = vmatprep.subr.bf16.mxu0 0
        %3425 = vmatpush1.bf16.msra.mxu0 0
        %3426 = vmatprep.subr.bf16.mxu0 0
        %3427 = vmatpush1.bf16.msra.mxu0 0
        %3428 = vmatprep.subr.bf16.mxu0 0
        %3429 = vmatpush1.bf16.msra.mxu0 0
        %3430 = vmatprep.subr.bf16.mxu0 0
        %3431 = vmatpush1.bf16.msra.mxu0 0
        %3432 = vmatprep.subr.bf16.mxu0 0
        %3433 = vmatpush1.bf16.msra.mxu0 0
        %3434 = vmatprep.subr.bf16.mxu0 0
        %3435 = vmatpush1.bf16.msra.mxu0 0
        %3436 = vmatprep.subr.bf16.mxu0 0
        %3437 = vmatpush1.bf16.msra.mxu0 0
        %3438 = vmatprep.mubr.bf16.mxu0 0
        %3439 = vmatmul.mubr.bf16.gmra.mrb[0].mxu0 %v3404
        %v3440 = vpop.f32.mrb[0].mxu0
        %v3441 = vadd.f32 0.0, %v3440
        %v3442 = vpop.f32.mrb[0].mxu0
        %v3443 = vpop.f32.mrb[0].mxu0
        %v3444 = vpop.f32.mrb[0].mxu0
        %3445 = vdwg.mxu0
        %v3450 = vunpack.c.l.b16 %v3381
        %v3451 = vunpack.c.l.b16 %v3382
        %v3452 = vunpack.c.l.b16 %v3383
        %v3453 = vunpack.c.l.b16 %v3384
        %v3454 = vpack.c.b16 %v3451, %v3450
        %v3455 = vpack.c.b16 %v3453, %v3452
        %v3459 = vsel %vm882, %v3385, 0
        %3461 = vmatprep.subr.bf16.mxu0 0
        %3462 = vmatpush1.bf16.msra.mxu0 %v3454
        %3463 = vmatprep.subr.bf16.mxu0 0
        %3464 = vmatpush1.bf16.msra.mxu0 %v3455
        %3465 = vmatprep.subr.bf16.mxu0 0
        %3466 = vmatpush1.bf16.msra.mxu0 0
        %3467 = vmatprep.subr.bf16.mxu0 0
        %3468 = vmatpush1.bf16.msra.mxu0 0
        %3469 = vmatprep.subr.bf16.mxu0 0
        %3470 = vmatpush1.bf16.msra.mxu0 0
        %3471 = vmatprep.subr.bf16.mxu0 0
        %3472 = vmatpush1.bf16.msra.mxu0 0
        %3473 = vmatprep.subr.bf16.mxu0 0
        %3474 = vmatpush1.bf16.msra.mxu0 0
        %3475 = vmatprep.subr.bf16.mxu0 0
        %3476 = vmatpush1.bf16.msra.mxu0 0
        %3477 = vmatprep.subr.bf16.mxu0 0
        %3478 = vmatpush1.bf16.msra.mxu0 0
        %3479 = vmatprep.subr.bf16.mxu0 0
        %3480 = vmatpush1.bf16.msra.mxu0 0
        %3481 = vmatprep.subr.bf16.mxu0 0
        %3482 = vmatpush1.bf16.msra.mxu0 0
        %3483 = vmatprep.subr.bf16.mxu0 0
        %3484 = vmatpush1.bf16.msra.mxu0 0
        %3485 = vmatprep.subr.bf16.mxu0 0
        %3486 = vmatpush1.bf16.msra.mxu0 0
        %3487 = vmatprep.subr.bf16.mxu0 0
        %3488 = vmatpush1.bf16.msra.mxu0 0
        %3489 = vmatprep.subr.bf16.mxu0 0
        %3490 = vmatpush1.bf16.msra.mxu0 0
        %3491 = vmatprep.subr.bf16.mxu0 0
        %3492 = vmatpush1.bf16.msra.mxu0 0
        %3493 = vmatprep.mubr.bf16.mxu0 0
        %3494 = vmatmul.mubr.bf16.gmra.mrb[0].mxu0 %v3459
        %v3495 = vpop.f32.mrb[0].mxu0
        %v3496 = vadd.f32 %v3441, %v3495
        %v3497 = vpop.f32.mrb[0].mxu0
        %v3498 = vpop.f32.mrb[0].mxu0
        %v3499 = vpop.f32.mrb[0].mxu0
        %3500 = vdwg.mxu0
        %v3501 = vld [vmem:[%s19] sm:$0x1]
        %v3503 = vlaneseq
        %v3504 = vshrl.u32 %v3503, 7
        %v3505 = vsub.s32 0, %v3504
        %v3506 = vrot.slane %v3501, %v3505
        %v3508 = vadd.f32 %v3496, %v3506
        %v3509 = vmax.f32 %v3508, 0.0
        %v3510 = vld [vmem:[%s20] sm:$0xf]
        %v3511 = vld [vmem:[%s20 + $0x4] sm:$0xf]
        %v3512 = vld [vmem:[%s20 + $0x8] sm:$0xf]
        %v3513 = vld [vmem:[%s20 + $0xc] sm:$0xf]
        %v3514 = vpack.c.bf16 %v3509, %v3509
        %v3515 = vld [vmem:[%s21] sm:$0x1]
        %v3517 = vlaneseq
        %v3518 = vshrl.u32 %v3517, 7
        %v3519 = vsub.s32 0, %v3518
        %v3520 = vrot.slane %v3515, %v3519
        %v3526 = vunpack.c.l.b16 %v3510
        %v3527 = vunpack.c.l.b16 %v3511
        %v3528 = vunpack.c.l.b16 %v3512
        %v3529 = vunpack.c.l.b16 %v3513
        %v3530 = vpack.c.b16 %v3527, %v3526
        %v3531 = vpack.c.b16 %v3529, %v3528
        %v3535 = vsel %vm882, %v3514, 0
        %3537 = vmatprep.subr.bf16.mxu0 0
        %3538 = vmatpush1.bf16.msra.mxu0 %v3530
        %3539 = vmatprep.subr.bf16.mxu0 0
        %3540 = vmatpush1.bf16.msra.mxu0 %v3531
        %3541 = vmatprep.subr.bf16.mxu0 0
        %3542 = vmatpush1.bf16.msra.mxu0 0
        %3543 = vmatprep.subr.bf16.mxu0 0
        %3544 = vmatpush1.bf16.msra.mxu0 0
        %3545 = vmatprep.subr.bf16.mxu0 0
        %3546 = vmatpush1.bf16.msra.mxu0 0
        %3547 = vmatprep.subr.bf16.mxu0 0
        %3548 = vmatpush1.bf16.msra.mxu0 0
        %3549 = vmatprep.subr.bf16.mxu0 0
        %3550 = vmatpush1.bf16.msra.mxu0 0
        %3551 = vmatprep.subr.bf16.mxu0 0
        %3552 = vmatpush1.bf16.msra.mxu0 0
        %3553 = vmatprep.subr.bf16.mxu0 0
        %3554 = vmatpush1.bf16.msra.mxu0 0
        %3555 = vmatprep.subr.bf16.mxu0 0
        %3556 = vmatpush1.bf16.msra.mxu0 0
        %3557 = vmatprep.subr.bf16.mxu0 0
        %3558 = vmatpush1.bf16.msra.mxu0 0
        %3559 = vmatprep.subr.bf16.mxu0 0
        %3560 = vmatpush1.bf16.msra.mxu0 0
        %3561 = vmatprep.subr.bf16.mxu0 0
        %3562 = vmatpush1.bf16.msra.mxu0 0
        %3563 = vmatprep.subr.bf16.mxu0 0
        %3564 = vmatpush1.bf16.msra.mxu0 0
        %3565 = vmatprep.subr.bf16.mxu0 0
        %3566 = vmatpush1.bf16.msra.mxu0 0
        %3567 = vmatprep.subr.bf16.mxu0 0
        %3568 = vmatpush1.bf16.msra.mxu0 0
        %3569 = vmatprep.mubr.bf16.mxu0 0
        %3570 = vmatmul.mubr.bf16.gmra.mrb[0].mxu0 %v3535
        %v3571 = vpop.f32.mrb[0].mxu0
        %v3572 = vadd.f32 %v3520, %v3571
        %v3573 = vpop.f32.mrb[0].mxu0
        %v3574 = vpop.f32.mrb[0].mxu0
        %v3575 = vpop.f32.mrb[0].mxu0
        %3576 = vdwg.mxu0
        %v3577 = vmax.f32 %v3572, 0.0
        %v3578 = vld [vmem:[%s22] sm:$0xf]
        %v3579 = vld [vmem:[%s22 + $0x4] sm:$0xf]
        %v3580 = vpack.c.bf16 %v3577, %v3577
        %v3581 = vld [vmem:[%s23] sm:$0x1]
        %v3583 = vlaneseq
        %v3584 = vshrl.u32 %v3583, 7
        %v3585 = vsub.s32 0, %v3584
        %v3586 = vrot.slane %v3581, %v3585
        %v3590 = vunpack.c.l.b16 %v3578
        %v3591 = vunpack.c.l.b16 %v3579
        %v3592 = vpack.c.b16 %v3591, %v3590
        %vm3594 = vcmask 130048
        %v3596 = vsel %vm3594, %v3580, 0
        %3598 = vmatprep.subr.bf16.mxu0 0
        %3599 = vmatpush1.bf16.msra.mxu0 %v3592
        %3600 = vmatprep.subr.bf16.mxu0 0
        %3601 = vmatpush1.bf16.msra.mxu0 0
        %3602 = vmatprep.subr.bf16.mxu0 0
        %3603 = vmatpush1.bf16.msra.mxu0 0
        %3604 = vmatprep.subr.bf16.mxu0 0
        %3605 = vmatpush1.bf16.msra.mxu0 0
        %3606 = vmatprep.subr.bf16.mxu0 0
        %3607 = vmatpush1.bf16.msra.mxu0 0
        %3608 = vmatprep.subr.bf16.mxu0 0
        %3609 = vmatpush1.bf16.msra.mxu0 0
        %3610 = vmatprep.subr.bf16.mxu0 0
        %3611 = vmatpush1.bf16.msra.mxu0 0
        %3612 = vmatprep.subr.bf16.mxu0 0
        %3613 = vmatpush1.bf16.msra.mxu0 0
        %3614 = vmatprep.subr.bf16.mxu0 0
        %3615 = vmatpush1.bf16.msra.mxu0 0
        %3616 = vmatprep.subr.bf16.mxu0 0
        %3617 = vmatpush1.bf16.msra.mxu0 0
        %3618 = vmatprep.subr.bf16.mxu0 0
        %3619 = vmatpush1.bf16.msra.mxu0 0
        %3620 = vmatprep.subr.bf16.mxu0 0
        %3621 = vmatpush1.bf16.msra.mxu0 0
        %3622 = vmatprep.subr.bf16.mxu0 0
        %3623 = vmatpush1.bf16.msra.mxu0 0
        %3624 = vmatprep.subr.bf16.mxu0 0
        %3625 = vmatpush1.bf16.msra.mxu0 0
        %3626 = vmatprep.subr.bf16.mxu0 0
        %3627 = vmatpush1.bf16.msra.mxu0 0
        %3628 = vmatprep.subr.bf16.mxu0 0
        %3629 = vmatpush1.bf16.msra.mxu0 0
        %3630 = vmatprep.mubr.bf16.mxu0 0
        %3631 = vmatmul.mubr.bf16.gmra.mrb[0].mxu0 %v3596
        %v3632 = vpop.f32.mrb[0].mxu0
        %v3633 = vadd.f32 %v3586, %v3632
        %v3634 = vpop.f32.mrb[0].mxu0
        %v3635 = vpop.f32.mrb[0].mxu0
        %v3636 = vpop.f32.mrb[0].mxu0
        %3637 = vdwg.mxu0
        %vm3638 = vcmask 25600
        %v3639 = vsel %vm3638, %v3633, -inf
        %3640 = vmax.xlane.f32.xlu0 %v3639
        %v3641 = vpop.xlane.xlu0 %3640
        %v3642 = vsub.f32 %v3633, %v3641
        %v3643 = vmul.f32 %v3642, 1.442695
        %v3644 = vpow.pop %v3643
        %v3645 = vsel %vm3638, %v3644, 0.0
        %3646 = vadd.xlane.f32.xlu0 %v3645
        %v3647 = vpop.xlane.xlu0 %3646
        %v3648 = vlog2.pop %v3647
        %v3649 = vmul.f32 %v3648, 0.6931472
        %v3650 = vsub.f32 %v3642, %v3649
        %3651 = vst.msk [vmem:[%s787] sm:$0x3] %vm3638, %v3650
        %s3652 = sand.u32 %s578, 1
        %s3653 = scalar_lea.sflag [#allocation6], %s3652
        %s3654 = sand.u32 %s578, 1
        %s3655 = smul.addr %s3654, 2
        %s3656 = scalar_lea.vmem [#allocation5], %s3655
        // Predicated region
        $region117: #{sagnet_forward.1} parent=115 // pred_check
          %p3657 = pneg %p588
        $region118: #{sagnet_forward.1} parent=115 // pred_check_branch
          %3659 = sbr.rel (%p3657) target = $region120
        $region119: #{sagnet_forward.1} parent=115 // pred_region
          %s3661 = ssub.s32 32, 32
          %3662 = vsyncadd %s3653, %s3661
          %s3663 = smul.addr %s41, 32
          %s3664 = scalar_lea.hbm %s24, %s3663
          %s3666 = sshll.u32 %s3656, 4
          %s3667 = int_to_ptr.vmem [resolvable:$true] %s3666
          %3669 = dma.vmem_to_hbm [thread:$0]  %s3667, 32, %s3664, %s3653
        $region120: #{sagnet_forward.1} parent=115 // pred_fallthru
          _
      $region116: #{sagnet_forward.1} parent=5 // pred_fallthru
        _
      %p3670 = scmp.le.s32.totalorder 2, %s36
      // Predicated region
      $region121: #{sagnet_forward.1} parent=5 // pred_check
        %p3671 = pneg %p3670
      $region122: #{sagnet_forward.1} parent=5 // pred_check_branch
        %3673 = sbr.rel (%p3671) target = $region124
      $region123: #{sagnet_forward.1} parent=5 // pred_region
        %s3674 = ssub.s32 %s36, 2
        // Predicated region
        $region125: #{sagnet_forward.1} parent=123 // pred_check
          %p3675 = pneg %p594
        $region126: #{sagnet_forward.1} parent=123 // pred_check_branch
          %3677 = sbr.rel (%p3675) target = $region128
        $region127: #{sagnet_forward.1} parent=123 // pred_region
          %s3678 = sand.u32 %s579, 1
          %s3679 = scalar_lea.sflag [#allocation6], %s3678
          %s3680 = sand.u32 %s579, 1
          %s3681 = smul.addr %s3680, 2
          %s3682 = scalar_lea.vmem [#allocation5], %s3681
          %3683 = dma.done %s3679, 32
        $region128: #{sagnet_forward.1} parent=123 // pred_fallthru
          _
      $region124: #{sagnet_forward.1} parent=5 // pred_fallthru
        _
    $region6: #{sagnet_forward.1} parent=1 // loop_footer
      %s40 = sadd.s32 1, %s36
    $region7: #{sagnet_forward.1} parent=1 // loop_footer_branch
      %35 = sbr.rel target = $region3
    $region8: #{sagnet_forward.1} parent=1 // loop_exit
      _
    %3684 = vsyncpa [#allocation6], 1
    %s3685 = scalar_lea.sflag [#allocation6], 1
    %3686 = vsyncpa %s3685, 1

</llo_original>
